<compile_context>
chip_gen: v7x
topology: tpu7x:2x2x1
jax: 0.10.0
libtpu: 0.0.40
codegen_flags: <defaults>
</compile_context>

<pallas_src>
import numpy as np
import jax
import jax.numpy as jnp
from jax import lax
from jax.experimental import pallas as pl
from jax.experimental.pallas import tpu as pltpu


# ---------------------------------------------------------------------------
# Pallas kernels
# ---------------------------------------------------------------------------
def conv_relu_pool_kernel(p_ref, w_ref, b_ref, o_ref):
    # p_ref: (4*Mp, K)  phase-grouped im2col patches for one image.
    #        rows [ph*Mp, ph*Mp + Ho*Wo) hold pool-phase `ph` conv patches.
    # w_ref: (K, Cout)  conv weights as a matrix
    # b_ref: (1, Cout)  bias
    # o_ref: (Mp, Cout) pooled + activated output (rows >= Ho*Wo are junk pad)
    #
    # Single MXU matmul over all 4 pool phases (default precision, f32 acc).
    y = jnp.dot(p_ref[...], w_ref[...], preferred_element_type=jnp.float32)
    mp = o_ref.shape[0]                       # Mp is a multiple of 8 -> aligned
    pooled = jnp.maximum(jnp.maximum(y[:mp], y[mp:2 * mp]),
                         jnp.maximum(y[2 * mp:3 * mp], y[3 * mp:]))
    # relu(max_k(x_k) + b) == max_k(relu(x_k + b)): shared bias, monotone ReLU.
    o_ref[...] = jnp.maximum(pooled + b_ref[...], 0.0)


def linear_kernel(x_ref, w_ref, b_ref, o_ref):
    # x_ref: (B, F)   w_ref: (F, 10)   b_ref: (1, 10)   o_ref: (B, 10)
    o_ref[...] = jnp.dot(x_ref[...], w_ref[...],
                         preferred_element_type=jnp.float32) + b_ref[...]


# ---------------------------------------------------------------------------
# Wrappers around pallas_call
# ---------------------------------------------------------------------------
def conv_relu_pool(patches, w_mat, bias, mp):
    # patches: (B, 4*Mp, K)  ->  out: (B, Mp, Cout), grid over images (parallel)
    B, four_mp, K = patches.shape
    C = w_mat.shape[1]
    return pl.pallas_call(
        conv_relu_pool_kernel,
        grid=(B,),
        in_specs=[
            pl.BlockSpec((None, four_mp, K), lambda b: (b, 0, 0)),
            pl.BlockSpec((K, C), lambda b: (0, 0)),
            pl.BlockSpec((1, C), lambda b: (0, 0)),
        ],
        out_specs=pl.BlockSpec((None, mp, C), lambda b: (b, 0, 0)),
        out_shape=jax.ShapeDtypeStruct((B, mp, C), jnp.float32),
        compiler_params=pltpu.CompilerParams(
            dimension_semantics=("parallel",)),
    )(patches, w_mat, bias.reshape(1, C))


def linear(x, w_mat, bias):
    B, F = x.shape
    O = w_mat.shape[1]
    return pl.pallas_call(
        linear_kernel,
        grid=(1,),
        in_specs=[
            pl.BlockSpec((B, F), lambda i: (0, 0)),
            pl.BlockSpec((F, O), lambda i: (0, 0)),
            pl.BlockSpec((1, O), lambda i: (0, 0)),
        ],
        out_specs=pl.BlockSpec((B, O), lambda i: (0, 0)),
        out_shape=jax.ShapeDtypeStruct((B, O), jnp.float32),
    )(x, w_mat, bias.reshape(1, O))


# ---------------------------------------------------------------------------
# Host-side glue: NCHW->NHWC, padding, im2col grouped by pool phase
# ---------------------------------------------------------------------------
def _round_up(x, m):
    return (x + m - 1) // m * m


def im2col_pool_phases(x_nhwc, ksize=5, pad=2):
    """Phase-grouped, row-padded im2col.

    Returns patches of shape (B, 4*Mp, K): for image b, rows
    [ph*Mp, ph*Mp + Ho*Wo) hold the conv patches of pool-phase ph
    (the 4 elements of each 2x2 max-pool window); rows [Ho*Wo, Mp) are
    zero padding so each phase slab is 8-sublane aligned.
    """
    B, H, W, C = x_nhwc.shape
    xp = jnp.pad(x_nhwc, ((0, 0), (pad, pad), (pad, pad), (0, 0)))
    cols = []
    for kh in range(ksize):
        for kw in range(ksize):
            cols.append(xp[:, kh:kh + H, kw:kw + W, :])
    patches = jnp.concatenate(cols, axis=-1)          # (B, H, W, k*k*C)
    K = ksize * ksize * C
    Ho, Wo = H // 2, W // 2                           # pooled output size
    p6 = patches.reshape(B, Ho, 2, Wo, 2, K)
    p6 = jnp.transpose(p6, (0, 2, 4, 1, 3, 5))        # (B, di, dj, Ho, Wo, K)
    p = p6.reshape(B, 4, Ho * Wo, K)
    mp = _round_up(Ho * Wo, 8)
    if mp != Ho * Wo:
        p = jnp.pad(p, ((0, 0), (0, 0), (0, mp - Ho * Wo), (0, 0)))
    return p.reshape(B, 4 * mp, K), Ho, Wo, mp


def conv_weight_matrix(w_oihw):
    # (Cout, Cin, KH, KW) -> (KH*KW*Cin, Cout), matching im2col feature order.
    Cout = w_oihw.shape[0]
    return jnp.transpose(w_oihw, (2, 3, 1, 0)).reshape(-1, Cout)


def cnn_forward(x_nchw, params):
    w1, b1, w2, b2, wl, bl = params
    B = x_nchw.shape[0]
    x = jnp.transpose(x_nchw, (0, 2, 3, 1))           # NHWC

    # conv1 + relu + maxpool(2)
    p1, Ho1, Wo1, mp1 = im2col_pool_phases(x)
    y1 = conv_relu_pool(p1, conv_weight_matrix(w1), b1, mp1)   # (B, Mp1, 16)
    y1 = y1[:, :Ho1 * Wo1, :].reshape(B, Ho1, Wo1, w1.shape[0])  # (B,14,14,16)

    # conv2 + relu + maxpool(2)
    p2, Ho2, Wo2, mp2 = im2col_pool_phases(y1)
    y2 = conv_relu_pool(p2, conv_weight_matrix(w2), b2, mp2)   # (B, Mp2, 32)
    y2 = y2[:, :Ho2 * Wo2, :].reshape(B, Ho2, Wo2, w2.shape[0])  # (B,7,7,32)

    # PyTorch flattens NCHW: (B, 32, 7, 7) -> (B, 1568)
    flat = jnp.transpose(y2, (0, 3, 1, 2)).reshape(B, -1)
    return linear(flat, wl.T, bl)                               # (B, 10)


# ---------------------------------------------------------------------------
# Pure-JAX reference of the exact PyTorch forward (ground truth, f32 HIGHEST)
# ---------------------------------------------------------------------------
def reference_forward(x, params):
    w1, b1, w2, b2, wl, bl = params

    def block(x, w, b):
        y = lax.conv_general_dilated(
            x, w, window_strides=(1, 1), padding=((2, 2), (2, 2)),
            dimension_numbers=('NCHW', 'OIHW', 'NCHW'),
            precision=lax.Precision.HIGHEST)
        y = jax.nn.relu(y + b[None, :, None, None])
        return lax.reduce_window(y, -jnp.inf, lax.max,
                                 (1, 1, 2, 2), (1, 1, 2, 2), 'VALID')

    y = block(x, w1, b1)
    y = block(y, w2, b2)
    flat = y.reshape(x.shape[0], -1)
    return jnp.dot(flat, wl.T, precision=lax.Precision.HIGHEST) + bl


# ---------------------------------------------------------------------------
if __name__ == "__main__":
    key = jax.random.PRNGKey(0)
    kx, k1, k2, k3, k4, k5, k6 = jax.random.split(key, 7)

    B = 2  # small batch; spatial must be 28x28 for the 32*7*7 Linear layer
    x = jax.random.normal(kx, (B, 1, 28, 28), dtype=jnp.float32)

    # Deterministic synthetic parameters (shapes from CNN.__init__)
    w1 = 0.2 * jax.random.normal(k1, (16, 1, 5, 5), dtype=jnp.float32)
    b1 = 0.1 * jax.random.normal(k2, (16,), dtype=jnp.float32)
    w2 = 0.05 * jax.random.normal(k3, (32, 16, 5, 5), dtype=jnp.float32)
    b2 = 0.1 * jax.random.normal(k4, (32,), dtype=jnp.float32)
    wl = 0.025 * jax.random.normal(k5, (10, 32 * 7 * 7), dtype=jnp.float32)
    bl = 0.1 * jax.random.normal(k6, (10,), dtype=jnp.float32)
    params = (w1, b1, w2, b2, wl, bl)

    out = jax.jit(cnn_forward)(x, params)
    out = jax.block_until_ready(out)

    ref = jax.block_until_ready(reference_forward(x, params))
    assert out.shape == (B, 10) and out.dtype == jnp.float32
    # Kernel uses default (fast, single-pass) MXU precision vs an f32 HIGHEST
    # reference, so allow bf16-class tolerance; real bugs produce O(1) errors.
    np.testing.assert_allclose(np.asarray(out), np.asarray(ref),
                               rtol=2e-2, atol=3e-2)

    print("KERNEL_OK")
</pallas_src>

<mosaic_0001>
module attributes {stable_mosaic.version = 11 : i64} {
  func.func @conv_relu_pool_kernel(%arg0: i32, %arg1: memref<1x800x25xf32, #tpu.memory_space<vmem>>, %arg2: memref<25x16xf32, #tpu.memory_space<vmem>>, %arg3: memref<1x16xf32, #tpu.memory_space<vmem>>, %arg4: memref<1x200x16xf32, #tpu.memory_space<vmem>>) attributes {dimension_semantics = [#tpu.dimension_semantics<parallel>], iteration_bounds = array<i64: 2>, scalar_prefetch = 0 : i64, scratch_operands = 0 : i64, tpu.core_type = #tpu.core_type<tc>, window_params = [{transform_indices = @transform_0, window_bounds = array<i64: 1, 800, 25>}, {pipeline_mode = #tpu.pipeline_mode<synchronous>, transform_indices = @transform_1, window_bounds = array<i64: 25, 16>}, {pipeline_mode = #tpu.pipeline_mode<synchronous>, transform_indices = @transform_2, window_bounds = array<i64: 1, 16>}, {transform_indices = @transform_3, window_bounds = array<i64: 1, 200, 16>}]} {
    %c0 = arith.constant 0 : index
    %c0_0 = arith.constant 0 : index
    %c0_1 = arith.constant 0 : index
    %0 = vector.load %arg1[%c0, %c0_0, %c0_1] : memref<1x800x25xf32, #tpu.memory_space<vmem>>, vector<1x800x25xf32>
    %1 = vector.shape_cast %0 : vector<1x800x25xf32> to vector<800x25xf32>
    %c0_2 = arith.constant 0 : index
    %c0_3 = arith.constant 0 : index
    %2 = vector.load %arg2[%c0_2, %c0_3] : memref<25x16xf32, #tpu.memory_space<vmem>>, vector<25x16xf32>
    %cst = arith.constant dense<0.000000e+00> : vector<800x16xf32>
    %3 = tpu.matmul %1, %2, %cst {dimension_numbers = #tpu.dot_dimension_numbers<[1], [0], [0], [1], [0, 0, 1, 1], [], []>} : vector<800x25xf32>, vector<25x16xf32>, vector<800x16xf32> -> vector<800x16xf32>
    %4 = vector.extract_strided_slice %3 {offsets = [0, 0], sizes = [200, 16], strides = [1, 1]} : vector<800x16xf32> to vector<200x16xf32>
    %5 = vector.extract_strided_slice %3 {offsets = [200, 0], sizes = [200, 16], strides = [1, 1]} : vector<800x16xf32> to vector<200x16xf32>
    %6 = arith.maximumf %4, %5 : vector<200x16xf32>
    %7 = vector.extract_strided_slice %3 {offsets = [400, 0], sizes = [200, 16], strides = [1, 1]} : vector<800x16xf32> to vector<200x16xf32>
    %8 = vector.extract_strided_slice %3 {offsets = [600, 0], sizes = [200, 16], strides = [1, 1]} : vector<800x16xf32> to vector<200x16xf32>
    %9 = arith.maximumf %7, %8 : vector<200x16xf32>
    %10 = arith.maximumf %6, %9 : vector<200x16xf32>
    %c0_4 = arith.constant 0 : index
    %c0_5 = arith.constant 0 : index
    %11 = vector.load %arg3[%c0_4, %c0_5] : memref<1x16xf32, #tpu.memory_space<vmem>>, vector<1x16xf32>
    %12 = vector.broadcast %11 : vector<1x16xf32> to vector<200x16xf32>
    %13 = arith.addf %10, %12 : vector<200x16xf32>
    %cst_6 = arith.constant 0.000000e+00 : f32
    %14 = vector.broadcast %cst_6 : f32 to vector<200x16xf32>
    %15 = arith.maximumf %13, %14 : vector<200x16xf32>
    %c0_7 = arith.constant 0 : index
    %c0_8 = arith.constant 0 : index
    %c0_9 = arith.constant 0 : index
    %16 = vector.load %arg4[%c0_7, %c0_8, %c0_9] : memref<1x200x16xf32, #tpu.memory_space<vmem>>, vector<1x200x16xf32>
    %17 = vector.shape_cast %16 : vector<1x200x16xf32> to vector<200x16xf32>
    %18 = vector.shape_cast %15 : vector<200x16xf32> to vector<1x200x16xf32>
    tpu.vector_store %arg4[%c0_7, %c0_8, %c0_9], %18 {strides = array<i32>} : memref<1x200x16xf32, #tpu.memory_space<vmem>>, vector<1x200x16xf32>,
    return
  }
  func.func @transform_0(%arg0: i32) -> (i32, i32, i32) {
    %c0_i32 = arith.constant 0 : i32
    %c0_i32_0 = arith.constant 0 : i32
    %c0_i32_1 = arith.constant 0 : i32
    return %arg0, %c0_i32, %c0_i32_0 : i32, i32, i32
  }
  func.func @transform_1(%arg0: i32) -> (i32, i32) {
    %c0_i32 = arith.constant 0 : i32
    %c0_i32_0 = arith.constant 0 : i32
    %c0_i32_1 = arith.constant 0 : i32
    return %c0_i32, %c0_i32_0 : i32, i32
  }
  func.func @transform_2(%arg0: i32) -> (i32, i32) {
    %c0_i32 = arith.constant 0 : i32
    %c0_i32_0 = arith.constant 0 : i32
    %c0_i32_1 = arith.constant 0 : i32
    return %c0_i32, %c0_i32_0 : i32, i32
  }
  func.func @transform_3(%arg0: i32) -> (i32, i32, i32) {
    %c0_i32 = arith.constant 0 : i32
    %c0_i32_0 = arith.constant 0 : i32
    %c0_i32_1 = arith.constant 0 : i32
    return %arg0, %c0_i32, %c0_i32_0 : i32, i32, i32
  }
}

module attributes {stable_mosaic.version = 11 : i64} {
  func.func @conv_relu_pool_kernel(%arg0: i32, %arg1: memref<1x224x400xf32, #tpu.memory_space<vmem>>, %arg2: memref<400x32xf32, #tpu.memory_space<vmem>>, %arg3: memref<1x32xf32, #tpu.memory_space<vmem>>, %arg4: memref<1x56x32xf32, #tpu.memory_space<vmem>>) attributes {dimension_semantics = [#tpu.dimension_semantics<parallel>], iteration_bounds = array<i64: 2>, scalar_prefetch = 0 : i64, scratch_operands = 0 : i64, tpu.core_type = #tpu.core_type<tc>, window_params = [{transform_indices = @transform_0, window_bounds = array<i64: 1, 224, 400>}, {pipeline_mode = #tpu.pipeline_mode<synchronous>, transform_indices = @transform_1, window_bounds = array<i64: 400, 32>}, {pipeline_mode = #tpu.pipeline_mode<synchronous>, transform_indices = @transform_2, window_bounds = array<i64: 1, 32>}, {transform_indices = @transform_3, window_bounds = array<i64: 1, 56, 32>}]} {
    %c0 = arith.constant 0 : index
    %c0_0 = arith.constant 0 : index
    %c0_1 = arith.constant 0 : index
    %0 = vector.load %arg1[%c0, %c0_0, %c0_1] : memref<1x224x400xf32, #tpu.memory_space<vmem>>, vector<1x224x400xf32>
    %1 = vector.shape_cast %0 : vector<1x224x400xf32> to vector<224x400xf32>
    %c0_2 = arith.constant 0 : index
    %c0_3 = arith.constant 0 : index
    %2 = vector.load %arg2[%c0_2, %c0_3] : memref<400x32xf32, #tpu.memory_space<vmem>>, vector<400x32xf32>
    %cst = arith.constant dense<0.000000e+00> : vector<224x32xf32>
    %3 = tpu.matmul %1, %2, %cst {dimension_numbers = #tpu.dot_dimension_numbers<[1], [0], [0], [1], [0, 0, 1, 1], [], []>} : vector<224x400xf32>, vector<400x32xf32>, vector<224x32xf32> -> vector<224x32xf32>
    %4 = vector.extract_strided_slice %3 {offsets = [0, 0], sizes = [56, 32], strides = [1, 1]} : vector<224x32xf32> to vector<56x32xf32>
    %5 = vector.extract_strided_slice %3 {offsets = [56, 0], sizes = [56, 32], strides = [1, 1]} : vector<224x32xf32> to vector<56x32xf32>
    %6 = arith.maximumf %4, %5 : vector<56x32xf32>
    %7 = vector.extract_strided_slice %3 {offsets = [112, 0], sizes = [56, 32], strides = [1, 1]} : vector<224x32xf32> to vector<56x32xf32>
    %8 = vector.extract_strided_slice %3 {offsets = [168, 0], sizes = [56, 32], strides = [1, 1]} : vector<224x32xf32> to vector<56x32xf32>
    %9 = arith.maximumf %7, %8 : vector<56x32xf32>
    %10 = arith.maximumf %6, %9 : vector<56x32xf32>
    %c0_4 = arith.constant 0 : index
    %c0_5 = arith.constant 0 : index
    %11 = vector.load %arg3[%c0_4, %c0_5] : memref<1x32xf32, #tpu.memory_space<vmem>>, vector<1x32xf32>
    %12 = vector.broadcast %11 : vector<1x32xf32> to vector<56x32xf32>
    %13 = arith.addf %10, %12 : vector<56x32xf32>
    %cst_6 = arith.constant 0.000000e+00 : f32
    %14 = vector.broadcast %cst_6 : f32 to vector<56x32xf32>
    %15 = arith.maximumf %13, %14 : vector<56x32xf32>
    %c0_7 = arith.constant 0 : index
    %c0_8 = arith.constant 0 : index
    %c0_9 = arith.constant 0 : index
    %16 = vector.load %arg4[%c0_7, %c0_8, %c0_9] : memref<1x56x32xf32, #tpu.memory_space<vmem>>, vector<1x56x32xf32>
    %17 = vector.shape_cast %16 : vector<1x56x32xf32> to vector<56x32xf32>
    %18 = vector.shape_cast %15 : vector<56x32xf32> to vector<1x56x32xf32>
    tpu.vector_store %arg4[%c0_7, %c0_8, %c0_9], %18 {strides = array<i32>} : memref<1x56x32xf32, #tpu.memory_space<vmem>>, vector<1x56x32xf32>,
    return
  }
  func.func @transform_0(%arg0: i32) -> (i32, i32, i32) {
    %c0_i32 = arith.constant 0 : i32
    %c0_i32_0 = arith.constant 0 : i32
    %c0_i32_1 = arith.constant 0 : i32
    return %arg0, %c0_i32, %c0_i32_0 : i32, i32, i32
  }
  func.func @transform_1(%arg0: i32) -> (i32, i32) {
    %c0_i32 = arith.constant 0 : i32
    %c0_i32_0 = arith.constant 0 : i32
    %c0_i32_1 = arith.constant 0 : i32
    return %c0_i32, %c0_i32_0 : i32, i32
  }
  func.func @transform_2(%arg0: i32) -> (i32, i32) {
    %c0_i32 = arith.constant 0 : i32
    %c0_i32_0 = arith.constant 0 : i32
    %c0_i32_1 = arith.constant 0 : i32
    return %c0_i32, %c0_i32_0 : i32, i32
  }
  func.func @transform_3(%arg0: i32) -> (i32, i32, i32) {
    %c0_i32 = arith.constant 0 : i32
    %c0_i32_0 = arith.constant 0 : i32
    %c0_i32_1 = arith.constant 0 : i32
    return %arg0, %c0_i32, %c0_i32_0 : i32, i32, i32
  }
}

module attributes {stable_mosaic.version = 11 : i64} {
  func.func @linear_kernel(%arg0: i32, %arg1: memref<2x1568xf32, #tpu.memory_space<vmem>>, %arg2: memref<1568x10xf32, #tpu.memory_space<vmem>>, %arg3: memref<1x10xf32, #tpu.memory_space<vmem>>, %arg4: memref<2x10xf32, #tpu.memory_space<vmem>>) attributes {dimension_semantics = [#tpu.dimension_semantics<arbitrary>], iteration_bounds = array<i64: 1>, scalar_prefetch = 0 : i64, scratch_operands = 0 : i64, tpu.core_type = #tpu.core_type<tc>, window_params = [{pipeline_mode = #tpu.pipeline_mode<synchronous>, transform_indices = @transform_0, window_bounds = array<i64: 2, 1568>}, {pipeline_mode = #tpu.pipeline_mode<synchronous>, transform_indices = @transform_1, window_bounds = array<i64: 1568, 10>}, {pipeline_mode = #tpu.pipeline_mode<synchronous>, transform_indices = @transform_2, window_bounds = array<i64: 1, 10>}, {pipeline_mode = #tpu.pipeline_mode<synchronous>, transform_indices = @transform_3, window_bounds = array<i64: 2, 10>}]} {
    %c0 = arith.constant 0 : index
    %c0_0 = arith.constant 0 : index
    %0 = vector.load %arg1[%c0, %c0_0] : memref<2x1568xf32, #tpu.memory_space<vmem>>, vector<2x1568xf32>
    %c0_1 = arith.constant 0 : index
    %c0_2 = arith.constant 0 : index
    %1 = vector.load %arg2[%c0_1, %c0_2] : memref<1568x10xf32, #tpu.memory_space<vmem>>, vector<1568x10xf32>
    %cst = arith.constant dense<0.000000e+00> : vector<2x10xf32>
    %2 = tpu.matmul %0, %1, %cst {dimension_numbers = #tpu.dot_dimension_numbers<[1], [0], [0], [1], [0, 0, 1, 1], [], []>} : vector<2x1568xf32>, vector<1568x10xf32>, vector<2x10xf32> -> vector<2x10xf32>
    %c0_3 = arith.constant 0 : index
    %c0_4 = arith.constant 0 : index
    %3 = vector.load %arg3[%c0_3, %c0_4] : memref<1x10xf32, #tpu.memory_space<vmem>>, vector<1x10xf32>
    %4 = vector.broadcast %3 : vector<1x10xf32> to vector<2x10xf32>
    %5 = arith.addf %2, %4 : vector<2x10xf32>
    %c0_5 = arith.constant 0 : index
    %c0_6 = arith.constant 0 : index
    %6 = vector.load %arg4[%c0_5, %c0_6] : memref<2x10xf32, #tpu.memory_space<vmem>>, vector<2x10xf32>
    tpu.vector_store %arg4[%c0_5, %c0_6], %5 {strides = array<i32>} : memref<2x10xf32, #tpu.memory_space<vmem>>, vector<2x10xf32>,
    return
  }
  func.func @transform_0(%arg0: i32) -> (i32, i32) {
    %c0_i32 = arith.constant 0 : i32
    %c0_i32_0 = arith.constant 0 : i32
    %c0_i32_1 = arith.constant 0 : i32
    return %c0_i32, %c0_i32_0 : i32, i32
  }
  func.func @transform_1(%arg0: i32) -> (i32, i32) {
    %c0_i32 = arith.constant 0 : i32
    %c0_i32_0 = arith.constant 0 : i32
    %c0_i32_1 = arith.constant 0 : i32
    return %c0_i32, %c0_i32_0 : i32, i32
  }
  func.func @transform_2(%arg0: i32) -> (i32, i32) {
    %c0_i32 = arith.constant 0 : i32
    %c0_i32_0 = arith.constant 0 : i32
    %c0_i32_1 = arith.constant 0 : i32
    return %c0_i32, %c0_i32_0 : i32, i32
  }
  func.func @transform_3(%arg0: i32) -> (i32, i32) {
    %c0_i32 = arith.constant 0 : i32
    %c0_i32_0 = arith.constant 0 : i32
    %c0_i32_1 = arith.constant 0 : i32
    return %c0_i32, %c0_i32_0 : i32, i32
  }
}

</mosaic_0001>

<llo_original>
// kernel: cnn_forward.3
$region0: #{cnn_forward.3}
  #allocation0 [shape = 'u32[]', space=smem, size = 0x4, offset = 0x4, fixed_abs, tag = 'smem constant byte address 0x4 - core index']
  #allocation1 [shape = 'u32[144,128]{1,0:T(1,128)}', space=vmem, size = 0x12000, scoped, tag = 'internal scratch']
  %s0 = inlined_call_operand.vmem [shape: f32[2,800,25], index: 0, kind: input, shape index: {}]
  %s1 = inlined_call_operand.vmem [shape: f32[25,16], index: 1, kind: input, shape index: {}]
  %s2 = inlined_call_operand.vmem [shape: f32[1,16], index: 2, kind: input, shape index: {}]
  %s3 = inlined_call_operand.vmem [shape: f32[2,200,16], index: 3, kind: output, shape index: {}]
  %s4 = sld [smem:[#allocation0]]
  $region45: #{cnn_forward.3} parent=0
    _
  %s6 = ssub.s32 1, %s4
  %s7 = scalar_select 0, %s6, %s4
  loop: start=0, step=1, limit=4
  $region2: #{cnn_forward.3} parent=0 // loop_pre_header
    _
  $region3: #{cnn_forward.3} parent=0 // loop_header
    %s9 = sphi 0, %s13
    %p10 = scmp.ge.s32.totalorder %s9, 4
    %s19 = sphi 0, %s21
    %s22 = sphi 0, %s19
    %s23 = sphi 0, %s22
    %s39 = sphi 0, %s23
    %s43 = sphi 0, %s43
    %s45 = sphi 0, %s43
    %s46 = sphi 0, %s45
    %s60 = sphi 0, %s46
    %s64 = sphi 0, %s64
    %s66 = sphi 0, %s64
    %s67 = sphi 0, %s66
    %s81 = sphi 0, %s67
    %s87 = sphi 0, %s89
    %s90 = sphi 0, %s87
    %s91 = sphi 0, %s90
    %s107 = sphi 0, %s91
  $region4: #{cnn_forward.3} parent=0 // loop_header_branch
    %12 = sbr.rel (%p10) target = $region8
  $region5: #{cnn_forward.3} parent=0 // loop_body
    %s14 = ssub.s32 %s9, 1
    %s15 = ssub.s32 %s9, 2
    %s16 = sadd.s32 %s9, 1
    %s17 = ssub.s32 %s9, %s16
    %p18 = scmp.eq.s32.totalorder %s17, 0
    %s20 = sadd.s32 %s19, 1
    %s21 = scalar_select %p18, %s19, %s20
    %p24 = pneg %p18
    %p25 = scmp.eq.s32.totalorder %s9, 1
    %p26 = por %p24, %p25
    %p27 = scmp.ne.s32.totalorder %s19, %s22
    %p28 = scmp.eq.s32.totalorder %s9, 0
    %p29 = por %p27, %p28
    %p30 = scmp.ne.s32.totalorder %s19, %s22
    %p31 = scmp.eq.s32.totalorder %s14, 1
    %p32 = por %p30, %p31
    %p33 = scmp.ne.s32.totalorder %s22, %s23
    %p34 = scmp.eq.s32.totalorder %s14, 0
    %p35 = por %p33, %p34
    %p36 = scmp.ne.s32.totalorder %s22, %s23
    %p37 = scmp.eq.s32.totalorder %s15, 1
    %p38 = por %p36, %p37
    %p40 = scmp.ne.s32.totalorder %s23, %s39
    %p41 = scmp.eq.s32.totalorder %s15, 0
    %p42 = por %p40, %p41
    %s44 = sadd.s32 %s43, 1
    %p47 = scmp.eq.s32.totalorder %s9, 1
    %p48 = scmp.ne.s32.totalorder %s43, %s45
    %p49 = scmp.eq.s32.totalorder %s9, 0
    %p50 = por %p48, %p49
    %p51 = scmp.ne.s32.totalorder %s43, %s45
    %p52 = scmp.eq.s32.totalorder %s14, 1
    %p53 = por %p51, %p52
    %p54 = scmp.ne.s32.totalorder %s45, %s46
    %p55 = scmp.eq.s32.totalorder %s14, 0
    %p56 = por %p54, %p55
    %p57 = scmp.ne.s32.totalorder %s45, %s46
    %p58 = scmp.eq.s32.totalorder %s15, 1
    %p59 = por %p57, %p58
    %p61 = scmp.ne.s32.totalorder %s46, %s60
    %p62 = scmp.eq.s32.totalorder %s15, 0
    %p63 = por %p61, %p62
    %s65 = sadd.s32 %s64, 1
    %p68 = scmp.eq.s32.totalorder %s9, 1
    %p69 = scmp.ne.s32.totalorder %s64, %s66
    %p70 = scmp.eq.s32.totalorder %s9, 0
    %p71 = por %p69, %p70
    %p72 = scmp.ne.s32.totalorder %s64, %s66
    %p73 = scmp.eq.s32.totalorder %s14, 1
    %p74 = por %p72, %p73
    %p75 = scmp.ne.s32.totalorder %s66, %s67
    %p76 = scmp.eq.s32.totalorder %s14, 0
    %p77 = por %p75, %p76
    %p78 = scmp.ne.s32.totalorder %s66, %s67
    %p79 = scmp.eq.s32.totalorder %s15, 1
    %p80 = por %p78, %p79
    %p82 = scmp.ne.s32.totalorder %s67, %s81
    %p83 = scmp.eq.s32.totalorder %s15, 0
    %p84 = por %p82, %p83
    %s85 = ssub.s32 %s9, %s16
    %p86 = scmp.eq.s32.totalorder %s85, 0
    %s88 = sadd.s32 %s87, 1
    %s89 = scalar_select %p86, %s87, %s88
    %p92 = pneg %p86
    %p93 = scmp.eq.s32.totalorder %s9, 1
    %p94 = por %p92, %p93
    %p95 = scmp.ne.s32.totalorder %s87, %s90
    %p96 = scmp.eq.s32.totalorder %s9, 0
    %p97 = por %p95, %p96
    %p98 = scmp.ne.s32.totalorder %s87, %s90
    %p99 = scmp.eq.s32.totalorder %s14, 1
    %p100 = por %p98, %p99
    %p101 = scmp.ne.s32.totalorder %s90, %s91
    %p102 = scmp.eq.s32.totalorder %s14, 0
    %p103 = por %p101, %p102
    %p104 = scmp.ne.s32.totalorder %s90, %s91
    %p105 = scmp.eq.s32.totalorder %s15, 1
    %p106 = por %p104, %p105
    %p108 = scmp.ne.s32.totalorder %s91, %s107
    %p109 = scmp.eq.s32.totalorder %s15, 0
    %p110 = por %p108, %p109
    %p111 = scmp.le.s32.totalorder 1, %s9
    %p112 = scmp.lt.s32.totalorder %s9, 3
    %p113 = pnand %p111, %p112
    %p114 = pneg %p113
    // Predicated region
    $region9: #{cnn_forward.3} parent=5 // pred_check
      _
    $region10: #{cnn_forward.3} parent=5 // pred_check_branch
      %116 = sbr.rel (%p113) target = $region12
    $region11: #{cnn_forward.3} parent=5 // pred_region
      %s117 = ssub.s32 %s9, 1
      // Predicated region
      $region13: #{cnn_forward.3} parent=11 // pred_check
        %p118 = pneg %p56
      $region14: #{cnn_forward.3} parent=11 // pred_check_branch
        %120 = sbr.rel (%p118) target = $region16
      $region15: #{cnn_forward.3} parent=11 // pred_region
        _
      $region16: #{cnn_forward.3} parent=11 // pred_fallthru
        _
      // Predicated region
      $region17: #{cnn_forward.3} parent=11 // pred_check
        %p121 = pneg %p77
      $region18: #{cnn_forward.3} parent=11 // pred_check_branch
        %123 = sbr.rel (%p121) target = $region20
      $region19: #{cnn_forward.3} parent=11 // pred_region
        _
      $region20: #{cnn_forward.3} parent=11 // pred_fallthru
        _
    $region12: #{cnn_forward.3} parent=5 // pred_fallthru
      _
    %p124 = scmp.lt.s32.totalorder %s9, 2
    // Predicated region
    $region21: #{cnn_forward.3} parent=5 // pred_check
      %p125 = pneg %p124
    $region22: #{cnn_forward.3} parent=5 // pred_check_branch
      %127 = sbr.rel (%p125) target = $region24
    $region23: #{cnn_forward.3} parent=5 // pred_region
      // Predicated region
      $region25: #{cnn_forward.3} parent=23 // pred_check
        %p128 = pneg %p29
      $region26: #{cnn_forward.3} parent=23 // pred_check_branch
        %130 = sbr.rel (%p128) target = $region28
      $region27: #{cnn_forward.3} parent=23 // pred_region
        %p131 = scmp.lt.s32.totalorder %s9, 1
        %s132 = scalar_select %p131, %s9, 1
        %s133 = smul.addr %s132, 100
        %s134 = smul.addr %s133, 8
        %s135 = scalar_lea.vmem %s0, %s134
      $region28: #{cnn_forward.3} parent=23 // pred_fallthru
        _
    $region24: #{cnn_forward.3} parent=5 // pred_fallthru
      _
    %p136 = scmp.le.s32.totalorder 1, %s9
    %p137 = scmp.lt.s32.totalorder %s9, 3
    %p138 = pnand %p136, %p137
    %p139 = pneg %p138
    // Predicated region
    $region29: #{cnn_forward.3} parent=5 // pred_check
      _
    $region30: #{cnn_forward.3} parent=5 // pred_check_branch
      %141 = sbr.rel (%p138) target = $region32
    $region31: #{cnn_forward.3} parent=5 // pred_region
      %s142 = ssub.s32 %s9, 1
      %p143 = scmp.lt.s32.totalorder %s14, 1
      %s144 = scalar_select %p143, %s14, 1
      %s145 = smul.addr %s144, 100
      %s146 = smul.addr %s145, 8
      %s147 = scalar_lea.vmem %s0, %s146
      %p148 = pneg %p35
      %p149 = pneg %p32
      %p150 = pneg %p56
      %p151 = pneg %p53
      %p152 = pneg %p77
      %p153 = pneg %p74
      %p154 = pneg %p103
      %p155 = pneg %p100
      %p156 = scmp.lt.s32.totalorder %s14, 1
      %s157 = scalar_select %p156, %s14, 1
      %s158 = smul.addr %s157, 25
      %s159 = smul.addr %s158, 8
      %s160 = scalar_lea.vmem %s3, %s159
      %p161 = scmp.lt.s32.totalorder %s14, 1
      %s162 = scalar_select %p161, %s14, 1
      %s163 = smul.addr %s162, 100
      %s164 = smul.addr %s163, 8
      %s165 = scalar_lea.vmem %s0, %s164
      %p166 = scmp.lt.s32.totalorder %s14, 1
      %s167 = scalar_select %p166, %s14, 1
      %s168 = smul.addr %s167, 25
      %s169 = smul.addr %s168, 8
      %s170 = scalar_lea.vmem %s3, %s169
      %v171 = vld [vmem:[%s165] sm:$0xff]
      %v172 = vld [vmem:[%s165 + $0x8] sm:$0xff]
      %v173 = vld [vmem:[%s165 + $0x10] sm:$0xff]
      %v174 = vld [vmem:[%s165 + $0x18] sm:$0xff]
      %v175 = vld [vmem:[%s165 + $0x20] sm:$0xff]
      %v176 = vld [vmem:[%s165 + $0x28] sm:$0xff]
      %v177 = vld [vmem:[%s165 + $0x30] sm:$0xff]
      %v178 = vld [vmem:[%s165 + $0x38] sm:$0xff]
      %v179 = vld [vmem:[%s165 + $0x40] sm:$0xff]
      %v180 = vld [vmem:[%s165 + $0x48] sm:$0xff]
      %v181 = vld [vmem:[%s165 + $0x50] sm:$0xff]
      %v182 = vld [vmem:[%s165 + $0x58] sm:$0xff]
      %v183 = vld [vmem:[%s165 + $0x60] sm:$0xff]
      %v184 = vld [vmem:[%s165 + $0x68] sm:$0xff]
      %v185 = vld [vmem:[%s165 + $0x70] sm:$0xff]
      %v186 = vld [vmem:[%s165 + $0x78] sm:$0xff]
      %v187 = vld [vmem:[%s165 + $0x80] sm:$0xff]
      %v188 = vld [vmem:[%s165 + $0x88] sm:$0xff]
      %v189 = vld [vmem:[%s165 + $0x90] sm:$0xff]
      %v190 = vld [vmem:[%s165 + $0x98] sm:$0xff]
      %v191 = vld [vmem:[%s165 + $0xa0] sm:$0xff]
      %v192 = vld [vmem:[%s165 + $0xa8] sm:$0xff]
      %v193 = vld [vmem:[%s165 + $0xb0] sm:$0xff]
      %v194 = vld [vmem:[%s165 + $0xb8] sm:$0xff]
      %v195 = vld [vmem:[%s165 + $0xc0] sm:$0xff]
      %v196 = vld [vmem:[%s165 + $0xc8] sm:$0xff]
      %v197 = vld [vmem:[%s165 + $0xd0] sm:$0xff]
      %v198 = vld [vmem:[%s165 + $0xd8] sm:$0xff]
      %v199 = vld [vmem:[%s165 + $0xe0] sm:$0xff]
      %v200 = vld [vmem:[%s165 + $0xe8] sm:$0xff]
      %v201 = vld [vmem:[%s165 + $0xf0] sm:$0xff]
      %v202 = vld [vmem:[%s165 + $0xf8] sm:$0xff]
      %v203 = vld [vmem:[%s165 + $0x100] sm:$0xff]
      %v204 = vld [vmem:[%s165 + $0x108] sm:$0xff]
      %v205 = vld [vmem:[%s165 + $0x110] sm:$0xff]
      %v206 = vld [vmem:[%s165 + $0x118] sm:$0xff]
      %v207 = vld [vmem:[%s165 + $0x120] sm:$0xff]
      %v208 = vld [vmem:[%s165 + $0x128] sm:$0xff]
      %v209 = vld [vmem:[%s165 + $0x130] sm:$0xff]
      %v210 = vld [vmem:[%s165 + $0x138] sm:$0xff]
      %v211 = vld [vmem:[%s165 + $0x140] sm:$0xff]
      %v212 = vld [vmem:[%s165 + $0x148] sm:$0xff]
      %v213 = vld [vmem:[%s165 + $0x150] sm:$0xff]
      %v214 = vld [vmem:[%s165 + $0x158] sm:$0xff]
      %v215 = vld [vmem:[%s165 + $0x160] sm:$0xff]
      %v216 = vld [vmem:[%s165 + $0x168] sm:$0xff]
      %v217 = vld [vmem:[%s165 + $0x170] sm:$0xff]
      %v218 = vld [vmem:[%s165 + $0x178] sm:$0xff]
      %v219 = vld [vmem:[%s165 + $0x180] sm:$0xff]
      %v220 = vld [vmem:[%s165 + $0x188] sm:$0xff]
      %v221 = vld [vmem:[%s165 + $0x190] sm:$0xff]
      %v222 = vld [vmem:[%s165 + $0x198] sm:$0xff]
      %v223 = vld [vmem:[%s165 + $0x1a0] sm:$0xff]
      %v224 = vld [vmem:[%s165 + $0x1a8] sm:$0xff]
      %v225 = vld [vmem:[%s165 + $0x1b0] sm:$0xff]
      %v226 = vld [vmem:[%s165 + $0x1b8] sm:$0xff]
      %v227 = vld [vmem:[%s165 + $0x1c0] sm:$0xff]
      %v228 = vld [vmem:[%s165 + $0x1c8] sm:$0xff]
      %v229 = vld [vmem:[%s165 + $0x1d0] sm:$0xff]
      %v230 = vld [vmem:[%s165 + $0x1d8] sm:$0xff]
      %v231 = vld [vmem:[%s165 + $0x1e0] sm:$0xff]
      %v232 = vld [vmem:[%s165 + $0x1e8] sm:$0xff]
      %v233 = vld [vmem:[%s165 + $0x1f0] sm:$0xff]
      %v234 = vld [vmem:[%s165 + $0x1f8] sm:$0xff]
      %v235 = vld [vmem:[%s165 + $0x200] sm:$0xff]
      %v236 = vld [vmem:[%s165 + $0x208] sm:$0xff]
      %v237 = vld [vmem:[%s165 + $0x210] sm:$0xff]
      %v238 = vld [vmem:[%s165 + $0x218] sm:$0xff]
      %v239 = vld [vmem:[%s165 + $0x220] sm:$0xff]
      %v240 = vld [vmem:[%s165 + $0x228] sm:$0xff]
      %v241 = vld [vmem:[%s165 + $0x230] sm:$0xff]
      %v242 = vld [vmem:[%s165 + $0x238] sm:$0xff]
      %v243 = vld [vmem:[%s165 + $0x240] sm:$0xff]
      %v244 = vld [vmem:[%s165 + $0x248] sm:$0xff]
      %v245 = vld [vmem:[%s165 + $0x250] sm:$0xff]
      %v246 = vld [vmem:[%s165 + $0x258] sm:$0xff]
      %v247 = vld [vmem:[%s165 + $0x260] sm:$0xff]
      %v248 = vld [vmem:[%s165 + $0x268] sm:$0xff]
      %v249 = vld [vmem:[%s165 + $0x270] sm:$0xff]
      %v250 = vld [vmem:[%s165 + $0x278] sm:$0xff]
      %v251 = vld [vmem:[%s165 + $0x280] sm:$0xff]
      %v252 = vld [vmem:[%s165 + $0x288] sm:$0xff]
      %v253 = vld [vmem:[%s165 + $0x290] sm:$0xff]
      %v254 = vld [vmem:[%s165 + $0x298] sm:$0xff]
      %v255 = vld [vmem:[%s165 + $0x2a0] sm:$0xff]
      %v256 = vld [vmem:[%s165 + $0x2a8] sm:$0xff]
      %v257 = vld [vmem:[%s165 + $0x2b0] sm:$0xff]
      %v258 = vld [vmem:[%s165 + $0x2b8] sm:$0xff]
      %v259 = vld [vmem:[%s165 + $0x2c0] sm:$0xff]
      %v260 = vld [vmem:[%s165 + $0x2c8] sm:$0xff]
      %v261 = vld [vmem:[%s165 + $0x2d0] sm:$0xff]
      %v262 = vld [vmem:[%s165 + $0x2d8] sm:$0xff]
      %v263 = vld [vmem:[%s165 + $0x2e0] sm:$0xff]
      %v264 = vld [vmem:[%s165 + $0x2e8] sm:$0xff]
      %v265 = vld [vmem:[%s165 + $0x2f0] sm:$0xff]
      %v266 = vld [vmem:[%s165 + $0x2f8] sm:$0xff]
      %v267 = vld [vmem:[%s165 + $0x300] sm:$0xff]
      %v268 = vld [vmem:[%s165 + $0x308] sm:$0xff]
      %v269 = vld [vmem:[%s165 + $0x310] sm:$0xff]
      %v270 = vld [vmem:[%s165 + $0x318] sm:$0xff]
      %v271 = vld [vmem:[%s1] sm:$0xff]
      %v272 = vld [vmem:[%s1 + $0x8] sm:$0xff]
      %v273 = vld [vmem:[%s1 + $0x10] sm:$0xff]
      %v274 = vld [vmem:[%s1 + $0x18] sm:$0x1]
      %vm275 = vcmask 203776
      %v277 = vsel %vm275, %v171, 0
      %v280 = vsel %vm275, %v172, 0
      %v283 = vsel %vm275, %v173, 0
      %v286 = vsel %vm275, %v174, 0
      %v289 = vsel %vm275, %v175, 0
      %v292 = vsel %vm275, %v176, 0
      %v295 = vsel %vm275, %v177, 0
      %v298 = vsel %vm275, %v178, 0
      %v301 = vsel %vm275, %v179, 0
      %v304 = vsel %vm275, %v180, 0
      %v307 = vsel %vm275, %v181, 0
      %v310 = vsel %vm275, %v182, 0
      %v313 = vsel %vm275, %v183, 0
      %v316 = vsel %vm275, %v184, 0
      %v319 = vsel %vm275, %v185, 0
      %v322 = vsel %vm275, %v186, 0
      %v325 = vsel %vm275, %v187, 0
      %v328 = vsel %vm275, %v188, 0
      %v331 = vsel %vm275, %v189, 0
      %v334 = vsel %vm275, %v190, 0
      %v337 = vsel %vm275, %v191, 0
      %v340 = vsel %vm275, %v192, 0
      %v343 = vsel %vm275, %v193, 0
      %v346 = vsel %vm275, %v194, 0
      %v349 = vsel %vm275, %v195, 0
      %v352 = vsel %vm275, %v196, 0
      %v355 = vsel %vm275, %v197, 0
      %v358 = vsel %vm275, %v198, 0
      %v361 = vsel %vm275, %v199, 0
      %v364 = vsel %vm275, %v200, 0
      %v367 = vsel %vm275, %v201, 0
      %v370 = vsel %vm275, %v202, 0
      %v373 = vsel %vm275, %v203, 0
      %v376 = vsel %vm275, %v204, 0
      %v379 = vsel %vm275, %v205, 0
      %v382 = vsel %vm275, %v206, 0
      %v385 = vsel %vm275, %v207, 0
      %v388 = vsel %vm275, %v208, 0
      %v391 = vsel %vm275, %v209, 0
      %v394 = vsel %vm275, %v210, 0
      %v397 = vsel %vm275, %v211, 0
      %v400 = vsel %vm275, %v212, 0
      %v403 = vsel %vm275, %v213, 0
      %v406 = vsel %vm275, %v214, 0
      %v409 = vsel %vm275, %v215, 0
      %v412 = vsel %vm275, %v216, 0
      %v415 = vsel %vm275, %v217, 0
      %v418 = vsel %vm275, %v218, 0
      %v421 = vsel %vm275, %v219, 0
      %v424 = vsel %vm275, %v220, 0
      %v427 = vsel %vm275, %v221, 0
      %v430 = vsel %vm275, %v222, 0
      %v433 = vsel %vm275, %v223, 0
      %v436 = vsel %vm275, %v224, 0
      %v439 = vsel %vm275, %v225, 0
      %v442 = vsel %vm275, %v226, 0
      %v445 = vsel %vm275, %v227, 0
      %v448 = vsel %vm275, %v228, 0
      %v451 = vsel %vm275, %v229, 0
      %v454 = vsel %vm275, %v230, 0
      %v457 = vsel %vm275, %v231, 0
      %v460 = vsel %vm275, %v232, 0
      %v463 = vsel %vm275, %v233, 0
      %v466 = vsel %vm275, %v234, 0
      %v469 = vsel %vm275, %v235, 0
      %v472 = vsel %vm275, %v236, 0
      %v475 = vsel %vm275, %v237, 0
      %v478 = vsel %vm275, %v238, 0
      %v481 = vsel %vm275, %v239, 0
      %v484 = vsel %vm275, %v240, 0
      %v487 = vsel %vm275, %v241, 0
      %v490 = vsel %vm275, %v242, 0
      %v493 = vsel %vm275, %v243, 0
      %v496 = vsel %vm275, %v244, 0
      %v499 = vsel %vm275, %v245, 0
      %v502 = vsel %vm275, %v246, 0
      %v505 = vsel %vm275, %v247, 0
      %v508 = vsel %vm275, %v248, 0
      %v511 = vsel %vm275, %v249, 0
      %v514 = vsel %vm275, %v250, 0
      %v517 = vsel %vm275, %v251, 0
      %v520 = vsel %vm275, %v252, 0
      %v523 = vsel %vm275, %v253, 0
      %v526 = vsel %vm275, %v254, 0
      %v529 = vsel %vm275, %v255, 0
      %v532 = vsel %vm275, %v256, 0
      %v535 = vsel %vm275, %v257, 0
      %v538 = vsel %vm275, %v258, 0
      %v541 = vsel %vm275, %v259, 0
      %v544 = vsel %vm275, %v260, 0
      %v547 = vsel %vm275, %v261, 0
      %v550 = vsel %vm275, %v262, 0
      %v553 = vsel %vm275, %v263, 0
      %v556 = vsel %vm275, %v264, 0
      %v559 = vsel %vm275, %v265, 0
      %v562 = vsel %vm275, %v266, 0
      %v565 = vsel %vm275, %v267, 0
      %v568 = vsel %vm275, %v268, 0
      %v571 = vsel %vm275, %v269, 0
      %v574 = vsel %vm275, %v270, 0
      %vm576 = vcmask 1040384
      %v578 = vsel %vm576, %v274, 0
      %580 = vmatprep.subr.mxu0 0.0
      %581 = vmatpush1.msra.mxu0 %v271
      %582 = vmatprep.subr.mxu0 0.0
      %583 = vmatpush1.msra.mxu0 %v272
      %584 = vmatprep.subr.mxu0 0.0
      %585 = vmatpush1.msra.mxu0 %v273
      %586 = vmatprep.subr.mxu0 0.0
      %587 = vmatpush1.msra.mxu0 %v578
      %588 = vmatprep.subr.mxu0 0.0
      %589 = vmatpush1.msra.mxu0 0.0
      %590 = vmatprep.subr.mxu0 0.0
      %591 = vmatpush1.msra.mxu0 0.0
      %592 = vmatprep.subr.mxu0 0.0
      %593 = vmatpush1.msra.mxu0 0.0
      %594 = vmatprep.subr.mxu0 0.0
      %595 = vmatpush1.msra.mxu0 0.0
      %596 = vmatprep.subr.mxu0 0.0
      %597 = vmatpush1.msra.mxu0 0.0
      %598 = vmatprep.subr.mxu0 0.0
      %599 = vmatpush1.msra.mxu0 0.0
      %600 = vmatprep.subr.mxu0 0.0
      %601 = vmatpush1.msra.mxu0 0.0
      %602 = vmatprep.subr.mxu0 0.0
      %603 = vmatpush1.msra.mxu0 0.0
      %604 = vmatprep.subr.mxu0 0.0
      %605 = vmatpush1.msra.mxu0 0.0
      %606 = vmatprep.subr.mxu0 0.0
      %607 = vmatpush1.msra.mxu0 0.0
      %608 = vmatprep.subr.mxu0 0.0
      %609 = vmatpush1.msra.mxu0 0.0
      %610 = vmatprep.subr.mxu0 0.0
      %611 = vmatpush1.msra.mxu0 0.0
      %612 = vmatprep.subr.mxu0 0.0
      %613 = vmatpush1.msra.mxu0 0.0
      %614 = vmatprep.subr.mxu0 0.0
      %615 = vmatpush1.msra.mxu0 0.0
      %616 = vmatprep.subr.mxu0 0.0
      %617 = vmatpush1.msra.mxu0 0.0
      %618 = vmatprep.subr.mxu0 0.0
      %619 = vmatpush1.msra.mxu0 0.0
      %620 = vmatprep.subr.mxu0 0.0
      %621 = vmatpush1.msra.mxu0 0.0
      %622 = vmatprep.subr.mxu0 0.0
      %623 = vmatpush1.msra.mxu0 0.0
      %624 = vmatprep.subr.mxu0 0.0
      %625 = vmatpush1.msra.mxu0 0.0
      %626 = vmatprep.subr.mxu0 0.0
      %627 = vmatpush1.msra.mxu0 0.0
      %628 = vmatprep.subr.mxu0 0.0
      %629 = vmatpush1.msra.mxu0 0.0
      %630 = vmatprep.subr.mxu0 0.0
      %631 = vmatpush1.msra.mxu0 0.0
      %632 = vmatprep.subr.mxu0 0.0
      %633 = vmatpush1.msra.mxu0 0.0
      %634 = vmatprep.subr.mxu0 0.0
      %635 = vmatpush1.msra.mxu0 0.0
      %636 = vmatprep.subr.mxu0 0.0
      %637 = vmatpush1.msra.mxu0 0.0
      %638 = vmatprep.subr.mxu0 0.0
      %639 = vmatpush1.msra.mxu0 0.0
      %640 = vmatprep.subr.mxu0 0.0
      %641 = vmatpush1.msra.mxu0 0.0
      %642 = vmatprep.subr.mxu0 0.0
      %643 = vmatpush1.msra.mxu0 0.0
      %644 = vmatprep.mubr.f32.mxu0 0.0
      %645 = vmatmul.mubr.f32.gmra.mrb[0].mxu0 %v277
      %v646 = vpop.f32.mrb[0].mxu0
      %v647 = vadd.f32 0.0, %v646
      %v648 = vpop.f32.mrb[0].mxu0
      %649 = vmatprep.mubr.f32.mxu0 0.0
      %650 = vmatmul.mubr.f32.gmra.mrb[0].mxu0 %v280
      %v651 = vpop.f32.mrb[0].mxu0
      %v652 = vadd.f32 0.0, %v651
      %v653 = vpop.f32.mrb[0].mxu0
      %654 = vmatprep.mubr.f32.mxu0 0.0
      %655 = vmatmul.mubr.f32.gmra.mrb[0].mxu0 %v283
      %v656 = vpop.f32.mrb[0].mxu0
      %v657 = vadd.f32 0.0, %v656
      %v658 = vpop.f32.mrb[0].mxu0
      %659 = vmatprep.mubr.f32.mxu0 0.0
      %660 = vmatmul.mubr.f32.gmra.mrb[0].mxu0 %v286
      %v661 = vpop.f32.mrb[0].mxu0
      %v662 = vadd.f32 0.0, %v661
      %v663 = vpop.f32.mrb[0].mxu0
      %664 = vmatprep.mubr.f32.mxu0 0.0
      %665 = vmatmul.mubr.f32.gmra.mrb[0].mxu0 %v289
      %v666 = vpop.f32.mrb[0].mxu0
      %v667 = vadd.f32 0.0, %v666
      %v668 = vpop.f32.mrb[0].mxu0
      %669 = vmatprep.mubr.f32.mxu0 0.0
      %670 = vmatmul.mubr.f32.gmra.mrb[0].mxu0 %v292
      %v671 = vpop.f32.mrb[0].mxu0
      %v672 = vadd.f32 0.0, %v671
      %v673 = vpop.f32.mrb[0].mxu0
      %674 = vmatprep.mubr.f32.mxu0 0.0
      %675 = vmatmul.mubr.f32.gmra.mrb[0].mxu0 %v295
      %v676 = vpop.f32.mrb[0].mxu0
      %v677 = vadd.f32 0.0, %v676
      %v678 = vpop.f32.mrb[0].mxu0
      %679 = vmatprep.mubr.f32.mxu0 0.0
      %680 = vmatmul.mubr.f32.gmra.mrb[0].mxu0 %v298
      %v681 = vpop.f32.mrb[0].mxu0
      %v682 = vadd.f32 0.0, %v681
      %v683 = vpop.f32.mrb[0].mxu0
      %684 = vmatprep.mubr.f32.mxu0 0.0
      %685 = vmatmul.mubr.f32.gmra.mrb[0].mxu0 %v301
      %v686 = vpop.f32.mrb[0].mxu0
      %v687 = vadd.f32 0.0, %v686
      %v688 = vpop.f32.mrb[0].mxu0
      %689 = vmatprep.mubr.f32.mxu0 0.0
      %690 = vmatmul.mubr.f32.gmra.mrb[0].mxu0 %v304
      %v691 = vpop.f32.mrb[0].mxu0
      %v692 = vadd.f32 0.0, %v691
      %v693 = vpop.f32.mrb[0].mxu0
      %694 = vmatprep.mubr.f32.mxu0 0.0
      %695 = vmatmul.mubr.f32.gmra.mrb[0].mxu0 %v307
      %v696 = vpop.f32.mrb[0].mxu0
      %v697 = vadd.f32 0.0, %v696
      %v698 = vpop.f32.mrb[0].mxu0
      %699 = vmatprep.mubr.f32.mxu0 0.0
      %700 = vmatmul.mubr.f32.gmra.mrb[0].mxu0 %v310
      %v701 = vpop.f32.mrb[0].mxu0
      %v702 = vadd.f32 0.0, %v701
      %v703 = vpop.f32.mrb[0].mxu0
      %704 = vmatprep.mubr.f32.mxu0 0.0
      %705 = vmatmul.mubr.f32.gmra.mrb[0].mxu0 %v313
      %v706 = vpop.f32.mrb[0].mxu0
      %v707 = vadd.f32 0.0, %v706
      %v708 = vpop.f32.mrb[0].mxu0
      %709 = vmatprep.mubr.f32.mxu0 0.0
      %710 = vmatmul.mubr.f32.gmra.mrb[0].mxu0 %v316
      %v711 = vpop.f32.mrb[0].mxu0
      %v712 = vadd.f32 0.0, %v711
      %v713 = vpop.f32.mrb[0].mxu0
      %714 = vmatprep.mubr.f32.mxu0 0.0
      %715 = vmatmul.mubr.f32.gmra.mrb[0].mxu0 %v319
      %v716 = vpop.f32.mrb[0].mxu0
      %v717 = vadd.f32 0.0, %v716
      %v718 = vpop.f32.mrb[0].mxu0
      %719 = vmatprep.mubr.f32.mxu0 0.0
      %720 = vmatmul.mubr.f32.gmra.mrb[0].mxu0 %v322
      %v721 = vpop.f32.mrb[0].mxu0
      %v722 = vadd.f32 0.0, %v721
      %v723 = vpop.f32.mrb[0].mxu0
      %724 = vmatprep.mubr.f32.mxu0 0.0
      %725 = vmatmul.mubr.f32.gmra.mrb[0].mxu0 %v325
      %v726 = vpop.f32.mrb[0].mxu0
      %v727 = vadd.f32 0.0, %v726
      %v728 = vpop.f32.mrb[0].mxu0
      %729 = vmatprep.mubr.f32.mxu0 0.0
      %730 = vmatmul.mubr.f32.gmra.mrb[0].mxu0 %v328
      %v731 = vpop.f32.mrb[0].mxu0
      %v732 = vadd.f32 0.0, %v731
      %v733 = vpop.f32.mrb[0].mxu0
      %734 = vmatprep.mubr.f32.mxu0 0.0
      %735 = vmatmul.mubr.f32.gmra.mrb[0].mxu0 %v331
      %v736 = vpop.f32.mrb[0].mxu0
      %v737 = vadd.f32 0.0, %v736
      %v738 = vpop.f32.mrb[0].mxu0
      %739 = vmatprep.mubr.f32.mxu0 0.0
      %740 = vmatmul.mubr.f32.gmra.mrb[0].mxu0 %v334
      %v741 = vpop.f32.mrb[0].mxu0
      %v742 = vadd.f32 0.0, %v741
      %v743 = vpop.f32.mrb[0].mxu0
      %744 = vmatprep.mubr.f32.mxu0 0.0
      %745 = vmatmul.mubr.f32.gmra.mrb[0].mxu0 %v337
      %v746 = vpop.f32.mrb[0].mxu0
      %v747 = vadd.f32 0.0, %v746
      %v748 = vpop.f32.mrb[0].mxu0
      %749 = vmatprep.mubr.f32.mxu0 0.0
      %750 = vmatmul.mubr.f32.gmra.mrb[0].mxu0 %v340
      %v751 = vpop.f32.mrb[0].mxu0
      %v752 = vadd.f32 0.0, %v751
      %v753 = vpop.f32.mrb[0].mxu0
      %754 = vmatprep.mubr.f32.mxu0 0.0
      %755 = vmatmul.mubr.f32.gmra.mrb[0].mxu0 %v343
      %v756 = vpop.f32.mrb[0].mxu0
      %v757 = vadd.f32 0.0, %v756
      %v758 = vpop.f32.mrb[0].mxu0
      %759 = vmatprep.mubr.f32.mxu0 0.0
      %760 = vmatmul.mubr.f32.gmra.mrb[0].mxu0 %v346
      %v761 = vpop.f32.mrb[0].mxu0
      %v762 = vadd.f32 0.0, %v761
      %v763 = vpop.f32.mrb[0].mxu0
      %764 = vmatprep.mubr.f32.mxu0 0.0
      %765 = vmatmul.mubr.f32.gmra.mrb[0].mxu0 %v349
      %v766 = vpop.f32.mrb[0].mxu0
      %v767 = vadd.f32 0.0, %v766
      %v768 = vpop.f32.mrb[0].mxu0
      %769 = vmatprep.mubr.f32.mxu0 0.0
      %770 = vmatmul.mubr.f32.gmra.mrb[0].mxu0 %v352
      %v771 = vpop.f32.mrb[0].mxu0
      %v772 = vadd.f32 0.0, %v771
      %v773 = vpop.f32.mrb[0].mxu0
      %774 = vmatprep.mubr.f32.mxu0 0.0
      %775 = vmatmul.mubr.f32.gmra.mrb[0].mxu0 %v355
      %v776 = vpop.f32.mrb[0].mxu0
      %v777 = vadd.f32 0.0, %v776
      %v778 = vpop.f32.mrb[0].mxu0
      %779 = vmatprep.mubr.f32.mxu0 0.0
      %780 = vmatmul.mubr.f32.gmra.mrb[0].mxu0 %v358
      %v781 = vpop.f32.mrb[0].mxu0
      %v782 = vadd.f32 0.0, %v781
      %v783 = vpop.f32.mrb[0].mxu0
      %784 = vmatprep.mubr.f32.mxu0 0.0
      %785 = vmatmul.mubr.f32.gmra.mrb[0].mxu0 %v361
      %v786 = vpop.f32.mrb[0].mxu0
      %v787 = vadd.f32 0.0, %v786
      %v788 = vpop.f32.mrb[0].mxu0
      %789 = vmatprep.mubr.f32.mxu0 0.0
      %790 = vmatmul.mubr.f32.gmra.mrb[0].mxu0 %v364
      %v791 = vpop.f32.mrb[0].mxu0
      %v792 = vadd.f32 0.0, %v791
      %v793 = vpop.f32.mrb[0].mxu0
      %794 = vmatprep.mubr.f32.mxu0 0.0
      %795 = vmatmul.mubr.f32.gmra.mrb[0].mxu0 %v367
      %v796 = vpop.f32.mrb[0].mxu0
      %v797 = vadd.f32 0.0, %v796
      %v798 = vpop.f32.mrb[0].mxu0
      %799 = vmatprep.mubr.f32.mxu0 0.0
      %800 = vmatmul.mubr.f32.gmra.mrb[0].mxu0 %v370
      %v801 = vpop.f32.mrb[0].mxu0
      %v802 = vadd.f32 0.0, %v801
      %v803 = vpop.f32.mrb[0].mxu0
      %804 = vmatprep.mubr.f32.mxu0 0.0
      %805 = vmatmul.mubr.f32.gmra.mrb[0].mxu0 %v373
      %v806 = vpop.f32.mrb[0].mxu0
      %v807 = vadd.f32 0.0, %v806
      %v808 = vpop.f32.mrb[0].mxu0
      %809 = vmatprep.mubr.f32.mxu0 0.0
      %810 = vmatmul.mubr.f32.gmra.mrb[0].mxu0 %v376
      %v811 = vpop.f32.mrb[0].mxu0
      %v812 = vadd.f32 0.0, %v811
      %v813 = vpop.f32.mrb[0].mxu0
      %814 = vmatprep.mubr.f32.mxu0 0.0
      %815 = vmatmul.mubr.f32.gmra.mrb[0].mxu0 %v379
      %v816 = vpop.f32.mrb[0].mxu0
      %v817 = vadd.f32 0.0, %v816
      %v818 = vpop.f32.mrb[0].mxu0
      %819 = vmatprep.mubr.f32.mxu0 0.0
      %820 = vmatmul.mubr.f32.gmra.mrb[0].mxu0 %v382
      %v821 = vpop.f32.mrb[0].mxu0
      %v822 = vadd.f32 0.0, %v821
      %v823 = vpop.f32.mrb[0].mxu0
      %824 = vmatprep.mubr.f32.mxu0 0.0
      %825 = vmatmul.mubr.f32.gmra.mrb[0].mxu0 %v385
      %v826 = vpop.f32.mrb[0].mxu0
      %v827 = vadd.f32 0.0, %v826
      %v828 = vpop.f32.mrb[0].mxu0
      %829 = vmatprep.mubr.f32.mxu0 0.0
      %830 = vmatmul.mubr.f32.gmra.mrb[0].mxu0 %v388
      %v831 = vpop.f32.mrb[0].mxu0
      %v832 = vadd.f32 0.0, %v831
      %v833 = vpop.f32.mrb[0].mxu0
      %834 = vmatprep.mubr.f32.mxu0 0.0
      %835 = vmatmul.mubr.f32.gmra.mrb[0].mxu0 %v391
      %v836 = vpop.f32.mrb[0].mxu0
      %v837 = vadd.f32 0.0, %v836
      %v838 = vpop.f32.mrb[0].mxu0
      %839 = vmatprep.mubr.f32.mxu0 0.0
      %840 = vmatmul.mubr.f32.gmra.mrb[0].mxu0 %v394
      %v841 = vpop.f32.mrb[0].mxu0
      %v842 = vadd.f32 0.0, %v841
      %v843 = vpop.f32.mrb[0].mxu0
      %844 = vmatprep.mubr.f32.mxu0 0.0
      %845 = vmatmul.mubr.f32.gmra.mrb[0].mxu0 %v397
      %v846 = vpop.f32.mrb[0].mxu0
      %v847 = vadd.f32 0.0, %v846
      %v848 = vpop.f32.mrb[0].mxu0
      %849 = vmatprep.mubr.f32.mxu0 0.0
      %850 = vmatmul.mubr.f32.gmra.mrb[0].mxu0 %v400
      %v851 = vpop.f32.mrb[0].mxu0
      %v852 = vadd.f32 0.0, %v851
      %v853 = vpop.f32.mrb[0].mxu0
      %854 = vmatprep.mubr.f32.mxu0 0.0
      %855 = vmatmul.mubr.f32.gmra.mrb[0].mxu0 %v403
      %v856 = vpop.f32.mrb[0].mxu0
      %v857 = vadd.f32 0.0, %v856
      %v858 = vpop.f32.mrb[0].mxu0
      %859 = vmatprep.mubr.f32.mxu0 0.0
      %860 = vmatmul.mubr.f32.gmra.mrb[0].mxu0 %v406
      %v861 = vpop.f32.mrb[0].mxu0
      %v862 = vadd.f32 0.0, %v861
      %v863 = vpop.f32.mrb[0].mxu0
      %864 = vmatprep.mubr.f32.mxu0 0.0
      %865 = vmatmul.mubr.f32.gmra.mrb[0].mxu0 %v409
      %v866 = vpop.f32.mrb[0].mxu0
      %v867 = vadd.f32 0.0, %v866
      %v868 = vpop.f32.mrb[0].mxu0
      %869 = vmatprep.mubr.f32.mxu0 0.0
      %870 = vmatmul.mubr.f32.gmra.mrb[0].mxu0 %v412
      %v871 = vpop.f32.mrb[0].mxu0
      %v872 = vadd.f32 0.0, %v871
      %v873 = vpop.f32.mrb[0].mxu0
      %874 = vmatprep.mubr.f32.mxu0 0.0
      %875 = vmatmul.mubr.f32.gmra.mrb[0].mxu0 %v415
      %v876 = vpop.f32.mrb[0].mxu0
      %v877 = vadd.f32 0.0, %v876
      %v878 = vpop.f32.mrb[0].mxu0
      %879 = vmatprep.mubr.f32.mxu0 0.0
      %880 = vmatmul.mubr.f32.gmra.mrb[0].mxu0 %v418
      %v881 = vpop.f32.mrb[0].mxu0
      %v882 = vadd.f32 0.0, %v881
      %v883 = vpop.f32.mrb[0].mxu0
      %884 = vmatprep.mubr.f32.mxu0 0.0
      %885 = vmatmul.mubr.f32.gmra.mrb[0].mxu0 %v421
      %v886 = vpop.f32.mrb[0].mxu0
      %v887 = vadd.f32 0.0, %v886
      %v888 = vpop.f32.mrb[0].mxu0
      %889 = vmatprep.mubr.f32.mxu0 0.0
      %890 = vmatmul.mubr.f32.gmra.mrb[0].mxu0 %v424
      %v891 = vpop.f32.mrb[0].mxu0
      %v892 = vadd.f32 0.0, %v891
      %v893 = vpop.f32.mrb[0].mxu0
      %894 = vmatprep.mubr.f32.mxu0 0.0
      %895 = vmatmul.mubr.f32.gmra.mrb[0].mxu0 %v427
      %v896 = vpop.f32.mrb[0].mxu0
      %v897 = vadd.f32 0.0, %v896
      %v898 = vpop.f32.mrb[0].mxu0
      %899 = vmatprep.mubr.f32.mxu0 0.0
      %900 = vmatmul.mubr.f32.gmra.mrb[0].mxu0 %v430
      %v901 = vpop.f32.mrb[0].mxu0
      %v902 = vadd.f32 0.0, %v901
      %v903 = vpop.f32.mrb[0].mxu0
      %904 = vmatprep.mubr.f32.mxu0 0.0
      %905 = vmatmul.mubr.f32.gmra.mrb[0].mxu0 %v433
      %v906 = vpop.f32.mrb[0].mxu0
      %v907 = vadd.f32 0.0, %v906
      %v908 = vpop.f32.mrb[0].mxu0
      %909 = vmatprep.mubr.f32.mxu0 0.0
      %910 = vmatmul.mubr.f32.gmra.mrb[0].mxu0 %v436
      %v911 = vpop.f32.mrb[0].mxu0
      %v912 = vadd.f32 0.0, %v911
      %v913 = vpop.f32.mrb[0].mxu0
      %914 = vmatprep.mubr.f32.mxu0 0.0
      %915 = vmatmul.mubr.f32.gmra.mrb[0].mxu0 %v439
      %v916 = vpop.f32.mrb[0].mxu0
      %v917 = vadd.f32 0.0, %v916
      %v918 = vpop.f32.mrb[0].mxu0
      %919 = vmatprep.mubr.f32.mxu0 0.0
      %920 = vmatmul.mubr.f32.gmra.mrb[0].mxu0 %v442
      %v921 = vpop.f32.mrb[0].mxu0
      %v922 = vadd.f32 0.0, %v921
      %v923 = vpop.f32.mrb[0].mxu0
      %924 = vmatprep.mubr.f32.mxu0 0.0
      %925 = vmatmul.mubr.f32.gmra.mrb[0].mxu0 %v445
      %v926 = vpop.f32.mrb[0].mxu0
      %v927 = vadd.f32 0.0, %v926
      %v928 = vpop.f32.mrb[0].mxu0
      %929 = vmatprep.mubr.f32.mxu0 0.0
      %930 = vmatmul.mubr.f32.gmra.mrb[0].mxu0 %v448
      %v931 = vpop.f32.mrb[0].mxu0
      %v932 = vadd.f32 0.0, %v931
      %v933 = vpop.f32.mrb[0].mxu0
      %934 = vmatprep.mubr.f32.mxu0 0.0
      %935 = vmatmul.mubr.f32.gmra.mrb[0].mxu0 %v451
      %v936 = vpop.f32.mrb[0].mxu0
      %v937 = vadd.f32 0.0, %v936
      %v938 = vpop.f32.mrb[0].mxu0
      %939 = vmatprep.mubr.f32.mxu0 0.0
      %940 = vmatmul.mubr.f32.gmra.mrb[0].mxu0 %v454
      %v941 = vpop.f32.mrb[0].mxu0
      %v942 = vadd.f32 0.0, %v941
      %v943 = vpop.f32.mrb[0].mxu0
      %944 = vmatprep.mubr.f32.mxu0 0.0
      %945 = vmatmul.mubr.f32.gmra.mrb[0].mxu0 %v457
      %v946 = vpop.f32.mrb[0].mxu0
      %v947 = vadd.f32 0.0, %v946
      %v948 = vpop.f32.mrb[0].mxu0
      %949 = vmatprep.mubr.f32.mxu0 0.0
      %950 = vmatmul.mubr.f32.gmra.mrb[0].mxu0 %v460
      %v951 = vpop.f32.mrb[0].mxu0
      %v952 = vadd.f32 0.0, %v951
      %v953 = vpop.f32.mrb[0].mxu0
      %954 = vmatprep.mubr.f32.mxu0 0.0
      %955 = vmatmul.mubr.f32.gmra.mrb[0].mxu0 %v463
      %v956 = vpop.f32.mrb[0].mxu0
      %v957 = vadd.f32 0.0, %v956
      %v958 = vpop.f32.mrb[0].mxu0
      %959 = vmatprep.mubr.f32.mxu0 0.0
      %960 = vmatmul.mubr.f32.gmra.mrb[0].mxu0 %v466
      %v961 = vpop.f32.mrb[0].mxu0
      %v962 = vadd.f32 0.0, %v961
      %v963 = vpop.f32.mrb[0].mxu0
      %964 = vmatprep.mubr.f32.mxu0 0.0
      %965 = vmatmul.mubr.f32.gmra.mrb[0].mxu0 %v469
      %v966 = vpop.f32.mrb[0].mxu0
      %v967 = vadd.f32 0.0, %v966
      %v968 = vpop.f32.mrb[0].mxu0
      %969 = vmatprep.mubr.f32.mxu0 0.0
      %970 = vmatmul.mubr.f32.gmra.mrb[0].mxu0 %v472
      %v971 = vpop.f32.mrb[0].mxu0
      %v972 = vadd.f32 0.0, %v971
      %v973 = vpop.f32.mrb[0].mxu0
      %974 = vmatprep.mubr.f32.mxu0 0.0
      %975 = vmatmul.mubr.f32.gmra.mrb[0].mxu0 %v475
      %v976 = vpop.f32.mrb[0].mxu0
      %v977 = vadd.f32 0.0, %v976
      %v978 = vpop.f32.mrb[0].mxu0
      %979 = vmatprep.mubr.f32.mxu0 0.0
      %980 = vmatmul.mubr.f32.gmra.mrb[0].mxu0 %v478
      %v981 = vpop.f32.mrb[0].mxu0
      %v982 = vadd.f32 0.0, %v981
      %v983 = vpop.f32.mrb[0].mxu0
      %984 = vmatprep.mubr.f32.mxu0 0.0
      %985 = vmatmul.mubr.f32.gmra.mrb[0].mxu0 %v481
      %v986 = vpop.f32.mrb[0].mxu0
      %v987 = vadd.f32 0.0, %v986
      %v988 = vpop.f32.mrb[0].mxu0
      %989 = vmatprep.mubr.f32.mxu0 0.0
      %990 = vmatmul.mubr.f32.gmra.mrb[0].mxu0 %v484
      %v991 = vpop.f32.mrb[0].mxu0
      %v992 = vadd.f32 0.0, %v991
      %v993 = vpop.f32.mrb[0].mxu0
      %994 = vmatprep.mubr.f32.mxu0 0.0
      %995 = vmatmul.mubr.f32.gmra.mrb[0].mxu0 %v487
      %v996 = vpop.f32.mrb[0].mxu0
      %v997 = vadd.f32 0.0, %v996
      %v998 = vpop.f32.mrb[0].mxu0
      %999 = vmatprep.mubr.f32.mxu0 0.0
      %1000 = vmatmul.mubr.f32.gmra.mrb[0].mxu0 %v490
      %v1001 = vpop.f32.mrb[0].mxu0
      %v1002 = vadd.f32 0.0, %v1001
      %v1003 = vpop.f32.mrb[0].mxu0
      %1004 = vmatprep.mubr.f32.mxu0 0.0
      %1005 = vmatmul.mubr.f32.gmra.mrb[0].mxu0 %v493
      %v1006 = vpop.f32.mrb[0].mxu0
      %v1007 = vadd.f32 0.0, %v1006
      %v1008 = vpop.f32.mrb[0].mxu0
      %1009 = vmatprep.mubr.f32.mxu0 0.0
      %1010 = vmatmul.mubr.f32.gmra.mrb[0].mxu0 %v496
      %v1011 = vpop.f32.mrb[0].mxu0
      %v1012 = vadd.f32 0.0, %v1011
      %v1013 = vpop.f32.mrb[0].mxu0
      %1014 = vmatprep.mubr.f32.mxu0 0.0
      %1015 = vmatmul.mubr.f32.gmra.mrb[0].mxu0 %v499
      %v1016 = vpop.f32.mrb[0].mxu0
      %v1017 = vadd.f32 0.0, %v1016
      %v1018 = vpop.f32.mrb[0].mxu0
      %1019 = vmatprep.mubr.f32.mxu0 0.0
      %1020 = vmatmul.mubr.f32.gmra.mrb[0].mxu0 %v502
      %v1021 = vpop.f32.mrb[0].mxu0
      %v1022 = vadd.f32 0.0, %v1021
      %v1023 = vpop.f32.mrb[0].mxu0
      %1024 = vmatprep.mubr.f32.mxu0 0.0
      %1025 = vmatmul.mubr.f32.gmra.mrb[0].mxu0 %v505
      %v1026 = vpop.f32.mrb[0].mxu0
      %v1027 = vadd.f32 0.0, %v1026
      %v1028 = vpop.f32.mrb[0].mxu0
      %1029 = vmatprep.mubr.f32.mxu0 0.0
      %1030 = vmatmul.mubr.f32.gmra.mrb[0].mxu0 %v508
      %v1031 = vpop.f32.mrb[0].mxu0
      %v1032 = vadd.f32 0.0, %v1031
      %v1033 = vpop.f32.mrb[0].mxu0
      %1034 = vmatprep.mubr.f32.mxu0 0.0
      %1035 = vmatmul.mubr.f32.gmra.mrb[0].mxu0 %v511
      %v1036 = vpop.f32.mrb[0].mxu0
      %v1037 = vadd.f32 0.0, %v1036
      %v1038 = vpop.f32.mrb[0].mxu0
      %1039 = vmatprep.mubr.f32.mxu0 0.0
      %1040 = vmatmul.mubr.f32.gmra.mrb[0].mxu0 %v514
      %v1041 = vpop.f32.mrb[0].mxu0
      %v1042 = vadd.f32 0.0, %v1041
      %v1043 = vpop.f32.mrb[0].mxu0
      %1044 = vmatprep.mubr.f32.mxu0 0.0
      %1045 = vmatmul.mubr.f32.gmra.mrb[0].mxu0 %v517
      %v1046 = vpop.f32.mrb[0].mxu0
      %v1047 = vadd.f32 0.0, %v1046
      %v1048 = vpop.f32.mrb[0].mxu0
      %1049 = vmatprep.mubr.f32.mxu0 0.0
      %1050 = vmatmul.mubr.f32.gmra.mrb[0].mxu0 %v520
      %v1051 = vpop.f32.mrb[0].mxu0
      %v1052 = vadd.f32 0.0, %v1051
      %v1053 = vpop.f32.mrb[0].mxu0
      %1054 = vmatprep.mubr.f32.mxu0 0.0
      %1055 = vmatmul.mubr.f32.gmra.mrb[0].mxu0 %v523
      %v1056 = vpop.f32.mrb[0].mxu0
      %v1057 = vadd.f32 0.0, %v1056
      %v1058 = vpop.f32.mrb[0].mxu0
      %1059 = vmatprep.mubr.f32.mxu0 0.0
      %1060 = vmatmul.mubr.f32.gmra.mrb[0].mxu0 %v526
      %v1061 = vpop.f32.mrb[0].mxu0
      %v1062 = vadd.f32 0.0, %v1061
      %v1063 = vpop.f32.mrb[0].mxu0
      %1064 = vmatprep.mubr.f32.mxu0 0.0
      %1065 = vmatmul.mubr.f32.gmra.mrb[0].mxu0 %v529
      %v1066 = vpop.f32.mrb[0].mxu0
      %v1067 = vadd.f32 0.0, %v1066
      %v1068 = vpop.f32.mrb[0].mxu0
      %1069 = vmatprep.mubr.f32.mxu0 0.0
      %1070 = vmatmul.mubr.f32.gmra.mrb[0].mxu0 %v532
      %v1071 = vpop.f32.mrb[0].mxu0
      %v1072 = vadd.f32 0.0, %v1071
      %v1073 = vpop.f32.mrb[0].mxu0
      %1074 = vmatprep.mubr.f32.mxu0 0.0
      %1075 = vmatmul.mubr.f32.gmra.mrb[0].mxu0 %v535
      %v1076 = vpop.f32.mrb[0].mxu0
      %v1077 = vadd.f32 0.0, %v1076
      %v1078 = vpop.f32.mrb[0].mxu0
      %1079 = vmatprep.mubr.f32.mxu0 0.0
      %1080 = vmatmul.mubr.f32.gmra.mrb[0].mxu0 %v538
      %v1081 = vpop.f32.mrb[0].mxu0
      %v1082 = vadd.f32 0.0, %v1081
      %v1083 = vpop.f32.mrb[0].mxu0
      %1084 = vmatprep.mubr.f32.mxu0 0.0
      %1085 = vmatmul.mubr.f32.gmra.mrb[0].mxu0 %v541
      %v1086 = vpop.f32.mrb[0].mxu0
      %v1087 = vadd.f32 0.0, %v1086
      %v1088 = vpop.f32.mrb[0].mxu0
      %1089 = vmatprep.mubr.f32.mxu0 0.0
      %1090 = vmatmul.mubr.f32.gmra.mrb[0].mxu0 %v544
      %v1091 = vpop.f32.mrb[0].mxu0
      %v1092 = vadd.f32 0.0, %v1091
      %v1093 = vpop.f32.mrb[0].mxu0
      %1094 = vmatprep.mubr.f32.mxu0 0.0
      %1095 = vmatmul.mubr.f32.gmra.mrb[0].mxu0 %v547
      %v1096 = vpop.f32.mrb[0].mxu0
      %v1097 = vadd.f32 0.0, %v1096
      %v1098 = vpop.f32.mrb[0].mxu0
      %1099 = vmatprep.mubr.f32.mxu0 0.0
      %1100 = vmatmul.mubr.f32.gmra.mrb[0].mxu0 %v550
      %v1101 = vpop.f32.mrb[0].mxu0
      %v1102 = vadd.f32 0.0, %v1101
      %v1103 = vpop.f32.mrb[0].mxu0
      %1104 = vmatprep.mubr.f32.mxu0 0.0
      %1105 = vmatmul.mubr.f32.gmra.mrb[0].mxu0 %v553
      %v1106 = vpop.f32.mrb[0].mxu0
      %v1107 = vadd.f32 0.0, %v1106
      %v1108 = vpop.f32.mrb[0].mxu0
      %1109 = vmatprep.mubr.f32.mxu0 0.0
      %1110 = vmatmul.mubr.f32.gmra.mrb[0].mxu0 %v556
      %v1111 = vpop.f32.mrb[0].mxu0
      %v1112 = vadd.f32 0.0, %v1111
      %v1113 = vpop.f32.mrb[0].mxu0
      %1114 = vmatprep.mubr.f32.mxu0 0.0
      %1115 = vmatmul.mubr.f32.gmra.mrb[0].mxu0 %v559
      %v1116 = vpop.f32.mrb[0].mxu0
      %v1117 = vadd.f32 0.0, %v1116
      %v1118 = vpop.f32.mrb[0].mxu0
      %1119 = vmatprep.mubr.f32.mxu0 0.0
      %1120 = vmatmul.mubr.f32.gmra.mrb[0].mxu0 %v562
      %v1121 = vpop.f32.mrb[0].mxu0
      %v1122 = vadd.f32 0.0, %v1121
      %v1123 = vpop.f32.mrb[0].mxu0
      %1124 = vmatprep.mubr.f32.mxu0 0.0
      %1125 = vmatmul.mubr.f32.gmra.mrb[0].mxu0 %v565
      %v1126 = vpop.f32.mrb[0].mxu0
      %v1127 = vadd.f32 0.0, %v1126
      %v1128 = vpop.f32.mrb[0].mxu0
      %1129 = vmatprep.mubr.f32.mxu0 0.0
      %1130 = vmatmul.mubr.f32.gmra.mrb[0].mxu0 %v568
      %v1131 = vpop.f32.mrb[0].mxu0
      %v1132 = vadd.f32 0.0, %v1131
      %v1133 = vpop.f32.mrb[0].mxu0
      %1134 = vmatprep.mubr.f32.mxu0 0.0
      %1135 = vmatmul.mubr.f32.gmra.mrb[0].mxu0 %v571
      %v1136 = vpop.f32.mrb[0].mxu0
      %v1137 = vadd.f32 0.0, %v1136
      %v1138 = vpop.f32.mrb[0].mxu0
      %1139 = vmatprep.mubr.f32.mxu0 0.0
      %1140 = vmatmul.mubr.f32.gmra.mrb[0].mxu0 %v574
      %v1141 = vpop.f32.mrb[0].mxu0
      %v1142 = vadd.f32 0.0, %v1141
      %v1143 = vpop.f32.mrb[0].mxu0
      %1144 = vdwg.mxu0
      %v1145 = vmax.f32 %v647, %v772
      %v1146 = vmax.f32 %v652, %v777
      %v1147 = vmax.f32 %v657, %v782
      %v1148 = vmax.f32 %v662, %v787
      %v1149 = vmax.f32 %v667, %v792
      %v1150 = vmax.f32 %v672, %v797
      %v1151 = vmax.f32 %v677, %v802
      %v1152 = vmax.f32 %v682, %v807
      %v1153 = vmax.f32 %v687, %v812
      %v1154 = vmax.f32 %v692, %v817
      %v1155 = vmax.f32 %v697, %v822
      %v1156 = vmax.f32 %v702, %v827
      %v1157 = vmax.f32 %v707, %v832
      %v1158 = vmax.f32 %v712, %v837
      %v1159 = vmax.f32 %v717, %v842
      %v1160 = vmax.f32 %v722, %v847
      %v1161 = vmax.f32 %v727, %v852
      %v1162 = vmax.f32 %v732, %v857
      %v1163 = vmax.f32 %v737, %v862
      %v1164 = vmax.f32 %v742, %v867
      %v1165 = vmax.f32 %v747, %v872
      %v1166 = vmax.f32 %v752, %v877
      %v1167 = vmax.f32 %v757, %v882
      %v1168 = vmax.f32 %v762, %v887
      %v1169 = vmax.f32 %v767, %v892
      %v1170 = vmax.f32 %v897, %v1022
      %v1171 = vmax.f32 %v902, %v1027
      %v1172 = vmax.f32 %v907, %v1032
      %v1173 = vmax.f32 %v912, %v1037
      %v1174 = vmax.f32 %v917, %v1042
      %v1175 = vmax.f32 %v922, %v1047
      %v1176 = vmax.f32 %v927, %v1052
      %v1177 = vmax.f32 %v932, %v1057
      %v1178 = vmax.f32 %v937, %v1062
      %v1179 = vmax.f32 %v942, %v1067
      %v1180 = vmax.f32 %v947, %v1072
      %v1181 = vmax.f32 %v952, %v1077
      %v1182 = vmax.f32 %v957, %v1082
      %v1183 = vmax.f32 %v962, %v1087
      %v1184 = vmax.f32 %v967, %v1092
      %v1185 = vmax.f32 %v972, %v1097
      %v1186 = vmax.f32 %v977, %v1102
      %v1187 = vmax.f32 %v982, %v1107
      %v1188 = vmax.f32 %v987, %v1112
      %v1189 = vmax.f32 %v992, %v1117
      %v1190 = vmax.f32 %v997, %v1122
      %v1191 = vmax.f32 %v1002, %v1127
      %v1192 = vmax.f32 %v1007, %v1132
      %v1193 = vmax.f32 %v1012, %v1137
      %v1194 = vmax.f32 %v1017, %v1142
      %v1195 = vmax.f32 %v1145, %v1170
      %v1196 = vmax.f32 %v1146, %v1171
      %v1197 = vmax.f32 %v1147, %v1172
      %v1198 = vmax.f32 %v1148, %v1173
      %v1199 = vmax.f32 %v1149, %v1174
      %v1200 = vmax.f32 %v1150, %v1175
      %v1201 = vmax.f32 %v1151, %v1176
      %v1202 = vmax.f32 %v1152, %v1177
      %v1203 = vmax.f32 %v1153, %v1178
      %v1204 = vmax.f32 %v1154, %v1179
      %v1205 = vmax.f32 %v1155, %v1180
      %v1206 = vmax.f32 %v1156, %v1181
      %v1207 = vmax.f32 %v1157, %v1182
      %v1208 = vmax.f32 %v1158, %v1183
      %v1209 = vmax.f32 %v1159, %v1184
      %v1210 = vmax.f32 %v1160, %v1185
      %v1211 = vmax.f32 %v1161, %v1186
      %v1212 = vmax.f32 %v1162, %v1187
      %v1213 = vmax.f32 %v1163, %v1188
      %v1214 = vmax.f32 %v1164, %v1189
      %v1215 = vmax.f32 %v1165, %v1190
      %v1216 = vmax.f32 %v1166, %v1191
      %v1217 = vmax.f32 %v1167, %v1192
      %v1218 = vmax.f32 %v1168, %v1193
      %v1219 = vmax.f32 %v1169, %v1194
      %v1220 = vld [vmem:[%s2] sm:$0x1]
      %v1222 = vlaneseq
      %v1223 = vshrl.u32 %v1222, 7
      %v1224 = vsub.s32 0, %v1223
      %v1225 = vrot.slane %v1220, %v1224
      %v1227 = vadd.f32 %v1195, %v1225
      %v1228 = vadd.f32 %v1196, %v1225
      %v1229 = vadd.f32 %v1197, %v1225
      %v1230 = vadd.f32 %v1198, %v1225
      %v1231 = vadd.f32 %v1199, %v1225
      %v1232 = vadd.f32 %v1200, %v1225
      %v1233 = vadd.f32 %v1201, %v1225
      %v1234 = vadd.f32 %v1202, %v1225
      %v1235 = vadd.f32 %v1203, %v1225
      %v1236 = vadd.f32 %v1204, %v1225
      %v1237 = vadd.f32 %v1205, %v1225
      %v1238 = vadd.f32 %v1206, %v1225
      %v1239 = vadd.f32 %v1207, %v1225
      %v1240 = vadd.f32 %v1208, %v1225
      %v1241 = vadd.f32 %v1209, %v1225
      %v1242 = vadd.f32 %v1210, %v1225
      %v1243 = vadd.f32 %v1211, %v1225
      %v1244 = vadd.f32 %v1212, %v1225
      %v1245 = vadd.f32 %v1213, %v1225
      %v1246 = vadd.f32 %v1214, %v1225
      %v1247 = vadd.f32 %v1215, %v1225
      %v1248 = vadd.f32 %v1216, %v1225
      %v1249 = vadd.f32 %v1217, %v1225
      %v1250 = vadd.f32 %v1218, %v1225
      %v1251 = vadd.f32 %v1219, %v1225
      %v1252 = vmax.f32 %v1227, 0.0
      %v1253 = vmax.f32 %v1228, 0.0
      %v1254 = vmax.f32 %v1229, 0.0
      %v1255 = vmax.f32 %v1230, 0.0
      %v1256 = vmax.f32 %v1231, 0.0
      %v1257 = vmax.f32 %v1232, 0.0
      %v1258 = vmax.f32 %v1233, 0.0
      %v1259 = vmax.f32 %v1234, 0.0
      %v1260 = vmax.f32 %v1235, 0.0
      %v1261 = vmax.f32 %v1236, 0.0
      %v1262 = vmax.f32 %v1237, 0.0
      %v1263 = vmax.f32 %v1238, 0.0
      %v1264 = vmax.f32 %v1239, 0.0
      %v1265 = vmax.f32 %v1240, 0.0
      %v1266 = vmax.f32 %v1241, 0.0
      %v1267 = vmax.f32 %v1242, 0.0
      %v1268 = vmax.f32 %v1243, 0.0
      %v1269 = vmax.f32 %v1244, 0.0
      %v1270 = vmax.f32 %v1245, 0.0
      %v1271 = vmax.f32 %v1246, 0.0
      %v1272 = vmax.f32 %v1247, 0.0
      %v1273 = vmax.f32 %v1248, 0.0
      %v1274 = vmax.f32 %v1249, 0.0
      %v1275 = vmax.f32 %v1250, 0.0
      %v1276 = vmax.f32 %v1251, 0.0
      %vm1277 = vcmask 130048
      %1278 = vst.msk [vmem:[%s170] sm:$0xff] %vm1277, %v1252
      %1279 = vst.msk [vmem:[%s170 + $0x8] sm:$0xff] %vm1277, %v1253
      %1280 = vst.msk [vmem:[%s170 + $0x10] sm:$0xff] %vm1277, %v1254
      %1281 = vst.msk [vmem:[%s170 + $0x18] sm:$0xff] %vm1277, %v1255
      %1282 = vst.msk [vmem:[%s170 + $0x20] sm:$0xff] %vm1277, %v1256
      %1283 = vst.msk [vmem:[%s170 + $0x28] sm:$0xff] %vm1277, %v1257
      %1284 = vst.msk [vmem:[%s170 + $0x30] sm:$0xff] %vm1277, %v1258
      %1285 = vst.msk [vmem:[%s170 + $0x38] sm:$0xff] %vm1277, %v1259
      %1286 = vst.msk [vmem:[%s170 + $0x40] sm:$0xff] %vm1277, %v1260
      %1287 = vst.msk [vmem:[%s170 + $0x48] sm:$0xff] %vm1277, %v1261
      %1288 = vst.msk [vmem:[%s170 + $0x50] sm:$0xff] %vm1277, %v1262
      %1289 = vst.msk [vmem:[%s170 + $0x58] sm:$0xff] %vm1277, %v1263
      %1290 = vst.msk [vmem:[%s170 + $0x60] sm:$0xff] %vm1277, %v1264
      %1291 = vst.msk [vmem:[%s170 + $0x68] sm:$0xff] %vm1277, %v1265
      %1292 = vst.msk [vmem:[%s170 + $0x70] sm:$0xff] %vm1277, %v1266
      %1293 = vst.msk [vmem:[%s170 + $0x78] sm:$0xff] %vm1277, %v1267
      %1294 = vst.msk [vmem:[%s170 + $0x80] sm:$0xff] %vm1277, %v1268
      %1295 = vst.msk [vmem:[%s170 + $0x88] sm:$0xff] %vm1277, %v1269
      %1296 = vst.msk [vmem:[%s170 + $0x90] sm:$0xff] %vm1277, %v1270
      %1297 = vst.msk [vmem:[%s170 + $0x98] sm:$0xff] %vm1277, %v1271
      %1298 = vst.msk [vmem:[%s170 + $0xa0] sm:$0xff] %vm1277, %v1272
      %1299 = vst.msk [vmem:[%s170 + $0xa8] sm:$0xff] %vm1277, %v1273
      %1300 = vst.msk [vmem:[%s170 + $0xb0] sm:$0xff] %vm1277, %v1274
      %1301 = vst.msk [vmem:[%s170 + $0xb8] sm:$0xff] %vm1277, %v1275
      %1302 = vst.msk [vmem:[%s170 + $0xc0] sm:$0xff] %vm1277, %v1276
      %p1303 = scmp.lt.s32.totalorder %s14, 1
      %s1304 = scalar_select %p1303, %s14, 1
      %s1305 = smul.addr %s1304, 25
      %s1306 = smul.addr %s1305, 8
      %s1307 = scalar_lea.vmem %s3, %s1306
      // Predicated region
      $region33: #{cnn_forward.3} parent=31 // pred_check
        %p1308 = pneg %p100
      $region34: #{cnn_forward.3} parent=31 // pred_check_branch
        %1310 = sbr.rel (%p1308) target = $region36
      $region35: #{cnn_forward.3} parent=31 // pred_region
        _
      $region36: #{cnn_forward.3} parent=31 // pred_fallthru
        _
    $region32: #{cnn_forward.3} parent=5 // pred_fallthru
      _
    %p1311 = scmp.le.s32.totalorder 2, %s9
    // Predicated region
    $region37: #{cnn_forward.3} parent=5 // pred_check
      %p1312 = pneg %p1311
    $region38: #{cnn_forward.3} parent=5 // pred_check_branch
      %1314 = sbr.rel (%p1312) target = $region40
    $region39: #{cnn_forward.3} parent=5 // pred_region
      %s1315 = ssub.s32 %s9, 2
      // Predicated region
      $region41: #{cnn_forward.3} parent=39 // pred_check
        %p1316 = pneg %p106
      $region42: #{cnn_forward.3} parent=39 // pred_check_branch
        %1318 = sbr.rel (%p1316) target = $region44
      $region43: #{cnn_forward.3} parent=39 // pred_region
        %p1319 = scmp.lt.s32.totalorder %s15, 1
        %s1320 = scalar_select %p1319, %s15, 1
        %s1321 = smul.addr %s1320, 25
        %s1322 = smul.addr %s1321, 8
        %s1323 = scalar_lea.vmem %s3, %s1322
      $region44: #{cnn_forward.3} parent=39 // pred_fallthru
        _
    $region40: #{cnn_forward.3} parent=5 // pred_fallthru
      _
  $region6: #{cnn_forward.3} parent=0 // loop_footer
    %s13 = sadd.s32 1, %s9
  $region7: #{cnn_forward.3} parent=0 // loop_footer_branch
    %8 = sbr.rel target = $region3
  $region8: #{cnn_forward.3} parent=0 // loop_exit
    _

// kernel: cnn_forward.4
$region0: #{cnn_forward.4}
  #allocation0 [shape = 'u32[]', space=smem, size = 0x4, offset = 0x4, fixed_abs, tag = 'smem constant byte address 0x4 - core index']
  #allocation1 [shape = 'u32[144,128]{1,0:T(1,128)}', space=vmem, size = 0x12000, scoped, tag = 'internal scratch']
  %s0 = inlined_call_operand.vmem [shape: f32[2,224,400], index: 0, kind: input, shape index: {}]
  %s1 = inlined_call_operand.vmem [shape: f32[400,32], index: 1, kind: input, shape index: {}]
  %s2 = inlined_call_operand.vmem [shape: f32[1,32], index: 2, kind: input, shape index: {}]
  %s3 = inlined_call_operand.vmem [shape: f32[2,56,32], index: 3, kind: output, shape index: {}]
  %s4 = sld [smem:[#allocation0]]
  $region45: #{cnn_forward.4} parent=0
    _
  %s6 = ssub.s32 1, %s4
  %s7 = scalar_select 0, %s6, %s4
  loop: start=0, step=1, limit=4
  $region2: #{cnn_forward.4} parent=0 // loop_pre_header
    _
  $region3: #{cnn_forward.4} parent=0 // loop_header
    %s9 = sphi 0, %s13
    %p10 = scmp.ge.s32.totalorder %s9, 4
    %s19 = sphi 0, %s21
    %s22 = sphi 0, %s19
    %s23 = sphi 0, %s22
    %s39 = sphi 0, %s23
    %s43 = sphi 0, %s43
    %s45 = sphi 0, %s43
    %s46 = sphi 0, %s45
    %s60 = sphi 0, %s46
    %s64 = sphi 0, %s64
    %s66 = sphi 0, %s64
    %s67 = sphi 0, %s66
    %s81 = sphi 0, %s67
    %s87 = sphi 0, %s89
    %s90 = sphi 0, %s87
    %s91 = sphi 0, %s90
    %s107 = sphi 0, %s91
  $region4: #{cnn_forward.4} parent=0 // loop_header_branch
    %12 = sbr.rel (%p10) target = $region8
  $region5: #{cnn_forward.4} parent=0 // loop_body
    %s14 = ssub.s32 %s9, 1
    %s15 = ssub.s32 %s9, 2
    %s16 = sadd.s32 %s9, 1
    %s17 = ssub.s32 %s9, %s16
    %p18 = scmp.eq.s32.totalorder %s17, 0
    %s20 = sadd.s32 %s19, 1
    %s21 = scalar_select %p18, %s19, %s20
    %p24 = pneg %p18
    %p25 = scmp.eq.s32.totalorder %s9, 1
    %p26 = por %p24, %p25
    %p27 = scmp.ne.s32.totalorder %s19, %s22
    %p28 = scmp.eq.s32.totalorder %s9, 0
    %p29 = por %p27, %p28
    %p30 = scmp.ne.s32.totalorder %s19, %s22
    %p31 = scmp.eq.s32.totalorder %s14, 1
    %p32 = por %p30, %p31
    %p33 = scmp.ne.s32.totalorder %s22, %s23
    %p34 = scmp.eq.s32.totalorder %s14, 0
    %p35 = por %p33, %p34
    %p36 = scmp.ne.s32.totalorder %s22, %s23
    %p37 = scmp.eq.s32.totalorder %s15, 1
    %p38 = por %p36, %p37
    %p40 = scmp.ne.s32.totalorder %s23, %s39
    %p41 = scmp.eq.s32.totalorder %s15, 0
    %p42 = por %p40, %p41
    %s44 = sadd.s32 %s43, 1
    %p47 = scmp.eq.s32.totalorder %s9, 1
    %p48 = scmp.ne.s32.totalorder %s43, %s45
    %p49 = scmp.eq.s32.totalorder %s9, 0
    %p50 = por %p48, %p49
    %p51 = scmp.ne.s32.totalorder %s43, %s45
    %p52 = scmp.eq.s32.totalorder %s14, 1
    %p53 = por %p51, %p52
    %p54 = scmp.ne.s32.totalorder %s45, %s46
    %p55 = scmp.eq.s32.totalorder %s14, 0
    %p56 = por %p54, %p55
    %p57 = scmp.ne.s32.totalorder %s45, %s46
    %p58 = scmp.eq.s32.totalorder %s15, 1
    %p59 = por %p57, %p58
    %p61 = scmp.ne.s32.totalorder %s46, %s60
    %p62 = scmp.eq.s32.totalorder %s15, 0
    %p63 = por %p61, %p62
    %s65 = sadd.s32 %s64, 1
    %p68 = scmp.eq.s32.totalorder %s9, 1
    %p69 = scmp.ne.s32.totalorder %s64, %s66
    %p70 = scmp.eq.s32.totalorder %s9, 0
    %p71 = por %p69, %p70
    %p72 = scmp.ne.s32.totalorder %s64, %s66
    %p73 = scmp.eq.s32.totalorder %s14, 1
    %p74 = por %p72, %p73
    %p75 = scmp.ne.s32.totalorder %s66, %s67
    %p76 = scmp.eq.s32.totalorder %s14, 0
    %p77 = por %p75, %p76
    %p78 = scmp.ne.s32.totalorder %s66, %s67
    %p79 = scmp.eq.s32.totalorder %s15, 1
    %p80 = por %p78, %p79
    %p82 = scmp.ne.s32.totalorder %s67, %s81
    %p83 = scmp.eq.s32.totalorder %s15, 0
    %p84 = por %p82, %p83
    %s85 = ssub.s32 %s9, %s16
    %p86 = scmp.eq.s32.totalorder %s85, 0
    %s88 = sadd.s32 %s87, 1
    %s89 = scalar_select %p86, %s87, %s88
    %p92 = pneg %p86
    %p93 = scmp.eq.s32.totalorder %s9, 1
    %p94 = por %p92, %p93
    %p95 = scmp.ne.s32.totalorder %s87, %s90
    %p96 = scmp.eq.s32.totalorder %s9, 0
    %p97 = por %p95, %p96
    %p98 = scmp.ne.s32.totalorder %s87, %s90
    %p99 = scmp.eq.s32.totalorder %s14, 1
    %p100 = por %p98, %p99
    %p101 = scmp.ne.s32.totalorder %s90, %s91
    %p102 = scmp.eq.s32.totalorder %s14, 0
    %p103 = por %p101, %p102
    %p104 = scmp.ne.s32.totalorder %s90, %s91
    %p105 = scmp.eq.s32.totalorder %s15, 1
    %p106 = por %p104, %p105
    %p108 = scmp.ne.s32.totalorder %s91, %s107
    %p109 = scmp.eq.s32.totalorder %s15, 0
    %p110 = por %p108, %p109
    %p111 = scmp.le.s32.totalorder 1, %s9
    %p112 = scmp.lt.s32.totalorder %s9, 3
    %p113 = pnand %p111, %p112
    %p114 = pneg %p113
    // Predicated region
    $region9: #{cnn_forward.4} parent=5 // pred_check
      _
    $region10: #{cnn_forward.4} parent=5 // pred_check_branch
      %116 = sbr.rel (%p113) target = $region12
    $region11: #{cnn_forward.4} parent=5 // pred_region
      %s117 = ssub.s32 %s9, 1
      // Predicated region
      $region13: #{cnn_forward.4} parent=11 // pred_check
        %p118 = pneg %p56
      $region14: #{cnn_forward.4} parent=11 // pred_check_branch
        %120 = sbr.rel (%p118) target = $region16
      $region15: #{cnn_forward.4} parent=11 // pred_region
        _
      $region16: #{cnn_forward.4} parent=11 // pred_fallthru
        _
      // Predicated region
      $region17: #{cnn_forward.4} parent=11 // pred_check
        %p121 = pneg %p77
      $region18: #{cnn_forward.4} parent=11 // pred_check_branch
        %123 = sbr.rel (%p121) target = $region20
      $region19: #{cnn_forward.4} parent=11 // pred_region
        _
      $region20: #{cnn_forward.4} parent=11 // pred_fallthru
        _
    $region12: #{cnn_forward.4} parent=5 // pred_fallthru
      _
    %p124 = scmp.lt.s32.totalorder %s9, 2
    // Predicated region
    $region21: #{cnn_forward.4} parent=5 // pred_check
      %p125 = pneg %p124
    $region22: #{cnn_forward.4} parent=5 // pred_check_branch
      %127 = sbr.rel (%p125) target = $region24
    $region23: #{cnn_forward.4} parent=5 // pred_region
      // Predicated region
      $region25: #{cnn_forward.4} parent=23 // pred_check
        %p128 = pneg %p29
      $region26: #{cnn_forward.4} parent=23 // pred_check_branch
        %130 = sbr.rel (%p128) target = $region28
      $region27: #{cnn_forward.4} parent=23 // pred_region
        %p131 = scmp.lt.s32.totalorder %s9, 1
        %s132 = scalar_select %p131, %s9, 1
        %s133 = smul.addr %s132, 112
        %s134 = smul.addr %s133, 8
        %s135 = scalar_lea.vmem %s0, %s134
      $region28: #{cnn_forward.4} parent=23 // pred_fallthru
        _
    $region24: #{cnn_forward.4} parent=5 // pred_fallthru
      _
    %p136 = scmp.le.s32.totalorder 1, %s9
    %p137 = scmp.lt.s32.totalorder %s9, 3
    %p138 = pnand %p136, %p137
    %p139 = pneg %p138
    // Predicated region
    $region29: #{cnn_forward.4} parent=5 // pred_check
      _
    $region30: #{cnn_forward.4} parent=5 // pred_check_branch
      %141 = sbr.rel (%p138) target = $region32
    $region31: #{cnn_forward.4} parent=5 // pred_region
      %s142 = ssub.s32 %s9, 1
      %p143 = scmp.lt.s32.totalorder %s14, 1
      %s144 = scalar_select %p143, %s14, 1
      %s145 = smul.addr %s144, 112
      %s146 = smul.addr %s145, 8
      %s147 = scalar_lea.vmem %s0, %s146
      %p148 = pneg %p35
      %p149 = pneg %p32
      %p150 = pneg %p56
      %p151 = pneg %p53
      %p152 = pneg %p77
      %p153 = pneg %p74
      %p154 = pneg %p103
      %p155 = pneg %p100
      %p156 = scmp.lt.s32.totalorder %s14, 1
      %s157 = scalar_select %p156, %s14, 1
      %s158 = smul.addr %s157, 7
      %s159 = smul.addr %s158, 8
      %s160 = scalar_lea.vmem %s3, %s159
      %p161 = scmp.lt.s32.totalorder %s14, 1
      %s162 = scalar_select %p161, %s14, 1
      %s163 = smul.addr %s162, 112
      %s164 = smul.addr %s163, 8
      %s165 = scalar_lea.vmem %s0, %s164
      %p166 = scmp.lt.s32.totalorder %s14, 1
      %s167 = scalar_select %p166, %s14, 1
      %s168 = smul.addr %s167, 7
      %s169 = smul.addr %s168, 8
      %s170 = scalar_lea.vmem %s3, %s169
      %v171 = vld [vmem:[%s165] sm:$0xff]
      %v172 = vld [vmem:[%s165 + $0x8] sm:$0xff]
      %v173 = vld [vmem:[%s165 + $0x10] sm:$0xff]
      %v174 = vld [vmem:[%s165 + $0x18] sm:$0xff]
      %v175 = vld [vmem:[%s165 + $0x20] sm:$0xff]
      %v176 = vld [vmem:[%s165 + $0x28] sm:$0xff]
      %v177 = vld [vmem:[%s165 + $0x30] sm:$0xff]
      %v178 = vld [vmem:[%s165 + $0x38] sm:$0xff]
      %v179 = vld [vmem:[%s165 + $0x40] sm:$0xff]
      %v180 = vld [vmem:[%s165 + $0x48] sm:$0xff]
      %v181 = vld [vmem:[%s165 + $0x50] sm:$0xff]
      %v182 = vld [vmem:[%s165 + $0x58] sm:$0xff]
      %v183 = vld [vmem:[%s165 + $0x60] sm:$0xff]
      %v184 = vld [vmem:[%s165 + $0x68] sm:$0xff]
      %v185 = vld [vmem:[%s165 + $0x70] sm:$0xff]
      %v186 = vld [vmem:[%s165 + $0x78] sm:$0xff]
      %v187 = vld [vmem:[%s165 + $0x80] sm:$0xff]
      %v188 = vld [vmem:[%s165 + $0x88] sm:$0xff]
      %v189 = vld [vmem:[%s165 + $0x90] sm:$0xff]
      %v190 = vld [vmem:[%s165 + $0x98] sm:$0xff]
      %v191 = vld [vmem:[%s165 + $0xa0] sm:$0xff]
      %v192 = vld [vmem:[%s165 + $0xa8] sm:$0xff]
      %v193 = vld [vmem:[%s165 + $0xb0] sm:$0xff]
      %v194 = vld [vmem:[%s165 + $0xb8] sm:$0xff]
      %v195 = vld [vmem:[%s165 + $0xc0] sm:$0xff]
      %v196 = vld [vmem:[%s165 + $0xc8] sm:$0xff]
      %v197 = vld [vmem:[%s165 + $0xd0] sm:$0xff]
      %v198 = vld [vmem:[%s165 + $0xd8] sm:$0xff]
      %v199 = vld [vmem:[%s165 + $0xe0] sm:$0xff]
      %v200 = vld [vmem:[%s165 + $0xe8] sm:$0xff]
      %v201 = vld [vmem:[%s165 + $0xf0] sm:$0xff]
      %v202 = vld [vmem:[%s165 + $0xf8] sm:$0xff]
      %v203 = vld [vmem:[%s165 + $0x100] sm:$0xff]
      %v204 = vld [vmem:[%s165 + $0x108] sm:$0xff]
      %v205 = vld [vmem:[%s165 + $0x110] sm:$0xff]
      %v206 = vld [vmem:[%s165 + $0x118] sm:$0xff]
      %v207 = vld [vmem:[%s165 + $0x120] sm:$0xff]
      %v208 = vld [vmem:[%s165 + $0x128] sm:$0xff]
      %v209 = vld [vmem:[%s165 + $0x130] sm:$0xff]
      %v210 = vld [vmem:[%s165 + $0x138] sm:$0xff]
      %v211 = vld [vmem:[%s165 + $0x140] sm:$0xff]
      %v212 = vld [vmem:[%s165 + $0x148] sm:$0xff]
      %v213 = vld [vmem:[%s165 + $0x150] sm:$0xff]
      %v214 = vld [vmem:[%s165 + $0x158] sm:$0xff]
      %v215 = vld [vmem:[%s165 + $0x160] sm:$0xff]
      %v216 = vld [vmem:[%s165 + $0x168] sm:$0xff]
      %v217 = vld [vmem:[%s165 + $0x170] sm:$0xff]
      %v218 = vld [vmem:[%s165 + $0x178] sm:$0xff]
      %v219 = vld [vmem:[%s165 + $0x180] sm:$0xff]
      %v220 = vld [vmem:[%s165 + $0x188] sm:$0xff]
      %v221 = vld [vmem:[%s165 + $0x190] sm:$0xff]
      %v222 = vld [vmem:[%s165 + $0x198] sm:$0xff]
      %v223 = vld [vmem:[%s165 + $0x1a0] sm:$0xff]
      %v224 = vld [vmem:[%s165 + $0x1a8] sm:$0xff]
      %v225 = vld [vmem:[%s165 + $0x1b0] sm:$0xff]
      %v226 = vld [vmem:[%s165 + $0x1b8] sm:$0xff]
      %v227 = vld [vmem:[%s165 + $0x1c0] sm:$0xff]
      %v228 = vld [vmem:[%s165 + $0x1c8] sm:$0xff]
      %v229 = vld [vmem:[%s165 + $0x1d0] sm:$0xff]
      %v230 = vld [vmem:[%s165 + $0x1d8] sm:$0xff]
      %v231 = vld [vmem:[%s165 + $0x1e0] sm:$0xff]
      %v232 = vld [vmem:[%s165 + $0x1e8] sm:$0xff]
      %v233 = vld [vmem:[%s165 + $0x1f0] sm:$0xff]
      %v234 = vld [vmem:[%s165 + $0x1f8] sm:$0xff]
      %v235 = vld [vmem:[%s165 + $0x200] sm:$0xff]
      %v236 = vld [vmem:[%s165 + $0x208] sm:$0xff]
      %v237 = vld [vmem:[%s165 + $0x210] sm:$0xff]
      %v238 = vld [vmem:[%s165 + $0x218] sm:$0xff]
      %v239 = vld [vmem:[%s165 + $0x220] sm:$0xff]
      %v240 = vld [vmem:[%s165 + $0x228] sm:$0xff]
      %v241 = vld [vmem:[%s165 + $0x230] sm:$0xff]
      %v242 = vld [vmem:[%s165 + $0x238] sm:$0xff]
      %v243 = vld [vmem:[%s165 + $0x240] sm:$0xff]
      %v244 = vld [vmem:[%s165 + $0x248] sm:$0xff]
      %v245 = vld [vmem:[%s165 + $0x250] sm:$0xff]
      %v246 = vld [vmem:[%s165 + $0x258] sm:$0xff]
      %v247 = vld [vmem:[%s165 + $0x260] sm:$0xff]
      %v248 = vld [vmem:[%s165 + $0x268] sm:$0xff]
      %v249 = vld [vmem:[%s165 + $0x270] sm:$0xff]
      %v250 = vld [vmem:[%s165 + $0x278] sm:$0xff]
      %v251 = vld [vmem:[%s165 + $0x280] sm:$0xff]
      %v252 = vld [vmem:[%s165 + $0x288] sm:$0xff]
      %v253 = vld [vmem:[%s165 + $0x290] sm:$0xff]
      %v254 = vld [vmem:[%s165 + $0x298] sm:$0xff]
      %v255 = vld [vmem:[%s165 + $0x2a0] sm:$0xff]
      %v256 = vld [vmem:[%s165 + $0x2a8] sm:$0xff]
      %v257 = vld [vmem:[%s165 + $0x2b0] sm:$0xff]
      %v258 = vld [vmem:[%s165 + $0x2b8] sm:$0xff]
      %v259 = vld [vmem:[%s165 + $0x2c0] sm:$0xff]
      %v260 = vld [vmem:[%s165 + $0x2c8] sm:$0xff]
      %v261 = vld [vmem:[%s165 + $0x2d0] sm:$0xff]
      %v262 = vld [vmem:[%s165 + $0x2d8] sm:$0xff]
      %v263 = vld [vmem:[%s165 + $0x2e0] sm:$0xff]
      %v264 = vld [vmem:[%s165 + $0x2e8] sm:$0xff]
      %v265 = vld [vmem:[%s165 + $0x2f0] sm:$0xff]
      %v266 = vld [vmem:[%s165 + $0x2f8] sm:$0xff]
      %v267 = vld [vmem:[%s165 + $0x300] sm:$0xff]
      %v268 = vld [vmem:[%s165 + $0x308] sm:$0xff]
      %v269 = vld [vmem:[%s165 + $0x310] sm:$0xff]
      %v270 = vld [vmem:[%s165 + $0x318] sm:$0xff]
      %v271 = vld [vmem:[%s165 + $0x320] sm:$0xff]
      %v272 = vld [vmem:[%s165 + $0x328] sm:$0xff]
      %v273 = vld [vmem:[%s165 + $0x330] sm:$0xff]
      %v274 = vld [vmem:[%s165 + $0x338] sm:$0xff]
      %v275 = vld [vmem:[%s165 + $0x340] sm:$0xff]
      %v276 = vld [vmem:[%s165 + $0x348] sm:$0xff]
      %v277 = vld [vmem:[%s165 + $0x350] sm:$0xff]
      %v278 = vld [vmem:[%s165 + $0x358] sm:$0xff]
      %v279 = vld [vmem:[%s165 + $0x360] sm:$0xff]
      %v280 = vld [vmem:[%s165 + $0x368] sm:$0xff]
      %v281 = vld [vmem:[%s165 + $0x370] sm:$0xff]
      %v282 = vld [vmem:[%s165 + $0x378] sm:$0xff]
      %v283 = vld [vmem:[%s1] sm:$0xff]
      %v284 = vld [vmem:[%s1 + $0x8] sm:$0xff]
      %v285 = vld [vmem:[%s1 + $0x10] sm:$0xff]
      %v286 = vld [vmem:[%s1 + $0x18] sm:$0xff]
      %v287 = vld [vmem:[%s1 + $0x20] sm:$0xff]
      %v288 = vld [vmem:[%s1 + $0x28] sm:$0xff]
      %v289 = vld [vmem:[%s1 + $0x30] sm:$0xff]
      %v290 = vld [vmem:[%s1 + $0x38] sm:$0xff]
      %v291 = vld [vmem:[%s1 + $0x40] sm:$0xff]
      %v292 = vld [vmem:[%s1 + $0x48] sm:$0xff]
      %v293 = vld [vmem:[%s1 + $0x50] sm:$0xff]
      %v294 = vld [vmem:[%s1 + $0x58] sm:$0xff]
      %v295 = vld [vmem:[%s1 + $0x60] sm:$0xff]
      %v296 = vld [vmem:[%s1 + $0x68] sm:$0xff]
      %v297 = vld [vmem:[%s1 + $0x70] sm:$0xff]
      %v298 = vld [vmem:[%s1 + $0x78] sm:$0xff]
      %v299 = vld [vmem:[%s1 + $0x80] sm:$0xff]
      %v300 = vld [vmem:[%s1 + $0x88] sm:$0xff]
      %v301 = vld [vmem:[%s1 + $0x90] sm:$0xff]
      %v302 = vld [vmem:[%s1 + $0x98] sm:$0xff]
      %v303 = vld [vmem:[%s1 + $0xa0] sm:$0xff]
      %v304 = vld [vmem:[%s1 + $0xa8] sm:$0xff]
      %v305 = vld [vmem:[%s1 + $0xb0] sm:$0xff]
      %v306 = vld [vmem:[%s1 + $0xb8] sm:$0xff]
      %v307 = vld [vmem:[%s1 + $0xc0] sm:$0xff]
      %v308 = vld [vmem:[%s1 + $0xc8] sm:$0xff]
      %v309 = vld [vmem:[%s1 + $0xd0] sm:$0xff]
      %v310 = vld [vmem:[%s1 + $0xd8] sm:$0xff]
      %v311 = vld [vmem:[%s1 + $0xe0] sm:$0xff]
      %v312 = vld [vmem:[%s1 + $0xe8] sm:$0xff]
      %v313 = vld [vmem:[%s1 + $0xf0] sm:$0xff]
      %v314 = vld [vmem:[%s1 + $0xf8] sm:$0xff]
      %v315 = vld [vmem:[%s1 + $0x100] sm:$0xff]
      %v316 = vld [vmem:[%s1 + $0x108] sm:$0xff]
      %v317 = vld [vmem:[%s1 + $0x110] sm:$0xff]
      %v318 = vld [vmem:[%s1 + $0x118] sm:$0xff]
      %v319 = vld [vmem:[%s1 + $0x120] sm:$0xff]
      %v320 = vld [vmem:[%s1 + $0x128] sm:$0xff]
      %v321 = vld [vmem:[%s1 + $0x130] sm:$0xff]
      %v322 = vld [vmem:[%s1 + $0x138] sm:$0xff]
      %v323 = vld [vmem:[%s1 + $0x140] sm:$0xff]
      %v324 = vld [vmem:[%s1 + $0x148] sm:$0xff]
      %v325 = vld [vmem:[%s1 + $0x150] sm:$0xff]
      %v326 = vld [vmem:[%s1 + $0x158] sm:$0xff]
      %v327 = vld [vmem:[%s1 + $0x160] sm:$0xff]
      %v328 = vld [vmem:[%s1 + $0x168] sm:$0xff]
      %v329 = vld [vmem:[%s1 + $0x170] sm:$0xff]
      %v330 = vld [vmem:[%s1 + $0x178] sm:$0xff]
      %v331 = vld [vmem:[%s1 + $0x180] sm:$0xff]
      %v332 = vld [vmem:[%s1 + $0x188] sm:$0xff]
      %vm333 = vcmask 130048
      %v335 = vsel %vm333, %v174, 0
      %v338 = vsel %vm333, %v178, 0
      %v341 = vsel %vm333, %v182, 0
      %v344 = vsel %vm333, %v186, 0
      %v347 = vsel %vm333, %v190, 0
      %v350 = vsel %vm333, %v194, 0
      %v353 = vsel %vm333, %v198, 0
      %v356 = vsel %vm333, %v202, 0
      %v359 = vsel %vm333, %v206, 0
      %v362 = vsel %vm333, %v210, 0
      %v365 = vsel %vm333, %v214, 0
      %v368 = vsel %vm333, %v218, 0
      %v371 = vsel %vm333, %v222, 0
      %v374 = vsel %vm333, %v226, 0
      %v377 = vsel %vm333, %v230, 0
      %v380 = vsel %vm333, %v234, 0
      %v383 = vsel %vm333, %v238, 0
      %v386 = vsel %vm333, %v242, 0
      %v389 = vsel %vm333, %v246, 0
      %v392 = vsel %vm333, %v250, 0
      %v395 = vsel %vm333, %v254, 0
      %v398 = vsel %vm333, %v258, 0
      %v401 = vsel %vm333, %v262, 0
      %v404 = vsel %vm333, %v266, 0
      %v407 = vsel %vm333, %v270, 0
      %v410 = vsel %vm333, %v274, 0
      %v413 = vsel %vm333, %v278, 0
      %v416 = vsel %vm333, %v282, 0
      %418 = vmatprep.subr.mxu0 0.0
      %419 = vmatpush1.msra.mxu0 %v283
      %420 = vmatprep.subr.mxu0 0.0
      %421 = vmatpush1.msra.mxu0 %v284
      %422 = vmatprep.subr.mxu0 0.0
      %423 = vmatpush1.msra.mxu0 %v285
      %424 = vmatprep.subr.mxu0 0.0
      %425 = vmatpush1.msra.mxu0 %v286
      %426 = vmatprep.subr.mxu0 0.0
      %427 = vmatpush1.msra.mxu0 %v287
      %428 = vmatprep.subr.mxu0 0.0
      %429 = vmatpush1.msra.mxu0 %v288
      %430 = vmatprep.subr.mxu0 0.0
      %431 = vmatpush1.msra.mxu0 %v289
      %432 = vmatprep.subr.mxu0 0.0
      %433 = vmatpush1.msra.mxu0 %v290
      %434 = vmatprep.subr.mxu0 0.0
      %435 = vmatpush1.msra.mxu0 %v291
      %436 = vmatprep.subr.mxu0 0.0
      %437 = vmatpush1.msra.mxu0 %v292
      %438 = vmatprep.subr.mxu0 0.0
      %439 = vmatpush1.msra.mxu0 %v293
      %440 = vmatprep.subr.mxu0 0.0
      %441 = vmatpush1.msra.mxu0 %v294
      %442 = vmatprep.subr.mxu0 0.0
      %443 = vmatpush1.msra.mxu0 %v295
      %444 = vmatprep.subr.mxu0 0.0
      %445 = vmatpush1.msra.mxu0 %v296
      %446 = vmatprep.subr.mxu0 0.0
      %447 = vmatpush1.msra.mxu0 %v297
      %448 = vmatprep.subr.mxu0 0.0
      %449 = vmatpush1.msra.mxu0 %v298
      %450 = vmatprep.subr.mxu0 0.0
      %451 = vmatpush1.msra.mxu0 %v299
      %452 = vmatprep.subr.mxu0 0.0
      %453 = vmatpush1.msra.mxu0 %v300
      %454 = vmatprep.subr.mxu0 0.0
      %455 = vmatpush1.msra.mxu0 %v301
      %456 = vmatprep.subr.mxu0 0.0
      %457 = vmatpush1.msra.mxu0 %v302
      %458 = vmatprep.subr.mxu0 0.0
      %459 = vmatpush1.msra.mxu0 %v303
      %460 = vmatprep.subr.mxu0 0.0
      %461 = vmatpush1.msra.mxu0 %v304
      %462 = vmatprep.subr.mxu0 0.0
      %463 = vmatpush1.msra.mxu0 %v305
      %464 = vmatprep.subr.mxu0 0.0
      %465 = vmatpush1.msra.mxu0 %v306
      %466 = vmatprep.subr.mxu0 0.0
      %467 = vmatpush1.msra.mxu0 %v307
      %468 = vmatprep.subr.mxu0 0.0
      %469 = vmatpush1.msra.mxu0 %v308
      %470 = vmatprep.subr.mxu0 0.0
      %471 = vmatpush1.msra.mxu0 %v309
      %472 = vmatprep.subr.mxu0 0.0
      %473 = vmatpush1.msra.mxu0 %v310
      %474 = vmatprep.subr.mxu0 0.0
      %475 = vmatpush1.msra.mxu0 %v311
      %476 = vmatprep.subr.mxu0 0.0
      %477 = vmatpush1.msra.mxu0 %v312
      %478 = vmatprep.subr.mxu0 0.0
      %479 = vmatpush1.msra.mxu0 %v313
      %480 = vmatprep.subr.mxu0 0.0
      %481 = vmatpush1.msra.mxu0 %v314
      %482 = vmatprep.mubr.f32.mxu0 %v172
      %483 = vmatmul.mubr.f32.gmra.mrb[0].mxu0 %v171
      %v484 = vpop.f32.mrb[0].mxu0
      %v485 = vadd.f32 0.0, %v484
      %v486 = vpop.f32.mrb[0].mxu0
      %487 = vmatprep.mubr.f32.mxu0 %v176
      %488 = vmatmul.mubr.f32.gmra.mrb[0].mxu0 %v175
      %v489 = vpop.f32.mrb[0].mxu0
      %v490 = vadd.f32 0.0, %v489
      %v491 = vpop.f32.mrb[0].mxu0
      %492 = vmatprep.mubr.f32.mxu0 %v180
      %493 = vmatmul.mubr.f32.gmra.mrb[0].mxu0 %v179
      %v494 = vpop.f32.mrb[0].mxu0
      %v495 = vadd.f32 0.0, %v494
      %v496 = vpop.f32.mrb[0].mxu0
      %497 = vmatprep.mubr.f32.mxu0 %v184
      %498 = vmatmul.mubr.f32.gmra.mrb[0].mxu0 %v183
      %v499 = vpop.f32.mrb[0].mxu0
      %v500 = vadd.f32 0.0, %v499
      %v501 = vpop.f32.mrb[0].mxu0
      %502 = vmatprep.mubr.f32.mxu0 %v188
      %503 = vmatmul.mubr.f32.gmra.mrb[0].mxu0 %v187
      %v504 = vpop.f32.mrb[0].mxu0
      %v505 = vadd.f32 0.0, %v504
      %v506 = vpop.f32.mrb[0].mxu0
      %507 = vmatprep.mubr.f32.mxu0 %v192
      %508 = vmatmul.mubr.f32.gmra.mrb[0].mxu0 %v191
      %v509 = vpop.f32.mrb[0].mxu0
      %v510 = vadd.f32 0.0, %v509
      %v511 = vpop.f32.mrb[0].mxu0
      %512 = vmatprep.mubr.f32.mxu0 %v196
      %513 = vmatmul.mubr.f32.gmra.mrb[0].mxu0 %v195
      %v514 = vpop.f32.mrb[0].mxu0
      %v515 = vadd.f32 0.0, %v514
      %v516 = vpop.f32.mrb[0].mxu0
      %517 = vmatprep.mubr.f32.mxu0 %v200
      %518 = vmatmul.mubr.f32.gmra.mrb[0].mxu0 %v199
      %v519 = vpop.f32.mrb[0].mxu0
      %v520 = vadd.f32 0.0, %v519
      %v521 = vpop.f32.mrb[0].mxu0
      %522 = vmatprep.mubr.f32.mxu0 %v204
      %523 = vmatmul.mubr.f32.gmra.mrb[0].mxu0 %v203
      %v524 = vpop.f32.mrb[0].mxu0
      %v525 = vadd.f32 0.0, %v524
      %v526 = vpop.f32.mrb[0].mxu0
      %527 = vmatprep.mubr.f32.mxu0 %v208
      %528 = vmatmul.mubr.f32.gmra.mrb[0].mxu0 %v207
      %v529 = vpop.f32.mrb[0].mxu0
      %v530 = vadd.f32 0.0, %v529
      %v531 = vpop.f32.mrb[0].mxu0
      %532 = vmatprep.mubr.f32.mxu0 %v212
      %533 = vmatmul.mubr.f32.gmra.mrb[0].mxu0 %v211
      %v534 = vpop.f32.mrb[0].mxu0
      %v535 = vadd.f32 0.0, %v534
      %v536 = vpop.f32.mrb[0].mxu0
      %537 = vmatprep.mubr.f32.mxu0 %v216
      %538 = vmatmul.mubr.f32.gmra.mrb[0].mxu0 %v215
      %v539 = vpop.f32.mrb[0].mxu0
      %v540 = vadd.f32 0.0, %v539
      %v541 = vpop.f32.mrb[0].mxu0
      %542 = vmatprep.mubr.f32.mxu0 %v220
      %543 = vmatmul.mubr.f32.gmra.mrb[0].mxu0 %v219
      %v544 = vpop.f32.mrb[0].mxu0
      %v545 = vadd.f32 0.0, %v544
      %v546 = vpop.f32.mrb[0].mxu0
      %547 = vmatprep.mubr.f32.mxu0 %v224
      %548 = vmatmul.mubr.f32.gmra.mrb[0].mxu0 %v223
      %v549 = vpop.f32.mrb[0].mxu0
      %v550 = vadd.f32 0.0, %v549
      %v551 = vpop.f32.mrb[0].mxu0
      %552 = vmatprep.mubr.f32.mxu0 %v228
      %553 = vmatmul.mubr.f32.gmra.mrb[0].mxu0 %v227
      %v554 = vpop.f32.mrb[0].mxu0
      %v555 = vadd.f32 0.0, %v554
      %v556 = vpop.f32.mrb[0].mxu0
      %557 = vmatprep.mubr.f32.mxu0 %v232
      %558 = vmatmul.mubr.f32.gmra.mrb[0].mxu0 %v231
      %v559 = vpop.f32.mrb[0].mxu0
      %v560 = vadd.f32 0.0, %v559
      %v561 = vpop.f32.mrb[0].mxu0
      %562 = vmatprep.mubr.f32.mxu0 %v236
      %563 = vmatmul.mubr.f32.gmra.mrb[0].mxu0 %v235
      %v564 = vpop.f32.mrb[0].mxu0
      %v565 = vadd.f32 0.0, %v564
      %v566 = vpop.f32.mrb[0].mxu0
      %567 = vmatprep.mubr.f32.mxu0 %v240
      %568 = vmatmul.mubr.f32.gmra.mrb[0].mxu0 %v239
      %v569 = vpop.f32.mrb[0].mxu0
      %v570 = vadd.f32 0.0, %v569
      %v571 = vpop.f32.mrb[0].mxu0
      %572 = vmatprep.mubr.f32.mxu0 %v244
      %573 = vmatmul.mubr.f32.gmra.mrb[0].mxu0 %v243
      %v574 = vpop.f32.mrb[0].mxu0
      %v575 = vadd.f32 0.0, %v574
      %v576 = vpop.f32.mrb[0].mxu0
      %577 = vmatprep.mubr.f32.mxu0 %v248
      %578 = vmatmul.mubr.f32.gmra.mrb[0].mxu0 %v247
      %v579 = vpop.f32.mrb[0].mxu0
      %v580 = vadd.f32 0.0, %v579
      %v581 = vpop.f32.mrb[0].mxu0
      %582 = vmatprep.mubr.f32.mxu0 %v252
      %583 = vmatmul.mubr.f32.gmra.mrb[0].mxu0 %v251
      %v584 = vpop.f32.mrb[0].mxu0
      %v585 = vadd.f32 0.0, %v584
      %v586 = vpop.f32.mrb[0].mxu0
      %587 = vmatprep.mubr.f32.mxu0 %v256
      %588 = vmatmul.mubr.f32.gmra.mrb[0].mxu0 %v255
      %v589 = vpop.f32.mrb[0].mxu0
      %v590 = vadd.f32 0.0, %v589
      %v591 = vpop.f32.mrb[0].mxu0
      %592 = vmatprep.mubr.f32.mxu0 %v260
      %593 = vmatmul.mubr.f32.gmra.mrb[0].mxu0 %v259
      %v594 = vpop.f32.mrb[0].mxu0
      %v595 = vadd.f32 0.0, %v594
      %v596 = vpop.f32.mrb[0].mxu0
      %597 = vmatprep.mubr.f32.mxu0 %v264
      %598 = vmatmul.mubr.f32.gmra.mrb[0].mxu0 %v263
      %v599 = vpop.f32.mrb[0].mxu0
      %v600 = vadd.f32 0.0, %v599
      %v601 = vpop.f32.mrb[0].mxu0
      %602 = vmatprep.mubr.f32.mxu0 %v268
      %603 = vmatmul.mubr.f32.gmra.mrb[0].mxu0 %v267
      %v604 = vpop.f32.mrb[0].mxu0
      %v605 = vadd.f32 0.0, %v604
      %v606 = vpop.f32.mrb[0].mxu0
      %607 = vmatprep.mubr.f32.mxu0 %v272
      %608 = vmatmul.mubr.f32.gmra.mrb[0].mxu0 %v271
      %v609 = vpop.f32.mrb[0].mxu0
      %v610 = vadd.f32 0.0, %v609
      %v611 = vpop.f32.mrb[0].mxu0
      %612 = vmatprep.mubr.f32.mxu0 %v276
      %613 = vmatmul.mubr.f32.gmra.mrb[0].mxu0 %v275
      %v614 = vpop.f32.mrb[0].mxu0
      %v615 = vadd.f32 0.0, %v614
      %v616 = vpop.f32.mrb[0].mxu0
      %617 = vmatprep.mubr.f32.mxu0 %v280
      %618 = vmatmul.mubr.f32.gmra.mrb[0].mxu0 %v279
      %v619 = vpop.f32.mrb[0].mxu0
      %v620 = vadd.f32 0.0, %v619
      %v621 = vpop.f32.mrb[0].mxu0
      %622 = vdwg.mxu0
      %623 = vmatprep.subr.mxu0 0.0
      %624 = vmatpush1.msra.mxu0 %v315
      %625 = vmatprep.subr.mxu0 0.0
      %626 = vmatpush1.msra.mxu0 %v316
      %627 = vmatprep.subr.mxu0 0.0
      %628 = vmatpush1.msra.mxu0 %v317
      %629 = vmatprep.subr.mxu0 0.0
      %630 = vmatpush1.msra.mxu0 %v318
      %631 = vmatprep.subr.mxu0 0.0
      %632 = vmatpush1.msra.mxu0 %v319
      %633 = vmatprep.subr.mxu0 0.0
      %634 = vmatpush1.msra.mxu0 %v320
      %635 = vmatprep.subr.mxu0 0.0
      %636 = vmatpush1.msra.mxu0 %v321
      %637 = vmatprep.subr.mxu0 0.0
      %638 = vmatpush1.msra.mxu0 %v322
      %639 = vmatprep.subr.mxu0 0.0
      %640 = vmatpush1.msra.mxu0 %v323
      %641 = vmatprep.subr.mxu0 0.0
      %642 = vmatpush1.msra.mxu0 %v324
      %643 = vmatprep.subr.mxu0 0.0
      %644 = vmatpush1.msra.mxu0 %v325
      %645 = vmatprep.subr.mxu0 0.0
      %646 = vmatpush1.msra.mxu0 %v326
      %647 = vmatprep.subr.mxu0 0.0
      %648 = vmatpush1.msra.mxu0 %v327
      %649 = vmatprep.subr.mxu0 0.0
      %650 = vmatpush1.msra.mxu0 %v328
      %651 = vmatprep.subr.mxu0 0.0
      %652 = vmatpush1.msra.mxu0 %v329
      %653 = vmatprep.subr.mxu0 0.0
      %654 = vmatpush1.msra.mxu0 %v330
      %655 = vmatprep.subr.mxu0 0.0
      %656 = vmatpush1.msra.mxu0 %v331
      %657 = vmatprep.subr.mxu0 0.0
      %658 = vmatpush1.msra.mxu0 %v332
      %659 = vmatprep.subr.mxu0 0.0
      %660 = vmatpush1.msra.mxu0 0.0
      %661 = vmatprep.subr.mxu0 0.0
      %662 = vmatpush1.msra.mxu0 0.0
      %663 = vmatprep.subr.mxu0 0.0
      %664 = vmatpush1.msra.mxu0 0.0
      %665 = vmatprep.subr.mxu0 0.0
      %666 = vmatpush1.msra.mxu0 0.0
      %667 = vmatprep.subr.mxu0 0.0
      %668 = vmatpush1.msra.mxu0 0.0
      %669 = vmatprep.subr.mxu0 0.0
      %670 = vmatpush1.msra.mxu0 0.0
      %671 = vmatprep.subr.mxu0 0.0
      %672 = vmatpush1.msra.mxu0 0.0
      %673 = vmatprep.subr.mxu0 0.0
      %674 = vmatpush1.msra.mxu0 0.0
      %675 = vmatprep.subr.mxu0 0.0
      %676 = vmatpush1.msra.mxu0 0.0
      %677 = vmatprep.subr.mxu0 0.0
      %678 = vmatpush1.msra.mxu0 0.0
      %679 = vmatprep.subr.mxu0 0.0
      %680 = vmatpush1.msra.mxu0 0.0
      %681 = vmatprep.subr.mxu0 0.0
      %682 = vmatpush1.msra.mxu0 0.0
      %683 = vmatprep.subr.mxu0 0.0
      %684 = vmatpush1.msra.mxu0 0.0
      %685 = vmatprep.subr.mxu0 0.0
      %686 = vmatpush1.msra.mxu0 0.0
      %687 = vmatprep.mubr.f32.mxu0 %v335
      %688 = vmatmul.mubr.f32.gmra.mrb[0].mxu0 %v173
      %v689 = vpop.f32.mrb[0].mxu0
      %v690 = vadd.f32 %v485, %v689
      %v691 = vpop.f32.mrb[0].mxu0
      %692 = vmatprep.mubr.f32.mxu0 %v338
      %693 = vmatmul.mubr.f32.gmra.mrb[0].mxu0 %v177
      %v694 = vpop.f32.mrb[0].mxu0
      %v695 = vadd.f32 %v490, %v694
      %v696 = vpop.f32.mrb[0].mxu0
      %697 = vmatprep.mubr.f32.mxu0 %v341
      %698 = vmatmul.mubr.f32.gmra.mrb[0].mxu0 %v181
      %v699 = vpop.f32.mrb[0].mxu0
      %v700 = vadd.f32 %v495, %v699
      %v701 = vpop.f32.mrb[0].mxu0
      %702 = vmatprep.mubr.f32.mxu0 %v344
      %703 = vmatmul.mubr.f32.gmra.mrb[0].mxu0 %v185
      %v704 = vpop.f32.mrb[0].mxu0
      %v705 = vadd.f32 %v500, %v704
      %v706 = vpop.f32.mrb[0].mxu0
      %707 = vmatprep.mubr.f32.mxu0 %v347
      %708 = vmatmul.mubr.f32.gmra.mrb[0].mxu0 %v189
      %v709 = vpop.f32.mrb[0].mxu0
      %v710 = vadd.f32 %v505, %v709
      %v711 = vpop.f32.mrb[0].mxu0
      %712 = vmatprep.mubr.f32.mxu0 %v350
      %713 = vmatmul.mubr.f32.gmra.mrb[0].mxu0 %v193
      %v714 = vpop.f32.mrb[0].mxu0
      %v715 = vadd.f32 %v510, %v714
      %v716 = vpop.f32.mrb[0].mxu0
      %717 = vmatprep.mubr.f32.mxu0 %v353
      %718 = vmatmul.mubr.f32.gmra.mrb[0].mxu0 %v197
      %v719 = vpop.f32.mrb[0].mxu0
      %v720 = vadd.f32 %v515, %v719
      %v721 = vpop.f32.mrb[0].mxu0
      %722 = vmatprep.mubr.f32.mxu0 %v356
      %723 = vmatmul.mubr.f32.gmra.mrb[0].mxu0 %v201
      %v724 = vpop.f32.mrb[0].mxu0
      %v725 = vadd.f32 %v520, %v724
      %v726 = vpop.f32.mrb[0].mxu0
      %727 = vmatprep.mubr.f32.mxu0 %v359
      %728 = vmatmul.mubr.f32.gmra.mrb[0].mxu0 %v205
      %v729 = vpop.f32.mrb[0].mxu0
      %v730 = vadd.f32 %v525, %v729
      %v731 = vpop.f32.mrb[0].mxu0
      %732 = vmatprep.mubr.f32.mxu0 %v362
      %733 = vmatmul.mubr.f32.gmra.mrb[0].mxu0 %v209
      %v734 = vpop.f32.mrb[0].mxu0
      %v735 = vadd.f32 %v530, %v734
      %v736 = vpop.f32.mrb[0].mxu0
      %737 = vmatprep.mubr.f32.mxu0 %v365
      %738 = vmatmul.mubr.f32.gmra.mrb[0].mxu0 %v213
      %v739 = vpop.f32.mrb[0].mxu0
      %v740 = vadd.f32 %v535, %v739
      %v741 = vpop.f32.mrb[0].mxu0
      %742 = vmatprep.mubr.f32.mxu0 %v368
      %743 = vmatmul.mubr.f32.gmra.mrb[0].mxu0 %v217
      %v744 = vpop.f32.mrb[0].mxu0
      %v745 = vadd.f32 %v540, %v744
      %v746 = vpop.f32.mrb[0].mxu0
      %747 = vmatprep.mubr.f32.mxu0 %v371
      %748 = vmatmul.mubr.f32.gmra.mrb[0].mxu0 %v221
      %v749 = vpop.f32.mrb[0].mxu0
      %v750 = vadd.f32 %v545, %v749
      %v751 = vpop.f32.mrb[0].mxu0
      %752 = vmatprep.mubr.f32.mxu0 %v374
      %753 = vmatmul.mubr.f32.gmra.mrb[0].mxu0 %v225
      %v754 = vpop.f32.mrb[0].mxu0
      %v755 = vadd.f32 %v550, %v754
      %v756 = vpop.f32.mrb[0].mxu0
      %757 = vmatprep.mubr.f32.mxu0 %v377
      %758 = vmatmul.mubr.f32.gmra.mrb[0].mxu0 %v229
      %v759 = vpop.f32.mrb[0].mxu0
      %v760 = vadd.f32 %v555, %v759
      %v761 = vpop.f32.mrb[0].mxu0
      %762 = vmatprep.mubr.f32.mxu0 %v380
      %763 = vmatmul.mubr.f32.gmra.mrb[0].mxu0 %v233
      %v764 = vpop.f32.mrb[0].mxu0
      %v765 = vadd.f32 %v560, %v764
      %v766 = vpop.f32.mrb[0].mxu0
      %767 = vmatprep.mubr.f32.mxu0 %v383
      %768 = vmatmul.mubr.f32.gmra.mrb[0].mxu0 %v237
      %v769 = vpop.f32.mrb[0].mxu0
      %v770 = vadd.f32 %v565, %v769
      %v771 = vpop.f32.mrb[0].mxu0
      %772 = vmatprep.mubr.f32.mxu0 %v386
      %773 = vmatmul.mubr.f32.gmra.mrb[0].mxu0 %v241
      %v774 = vpop.f32.mrb[0].mxu0
      %v775 = vadd.f32 %v570, %v774
      %v776 = vpop.f32.mrb[0].mxu0
      %777 = vmatprep.mubr.f32.mxu0 %v389
      %778 = vmatmul.mubr.f32.gmra.mrb[0].mxu0 %v245
      %v779 = vpop.f32.mrb[0].mxu0
      %v780 = vadd.f32 %v575, %v779
      %v781 = vpop.f32.mrb[0].mxu0
      %782 = vmatprep.mubr.f32.mxu0 %v392
      %783 = vmatmul.mubr.f32.gmra.mrb[0].mxu0 %v249
      %v784 = vpop.f32.mrb[0].mxu0
      %v785 = vadd.f32 %v580, %v784
      %v786 = vpop.f32.mrb[0].mxu0
      %787 = vmatprep.mubr.f32.mxu0 %v395
      %788 = vmatmul.mubr.f32.gmra.mrb[0].mxu0 %v253
      %v789 = vpop.f32.mrb[0].mxu0
      %v790 = vadd.f32 %v585, %v789
      %v791 = vpop.f32.mrb[0].mxu0
      %792 = vmatprep.mubr.f32.mxu0 %v398
      %793 = vmatmul.mubr.f32.gmra.mrb[0].mxu0 %v257
      %v794 = vpop.f32.mrb[0].mxu0
      %v795 = vadd.f32 %v590, %v794
      %v796 = vpop.f32.mrb[0].mxu0
      %797 = vmatprep.mubr.f32.mxu0 %v401
      %798 = vmatmul.mubr.f32.gmra.mrb[0].mxu0 %v261
      %v799 = vpop.f32.mrb[0].mxu0
      %v800 = vadd.f32 %v595, %v799
      %v801 = vpop.f32.mrb[0].mxu0
      %802 = vmatprep.mubr.f32.mxu0 %v404
      %803 = vmatmul.mubr.f32.gmra.mrb[0].mxu0 %v265
      %v804 = vpop.f32.mrb[0].mxu0
      %v805 = vadd.f32 %v600, %v804
      %v806 = vpop.f32.mrb[0].mxu0
      %807 = vmatprep.mubr.f32.mxu0 %v407
      %808 = vmatmul.mubr.f32.gmra.mrb[0].mxu0 %v269
      %v809 = vpop.f32.mrb[0].mxu0
      %v810 = vadd.f32 %v605, %v809
      %v811 = vpop.f32.mrb[0].mxu0
      %812 = vmatprep.mubr.f32.mxu0 %v410
      %813 = vmatmul.mubr.f32.gmra.mrb[0].mxu0 %v273
      %v814 = vpop.f32.mrb[0].mxu0
      %v815 = vadd.f32 %v610, %v814
      %v816 = vpop.f32.mrb[0].mxu0
      %817 = vmatprep.mubr.f32.mxu0 %v413
      %818 = vmatmul.mubr.f32.gmra.mrb[0].mxu0 %v277
      %v819 = vpop.f32.mrb[0].mxu0
      %v820 = vadd.f32 %v615, %v819
      %v821 = vpop.f32.mrb[0].mxu0
      %822 = vmatprep.mubr.f32.mxu0 %v416
      %823 = vmatmul.mubr.f32.gmra.mrb[0].mxu0 %v281
      %v824 = vpop.f32.mrb[0].mxu0
      %v825 = vadd.f32 %v620, %v824
      %v826 = vpop.f32.mrb[0].mxu0
      %827 = vdwg.mxu0
      %v828 = vmax.f32 %v690, %v725
      %v829 = vmax.f32 %v695, %v730
      %v830 = vmax.f32 %v700, %v735
      %v831 = vmax.f32 %v705, %v740
      %v832 = vmax.f32 %v710, %v745
      %v833 = vmax.f32 %v715, %v750
      %v834 = vmax.f32 %v720, %v755
      %v835 = vmax.f32 %v760, %v795
      %v836 = vmax.f32 %v765, %v800
      %v837 = vmax.f32 %v770, %v805
      %v838 = vmax.f32 %v775, %v810
      %v839 = vmax.f32 %v780, %v815
      %v840 = vmax.f32 %v785, %v820
      %v841 = vmax.f32 %v790, %v825
      %v842 = vmax.f32 %v828, %v835
      %v843 = vmax.f32 %v829, %v836
      %v844 = vmax.f32 %v830, %v837
      %v845 = vmax.f32 %v831, %v838
      %v846 = vmax.f32 %v832, %v839
      %v847 = vmax.f32 %v833, %v840
      %v848 = vmax.f32 %v834, %v841
      %v849 = vld [vmem:[%s2] sm:$0x1]
      %v851 = vlaneseq
      %v852 = vshrl.u32 %v851, 7
      %v853 = vsub.s32 0, %v852
      %v854 = vrot.slane %v849, %v853
      %v856 = vadd.f32 %v842, %v854
      %v857 = vadd.f32 %v843, %v854
      %v858 = vadd.f32 %v844, %v854
      %v859 = vadd.f32 %v845, %v854
      %v860 = vadd.f32 %v846, %v854
      %v861 = vadd.f32 %v847, %v854
      %v862 = vadd.f32 %v848, %v854
      %v863 = vmax.f32 %v856, 0.0
      %v864 = vmax.f32 %v857, 0.0
      %v865 = vmax.f32 %v858, 0.0
      %v866 = vmax.f32 %v859, 0.0
      %v867 = vmax.f32 %v860, 0.0
      %v868 = vmax.f32 %v861, 0.0
      %v869 = vmax.f32 %v862, 0.0
      %vm870 = vcmask 261120
      %871 = vst.msk [vmem:[%s170] sm:$0xff] %vm870, %v863
      %872 = vst.msk [vmem:[%s170 + $0x8] sm:$0xff] %vm870, %v864
      %873 = vst.msk [vmem:[%s170 + $0x10] sm:$0xff] %vm870, %v865
      %874 = vst.msk [vmem:[%s170 + $0x18] sm:$0xff] %vm870, %v866
      %875 = vst.msk [vmem:[%s170 + $0x20] sm:$0xff] %vm870, %v867
      %876 = vst.msk [vmem:[%s170 + $0x28] sm:$0xff] %vm870, %v868
      %877 = vst.msk [vmem:[%s170 + $0x30] sm:$0xff] %vm870, %v869
      %p878 = scmp.lt.s32.totalorder %s14, 1
      %s879 = scalar_select %p878, %s14, 1
      %s880 = smul.addr %s879, 7
      %s881 = smul.addr %s880, 8
      %s882 = scalar_lea.vmem %s3, %s881
      // Predicated region
      $region33: #{cnn_forward.4} parent=31 // pred_check
        %p883 = pneg %p100
      $region34: #{cnn_forward.4} parent=31 // pred_check_branch
        %885 = sbr.rel (%p883) target = $region36
      $region35: #{cnn_forward.4} parent=31 // pred_region
        _
      $region36: #{cnn_forward.4} parent=31 // pred_fallthru
        _
    $region32: #{cnn_forward.4} parent=5 // pred_fallthru
      _
    %p886 = scmp.le.s32.totalorder 2, %s9
    // Predicated region
    $region37: #{cnn_forward.4} parent=5 // pred_check
      %p887 = pneg %p886
    $region38: #{cnn_forward.4} parent=5 // pred_check_branch
      %889 = sbr.rel (%p887) target = $region40
    $region39: #{cnn_forward.4} parent=5 // pred_region
      %s890 = ssub.s32 %s9, 2
      // Predicated region
      $region41: #{cnn_forward.4} parent=39 // pred_check
        %p891 = pneg %p106
      $region42: #{cnn_forward.4} parent=39 // pred_check_branch
        %893 = sbr.rel (%p891) target = $region44
      $region43: #{cnn_forward.4} parent=39 // pred_region
        %p894 = scmp.lt.s32.totalorder %s15, 1
        %s895 = scalar_select %p894, %s15, 1
        %s896 = smul.addr %s895, 7
        %s897 = smul.addr %s896, 8
        %s898 = scalar_lea.vmem %s3, %s897
      $region44: #{cnn_forward.4} parent=39 // pred_fallthru
        _
    $region40: #{cnn_forward.4} parent=5 // pred_fallthru
      _
  $region6: #{cnn_forward.4} parent=0 // loop_footer
    %s13 = sadd.s32 1, %s9
  $region7: #{cnn_forward.4} parent=0 // loop_footer_branch
    %8 = sbr.rel target = $region3
  $region8: #{cnn_forward.4} parent=0 // loop_exit
    _

// kernel: cnn_forward.5
$region0: #{cnn_forward.5}
  #allocation0 [shape = 'u32[]', space=smem, size = 0x4, offset = 0x4, fixed_abs, tag = 'smem constant byte address 0x4 - core index']
  #allocation1 [shape = 'u32[144,128]{1,0:T(1,128)}', space=vmem, size = 0x12000, scoped, tag = 'internal scratch']
  %s0 = inlined_call_operand.vmem [shape: f32[2,1568], index: 0, kind: input, shape index: {}]
  %s1 = inlined_call_operand.vmem [shape: f32[1568,10], index: 1, kind: input, shape index: {}]
  %s2 = inlined_call_operand.vmem [shape: f32[1,10], index: 2, kind: input, shape index: {}]
  %s3 = inlined_call_operand.hbm [shape: f32[2,10], index: 3, kind: output, shape index: {}]
  %s4 = sld [smem:[#allocation0]]
  $region22: #{cnn_forward.5} parent=0
    _
  %s6 = ssub.s32 1, %s4
  %s7 = scalar_select 0, %s6, %s4
  $region1: #{cnn_forward.5} parent=0
    #allocation2 [shape = 'u8[1024]{0}', space=vmem, size = 0x400, scoped, tag = 'output window, operand 0, single buffered']
    #allocation3 [shape = 's32[1]{0}', space=sflag, size = 0x4, scoped, tag = 'scoped memory for cnn_forward.5']
    %8 = vsyncpa [#allocation3], 0
    // Predicated region
    $region2: #{cnn_forward.5} parent=1 // pred_check
      _
    $region3: #{cnn_forward.5} parent=1 // pred_check_branch
      %10 = sbr.rel (0) target = $region5
    $region4: #{cnn_forward.5} parent=1 // pred_region
      _
    $region5: #{cnn_forward.5} parent=1 // pred_fallthru
      _
    // Predicated region
    $region6: #{cnn_forward.5} parent=1 // pred_check
      _
    $region7: #{cnn_forward.5} parent=1 // pred_check_branch
      %12 = sbr.rel (0) target = $region9
    $region8: #{cnn_forward.5} parent=1 // pred_region
      _
    $region9: #{cnn_forward.5} parent=1 // pred_fallthru
      _
    // Predicated region
    $region10: #{cnn_forward.5} parent=1 // pred_check
      _
    $region11: #{cnn_forward.5} parent=1 // pred_check_branch
      %14 = sbr.rel (0) target = $region13
    $region12: #{cnn_forward.5} parent=1 // pred_region
      _
    $region13: #{cnn_forward.5} parent=1 // pred_fallthru
      _
    %v15 = vld [vmem:[%s0] sm:$0xff]
    %v16 = vld [vmem:[%s0 + $0x8] sm:$0xff]
    %v17 = vld [vmem:[%s0 + $0x10] sm:$0xff]
    %v18 = vld [vmem:[%s0 + $0x18] sm:$0x3]
    %v19 = vld [vmem:[%s1] sm:$0xff]
    %v20 = vld [vmem:[%s1 + $0x8] sm:$0xff]
    %v21 = vld [vmem:[%s1 + $0x10] sm:$0xff]
    %v22 = vld [vmem:[%s1 + $0x18] sm:$0xff]
    %v23 = vld [vmem:[%s1 + $0x20] sm:$0xff]
    %v24 = vld [vmem:[%s1 + $0x28] sm:$0xff]
    %v25 = vld [vmem:[%s1 + $0x30] sm:$0xff]
    %v26 = vld [vmem:[%s1 + $0x38] sm:$0xff]
    %v27 = vld [vmem:[%s1 + $0x40] sm:$0xff]
    %v28 = vld [vmem:[%s1 + $0x48] sm:$0xff]
    %v29 = vld [vmem:[%s1 + $0x50] sm:$0xff]
    %v30 = vld [vmem:[%s1 + $0x58] sm:$0xff]
    %v31 = vld [vmem:[%s1 + $0x60] sm:$0xff]
    %v32 = vld [vmem:[%s1 + $0x68] sm:$0xff]
    %v33 = vld [vmem:[%s1 + $0x70] sm:$0xff]
    %v34 = vld [vmem:[%s1 + $0x78] sm:$0xff]
    %v35 = vld [vmem:[%s1 + $0x80] sm:$0xff]
    %v36 = vld [vmem:[%s1 + $0x88] sm:$0xff]
    %v37 = vld [vmem:[%s1 + $0x90] sm:$0xff]
    %v38 = vld [vmem:[%s1 + $0x98] sm:$0xff]
    %v39 = vld [vmem:[%s1 + $0xa0] sm:$0xff]
    %v40 = vld [vmem:[%s1 + $0xa8] sm:$0xff]
    %v41 = vld [vmem:[%s1 + $0xb0] sm:$0xff]
    %v42 = vld [vmem:[%s1 + $0xb8] sm:$0xff]
    %v43 = vld [vmem:[%s1 + $0xc0] sm:$0xff]
    %v44 = vld [vmem:[%s1 + $0xc8] sm:$0xff]
    %v45 = vld [vmem:[%s1 + $0xd0] sm:$0xff]
    %v46 = vld [vmem:[%s1 + $0xd8] sm:$0xff]
    %v47 = vld [vmem:[%s1 + $0xe0] sm:$0xff]
    %v48 = vld [vmem:[%s1 + $0xe8] sm:$0xff]
    %v49 = vld [vmem:[%s1 + $0xf0] sm:$0xff]
    %v50 = vld [vmem:[%s1 + $0xf8] sm:$0xff]
    %v51 = vld [vmem:[%s1 + $0x100] sm:$0xff]
    %v52 = vld [vmem:[%s1 + $0x108] sm:$0xff]
    %v53 = vld [vmem:[%s1 + $0x110] sm:$0xff]
    %v54 = vld [vmem:[%s1 + $0x118] sm:$0xff]
    %v55 = vld [vmem:[%s1 + $0x120] sm:$0xff]
    %v56 = vld [vmem:[%s1 + $0x128] sm:$0xff]
    %v57 = vld [vmem:[%s1 + $0x130] sm:$0xff]
    %v58 = vld [vmem:[%s1 + $0x138] sm:$0xff]
    %v59 = vld [vmem:[%s1 + $0x140] sm:$0xff]
    %v60 = vld [vmem:[%s1 + $0x148] sm:$0xff]
    %v61 = vld [vmem:[%s1 + $0x150] sm:$0xff]
    %v62 = vld [vmem:[%s1 + $0x158] sm:$0xff]
    %v63 = vld [vmem:[%s1 + $0x160] sm:$0xff]
    %v64 = vld [vmem:[%s1 + $0x168] sm:$0xff]
    %v65 = vld [vmem:[%s1 + $0x170] sm:$0xff]
    %v66 = vld [vmem:[%s1 + $0x178] sm:$0xff]
    %v67 = vld [vmem:[%s1 + $0x180] sm:$0xff]
    %v68 = vld [vmem:[%s1 + $0x188] sm:$0xff]
    %v69 = vld [vmem:[%s1 + $0x190] sm:$0xff]
    %v70 = vld [vmem:[%s1 + $0x198] sm:$0xff]
    %v71 = vld [vmem:[%s1 + $0x1a0] sm:$0xff]
    %v72 = vld [vmem:[%s1 + $0x1a8] sm:$0xff]
    %v73 = vld [vmem:[%s1 + $0x1b0] sm:$0xff]
    %v74 = vld [vmem:[%s1 + $0x1b8] sm:$0xff]
    %v75 = vld [vmem:[%s1 + $0x1c0] sm:$0xff]
    %v76 = vld [vmem:[%s1 + $0x1c8] sm:$0xff]
    %v77 = vld [vmem:[%s1 + $0x1d0] sm:$0xff]
    %v78 = vld [vmem:[%s1 + $0x1d8] sm:$0xff]
    %v79 = vld [vmem:[%s1 + $0x1e0] sm:$0xff]
    %v80 = vld [vmem:[%s1 + $0x1e8] sm:$0xff]
    %v81 = vld [vmem:[%s1 + $0x1f0] sm:$0xff]
    %v82 = vld [vmem:[%s1 + $0x1f8] sm:$0xff]
    %v83 = vld [vmem:[%s1 + $0x200] sm:$0xff]
    %v84 = vld [vmem:[%s1 + $0x208] sm:$0xff]
    %v85 = vld [vmem:[%s1 + $0x210] sm:$0xff]
    %v86 = vld [vmem:[%s1 + $0x218] sm:$0xff]
    %v87 = vld [vmem:[%s1 + $0x220] sm:$0xff]
    %v88 = vld [vmem:[%s1 + $0x228] sm:$0xff]
    %v89 = vld [vmem:[%s1 + $0x230] sm:$0xff]
    %v90 = vld [vmem:[%s1 + $0x238] sm:$0xff]
    %v91 = vld [vmem:[%s1 + $0x240] sm:$0xff]
    %v92 = vld [vmem:[%s1 + $0x248] sm:$0xff]
    %v93 = vld [vmem:[%s1 + $0x250] sm:$0xff]
    %v94 = vld [vmem:[%s1 + $0x258] sm:$0xff]
    %v95 = vld [vmem:[%s1 + $0x260] sm:$0xff]
    %v96 = vld [vmem:[%s1 + $0x268] sm:$0xff]
    %v97 = vld [vmem:[%s1 + $0x270] sm:$0xff]
    %v98 = vld [vmem:[%s1 + $0x278] sm:$0xff]
    %v99 = vld [vmem:[%s1 + $0x280] sm:$0xff]
    %v100 = vld [vmem:[%s1 + $0x288] sm:$0xff]
    %v101 = vld [vmem:[%s1 + $0x290] sm:$0xff]
    %v102 = vld [vmem:[%s1 + $0x298] sm:$0xff]
    %v103 = vld [vmem:[%s1 + $0x2a0] sm:$0xff]
    %v104 = vld [vmem:[%s1 + $0x2a8] sm:$0xff]
    %v105 = vld [vmem:[%s1 + $0x2b0] sm:$0xff]
    %v106 = vld [vmem:[%s1 + $0x2b8] sm:$0xff]
    %v107 = vld [vmem:[%s1 + $0x2c0] sm:$0xff]
    %v108 = vld [vmem:[%s1 + $0x2c8] sm:$0xff]
    %v109 = vld [vmem:[%s1 + $0x2d0] sm:$0xff]
    %v110 = vld [vmem:[%s1 + $0x2d8] sm:$0xff]
    %v111 = vld [vmem:[%s1 + $0x2e0] sm:$0xff]
    %v112 = vld [vmem:[%s1 + $0x2e8] sm:$0xff]
    %v113 = vld [vmem:[%s1 + $0x2f0] sm:$0xff]
    %v114 = vld [vmem:[%s1 + $0x2f8] sm:$0xff]
    %v115 = vld [vmem:[%s1 + $0x300] sm:$0xff]
    %v116 = vld [vmem:[%s1 + $0x308] sm:$0xff]
    %v117 = vld [vmem:[%s1 + $0x310] sm:$0xff]
    %v118 = vld [vmem:[%s1 + $0x318] sm:$0xff]
    %v119 = vld [vmem:[%s1 + $0x320] sm:$0xff]
    %v120 = vld [vmem:[%s1 + $0x328] sm:$0xff]
    %v121 = vld [vmem:[%s1 + $0x330] sm:$0xff]
    %v122 = vld [vmem:[%s1 + $0x338] sm:$0xff]
    %v123 = vld [vmem:[%s1 + $0x340] sm:$0xff]
    %v124 = vld [vmem:[%s1 + $0x348] sm:$0xff]
    %v125 = vld [vmem:[%s1 + $0x350] sm:$0xff]
    %v126 = vld [vmem:[%s1 + $0x358] sm:$0xff]
    %v127 = vld [vmem:[%s1 + $0x360] sm:$0xff]
    %v128 = vld [vmem:[%s1 + $0x368] sm:$0xff]
    %v129 = vld [vmem:[%s1 + $0x370] sm:$0xff]
    %v130 = vld [vmem:[%s1 + $0x378] sm:$0xff]
    %v131 = vld [vmem:[%s1 + $0x380] sm:$0xff]
    %v132 = vld [vmem:[%s1 + $0x388] sm:$0xff]
    %v133 = vld [vmem:[%s1 + $0x390] sm:$0xff]
    %v134 = vld [vmem:[%s1 + $0x398] sm:$0xff]
    %v135 = vld [vmem:[%s1 + $0x3a0] sm:$0xff]
    %v136 = vld [vmem:[%s1 + $0x3a8] sm:$0xff]
    %v137 = vld [vmem:[%s1 + $0x3b0] sm:$0xff]
    %v138 = vld [vmem:[%s1 + $0x3b8] sm:$0xff]
    %v139 = vld [vmem:[%s1 + $0x3c0] sm:$0xff]
    %v140 = vld [vmem:[%s1 + $0x3c8] sm:$0xff]
    %v141 = vld [vmem:[%s1 + $0x3d0] sm:$0xff]
    %v142 = vld [vmem:[%s1 + $0x3d8] sm:$0xff]
    %v143 = vld [vmem:[%s1 + $0x3e0] sm:$0xff]
    %v144 = vld [vmem:[%s1 + $0x3e8] sm:$0xff]
    %v145 = vld [vmem:[%s1 + $0x3f0] sm:$0xff]
    %v146 = vld [vmem:[%s1 + $0x3f8] sm:$0xff]
    %v147 = vld [vmem:[%s1 + $0x400] sm:$0xff]
    %v148 = vld [vmem:[%s1 + $0x408] sm:$0xff]
    %v149 = vld [vmem:[%s1 + $0x410] sm:$0xff]
    %v150 = vld [vmem:[%s1 + $0x418] sm:$0xff]
    %v151 = vld [vmem:[%s1 + $0x420] sm:$0xff]
    %v152 = vld [vmem:[%s1 + $0x428] sm:$0xff]
    %v153 = vld [vmem:[%s1 + $0x430] sm:$0xff]
    %v154 = vld [vmem:[%s1 + $0x438] sm:$0xff]
    %v155 = vld [vmem:[%s1 + $0x440] sm:$0xff]
    %v156 = vld [vmem:[%s1 + $0x448] sm:$0xff]
    %v157 = vld [vmem:[%s1 + $0x450] sm:$0xff]
    %v158 = vld [vmem:[%s1 + $0x458] sm:$0xff]
    %v159 = vld [vmem:[%s1 + $0x460] sm:$0xff]
    %v160 = vld [vmem:[%s1 + $0x468] sm:$0xff]
    %v161 = vld [vmem:[%s1 + $0x470] sm:$0xff]
    %v162 = vld [vmem:[%s1 + $0x478] sm:$0xff]
    %v163 = vld [vmem:[%s1 + $0x480] sm:$0xff]
    %v164 = vld [vmem:[%s1 + $0x488] sm:$0xff]
    %v165 = vld [vmem:[%s1 + $0x490] sm:$0xff]
    %v166 = vld [vmem:[%s1 + $0x498] sm:$0xff]
    %v167 = vld [vmem:[%s1 + $0x4a0] sm:$0xff]
    %v168 = vld [vmem:[%s1 + $0x4a8] sm:$0xff]
    %v169 = vld [vmem:[%s1 + $0x4b0] sm:$0xff]
    %v170 = vld [vmem:[%s1 + $0x4b8] sm:$0xff]
    %v171 = vld [vmem:[%s1 + $0x4c0] sm:$0xff]
    %v172 = vld [vmem:[%s1 + $0x4c8] sm:$0xff]
    %v173 = vld [vmem:[%s1 + $0x4d0] sm:$0xff]
    %v174 = vld [vmem:[%s1 + $0x4d8] sm:$0xff]
    %v175 = vld [vmem:[%s1 + $0x4e0] sm:$0xff]
    %v176 = vld [vmem:[%s1 + $0x4e8] sm:$0xff]
    %v177 = vld [vmem:[%s1 + $0x4f0] sm:$0xff]
    %v178 = vld [vmem:[%s1 + $0x4f8] sm:$0xff]
    %v179 = vld [vmem:[%s1 + $0x500] sm:$0xff]
    %v180 = vld [vmem:[%s1 + $0x508] sm:$0xff]
    %v181 = vld [vmem:[%s1 + $0x510] sm:$0xff]
    %v182 = vld [vmem:[%s1 + $0x518] sm:$0xff]
    %v183 = vld [vmem:[%s1 + $0x520] sm:$0xff]
    %v184 = vld [vmem:[%s1 + $0x528] sm:$0xff]
    %v185 = vld [vmem:[%s1 + $0x530] sm:$0xff]
    %v186 = vld [vmem:[%s1 + $0x538] sm:$0xff]
    %v187 = vld [vmem:[%s1 + $0x540] sm:$0xff]
    %v188 = vld [vmem:[%s1 + $0x548] sm:$0xff]
    %v189 = vld [vmem:[%s1 + $0x550] sm:$0xff]
    %v190 = vld [vmem:[%s1 + $0x558] sm:$0xff]
    %v191 = vld [vmem:[%s1 + $0x560] sm:$0xff]
    %v192 = vld [vmem:[%s1 + $0x568] sm:$0xff]
    %v193 = vld [vmem:[%s1 + $0x570] sm:$0xff]
    %v194 = vld [vmem:[%s1 + $0x578] sm:$0xff]
    %v195 = vld [vmem:[%s1 + $0x580] sm:$0xff]
    %v196 = vld [vmem:[%s1 + $0x588] sm:$0xff]
    %v197 = vld [vmem:[%s1 + $0x590] sm:$0xff]
    %v198 = vld [vmem:[%s1 + $0x598] sm:$0xff]
    %v199 = vld [vmem:[%s1 + $0x5a0] sm:$0xff]
    %v200 = vld [vmem:[%s1 + $0x5a8] sm:$0xff]
    %v201 = vld [vmem:[%s1 + $0x5b0] sm:$0xff]
    %v202 = vld [vmem:[%s1 + $0x5b8] sm:$0xff]
    %v203 = vld [vmem:[%s1 + $0x5c0] sm:$0xff]
    %v204 = vld [vmem:[%s1 + $0x5c8] sm:$0xff]
    %v205 = vld [vmem:[%s1 + $0x5d0] sm:$0xff]
    %v206 = vld [vmem:[%s1 + $0x5d8] sm:$0xff]
    %v207 = vld [vmem:[%s1 + $0x5e0] sm:$0xff]
    %v208 = vld [vmem:[%s1 + $0x5e8] sm:$0xff]
    %v209 = vld [vmem:[%s1 + $0x5f0] sm:$0xff]
    %v210 = vld [vmem:[%s1 + $0x5f8] sm:$0xff]
    %v211 = vld [vmem:[%s1 + $0x600] sm:$0xff]
    %v212 = vld [vmem:[%s1 + $0x608] sm:$0xff]
    %v213 = vld [vmem:[%s1 + $0x610] sm:$0xff]
    %v214 = vld [vmem:[%s1 + $0x618] sm:$0xff]
    %v215 = vld [vmem:[%s2] sm:$0x1]
    %v217 = vlaneseq
    %v218 = vshrl.u32 %v217, 7
    %v219 = vsub.s32 0, %v218
    %v220 = vrot.slane %v215, %v219
    %v226 = vcombine.high %v15, %v15
    %v228 = vunpack.c.l.s4 1983009808
    %v229 = vunpack.c.0.s8 %v228
    %v230 = vlaneseq
    %v231 = vshrl.u32 %v230, 7
    %v232 = vsub.s32 %v229, %v231
    %v233 = vrot.slane %v15, %v232
    %v235 = vunpack.c.l.s4 1983009808
    %v236 = vunpack.c.0.s8 %v235
    %v237 = vlaneseq
    %v238 = vshrl.u32 %v237, 7
    %v239 = vsub.s32 %v236, %v238
    %v240 = vrot.slane %v226, %v239
    %v241 = vcombine.high %v233, %v233
    %v242 = vcombine.high %v240, %v240
    %v243 = vcombine.high %v16, %v16
    %v245 = vunpack.c.l.s4 1983009808
    %v246 = vunpack.c.0.s8 %v245
    %v247 = vlaneseq
    %v248 = vshrl.u32 %v247, 7
    %v249 = vsub.s32 %v246, %v248
    %v250 = vrot.slane %v16, %v249
    %v252 = vunpack.c.l.s4 1983009808
    %v253 = vunpack.c.0.s8 %v252
    %v254 = vlaneseq
    %v255 = vshrl.u32 %v254, 7
    %v256 = vsub.s32 %v253, %v255
    %v257 = vrot.slane %v243, %v256
    %v258 = vcombine.high %v250, %v250
    %v259 = vcombine.high %v257, %v257
    %v260 = vcombine.high %v17, %v17
    %v262 = vunpack.c.l.s4 1983009808
    %v263 = vunpack.c.0.s8 %v262
    %v264 = vlaneseq
    %v265 = vshrl.u32 %v264, 7
    %v266 = vsub.s32 %v263, %v265
    %v267 = vrot.slane %v17, %v266
    %v269 = vunpack.c.l.s4 1983009808
    %v270 = vunpack.c.0.s8 %v269
    %v271 = vlaneseq
    %v272 = vshrl.u32 %v271, 7
    %v273 = vsub.s32 %v270, %v272
    %v274 = vrot.slane %v260, %v273
    %v275 = vcombine.high %v267, %v267
    %v276 = vcombine.high %v274, %v274
    %v278 = vunpack.c.l.s4 1983009808
    %v279 = vunpack.c.0.s8 %v278
    %v280 = vlaneseq
    %v281 = vshrl.u32 %v280, 7
    %v282 = vsub.s32 %v279, %v281
    %v283 = vrot.slane %v18, %v282
    %vm296 = vcmask 261120
    %v297 = vsel %vm296, %v283, 0
    %299 = vmatprep.subr.mxu0 0.0
    %300 = vmatpush1.msra.mxu0 %v19
    %301 = vmatprep.subr.mxu0 0.0
    %302 = vmatpush1.msra.mxu0 %v20
    %303 = vmatprep.subr.mxu0 0.0
    %304 = vmatpush1.msra.mxu0 %v21
    %305 = vmatprep.subr.mxu0 0.0
    %306 = vmatpush1.msra.mxu0 %v22
    %307 = vmatprep.subr.mxu0 0.0
    %308 = vmatpush1.msra.mxu0 %v23
    %309 = vmatprep.subr.mxu0 0.0
    %310 = vmatpush1.msra.mxu0 %v24
    %311 = vmatprep.subr.mxu0 0.0
    %312 = vmatpush1.msra.mxu0 %v25
    %313 = vmatprep.subr.mxu0 0.0
    %314 = vmatpush1.msra.mxu0 %v26
    %315 = vmatprep.subr.mxu0 0.0
    %316 = vmatpush1.msra.mxu0 %v27
    %317 = vmatprep.subr.mxu0 0.0
    %318 = vmatpush1.msra.mxu0 %v28
    %319 = vmatprep.subr.mxu0 0.0
    %320 = vmatpush1.msra.mxu0 %v29
    %321 = vmatprep.subr.mxu0 0.0
    %322 = vmatpush1.msra.mxu0 %v30
    %323 = vmatprep.subr.mxu0 0.0
    %324 = vmatpush1.msra.mxu0 %v31
    %325 = vmatprep.subr.mxu0 0.0
    %326 = vmatpush1.msra.mxu0 %v32
    %327 = vmatprep.subr.mxu0 0.0
    %328 = vmatpush1.msra.mxu0 %v33
    %329 = vmatprep.subr.mxu0 0.0
    %330 = vmatpush1.msra.mxu0 %v34
    %331 = vmatprep.subr.mxu0 0.0
    %332 = vmatpush1.msra.mxu0 %v35
    %333 = vmatprep.subr.mxu0 0.0
    %334 = vmatpush1.msra.mxu0 %v36
    %335 = vmatprep.subr.mxu0 0.0
    %336 = vmatpush1.msra.mxu0 %v37
    %337 = vmatprep.subr.mxu0 0.0
    %338 = vmatpush1.msra.mxu0 %v38
    %339 = vmatprep.subr.mxu0 0.0
    %340 = vmatpush1.msra.mxu0 %v39
    %341 = vmatprep.subr.mxu0 0.0
    %342 = vmatpush1.msra.mxu0 %v40
    %343 = vmatprep.subr.mxu0 0.0
    %344 = vmatpush1.msra.mxu0 %v41
    %345 = vmatprep.subr.mxu0 0.0
    %346 = vmatpush1.msra.mxu0 %v42
    %347 = vmatprep.subr.mxu0 0.0
    %348 = vmatpush1.msra.mxu0 %v43
    %349 = vmatprep.subr.mxu0 0.0
    %350 = vmatpush1.msra.mxu0 %v44
    %351 = vmatprep.subr.mxu0 0.0
    %352 = vmatpush1.msra.mxu0 %v45
    %353 = vmatprep.subr.mxu0 0.0
    %354 = vmatpush1.msra.mxu0 %v46
    %355 = vmatprep.subr.mxu0 0.0
    %356 = vmatpush1.msra.mxu0 %v47
    %357 = vmatprep.subr.mxu0 0.0
    %358 = vmatpush1.msra.mxu0 %v48
    %359 = vmatprep.subr.mxu0 0.0
    %360 = vmatpush1.msra.mxu0 %v49
    %361 = vmatprep.subr.mxu0 0.0
    %362 = vmatpush1.msra.mxu0 %v50
    %363 = vmatprep.mubr.f32.mxu0 %v241
    %364 = vmatmul.mubr.f32.gmra.mrb[0].mxu0 %v233
    %v365 = vpop.f32.mrb[0].mxu0
    %v366 = vadd.f32 %v220, %v365
    %v367 = vpop.f32.mrb[0].mxu0
    %368 = vdwg.mxu0
    %369 = vmatprep.subr.mxu0 0.0
    %370 = vmatpush1.msra.mxu0 %v51
    %371 = vmatprep.subr.mxu0 0.0
    %372 = vmatpush1.msra.mxu0 %v52
    %373 = vmatprep.subr.mxu0 0.0
    %374 = vmatpush1.msra.mxu0 %v53
    %375 = vmatprep.subr.mxu0 0.0
    %376 = vmatpush1.msra.mxu0 %v54
    %377 = vmatprep.subr.mxu0 0.0
    %378 = vmatpush1.msra.mxu0 %v55
    %379 = vmatprep.subr.mxu0 0.0
    %380 = vmatpush1.msra.mxu0 %v56
    %381 = vmatprep.subr.mxu0 0.0
    %382 = vmatpush1.msra.mxu0 %v57
    %383 = vmatprep.subr.mxu0 0.0
    %384 = vmatpush1.msra.mxu0 %v58
    %385 = vmatprep.subr.mxu0 0.0
    %386 = vmatpush1.msra.mxu0 %v59
    %387 = vmatprep.subr.mxu0 0.0
    %388 = vmatpush1.msra.mxu0 %v60
    %389 = vmatprep.subr.mxu0 0.0
    %390 = vmatpush1.msra.mxu0 %v61
    %391 = vmatprep.subr.mxu0 0.0
    %392 = vmatpush1.msra.mxu0 %v62
    %393 = vmatprep.subr.mxu0 0.0
    %394 = vmatpush1.msra.mxu0 %v63
    %395 = vmatprep.subr.mxu0 0.0
    %396 = vmatpush1.msra.mxu0 %v64
    %397 = vmatprep.subr.mxu0 0.0
    %398 = vmatpush1.msra.mxu0 %v65
    %399 = vmatprep.subr.mxu0 0.0
    %400 = vmatpush1.msra.mxu0 %v66
    %401 = vmatprep.subr.mxu0 0.0
    %402 = vmatpush1.msra.mxu0 %v67
    %403 = vmatprep.subr.mxu0 0.0
    %404 = vmatpush1.msra.mxu0 %v68
    %405 = vmatprep.subr.mxu0 0.0
    %406 = vmatpush1.msra.mxu0 %v69
    %407 = vmatprep.subr.mxu0 0.0
    %408 = vmatpush1.msra.mxu0 %v70
    %409 = vmatprep.subr.mxu0 0.0
    %410 = vmatpush1.msra.mxu0 %v71
    %411 = vmatprep.subr.mxu0 0.0
    %412 = vmatpush1.msra.mxu0 %v72
    %413 = vmatprep.subr.mxu0 0.0
    %414 = vmatpush1.msra.mxu0 %v73
    %415 = vmatprep.subr.mxu0 0.0
    %416 = vmatpush1.msra.mxu0 %v74
    %417 = vmatprep.subr.mxu0 0.0
    %418 = vmatpush1.msra.mxu0 %v75
    %419 = vmatprep.subr.mxu0 0.0
    %420 = vmatpush1.msra.mxu0 %v76
    %421 = vmatprep.subr.mxu0 0.0
    %422 = vmatpush1.msra.mxu0 %v77
    %423 = vmatprep.subr.mxu0 0.0
    %424 = vmatpush1.msra.mxu0 %v78
    %425 = vmatprep.subr.mxu0 0.0
    %426 = vmatpush1.msra.mxu0 %v79
    %427 = vmatprep.subr.mxu0 0.0
    %428 = vmatpush1.msra.mxu0 %v80
    %429 = vmatprep.subr.mxu0 0.0
    %430 = vmatpush1.msra.mxu0 %v81
    %431 = vmatprep.subr.mxu0 0.0
    %432 = vmatpush1.msra.mxu0 %v82
    %433 = vmatprep.mubr.f32.mxu0 %v242
    %434 = vmatmul.mubr.f32.gmra.mrb[0].mxu0 %v240
    %v435 = vpop.f32.mrb[0].mxu0
    %v436 = vadd.f32 %v366, %v435
    %v437 = vpop.f32.mrb[0].mxu0
    %438 = vdwg.mxu0
    %439 = vmatprep.subr.mxu0 0.0
    %440 = vmatpush1.msra.mxu0 %v83
    %441 = vmatprep.subr.mxu0 0.0
    %442 = vmatpush1.msra.mxu0 %v84
    %443 = vmatprep.subr.mxu0 0.0
    %444 = vmatpush1.msra.mxu0 %v85
    %445 = vmatprep.subr.mxu0 0.0
    %446 = vmatpush1.msra.mxu0 %v86
    %447 = vmatprep.subr.mxu0 0.0
    %448 = vmatpush1.msra.mxu0 %v87
    %449 = vmatprep.subr.mxu0 0.0
    %450 = vmatpush1.msra.mxu0 %v88
    %451 = vmatprep.subr.mxu0 0.0
    %452 = vmatpush1.msra.mxu0 %v89
    %453 = vmatprep.subr.mxu0 0.0
    %454 = vmatpush1.msra.mxu0 %v90
    %455 = vmatprep.subr.mxu0 0.0
    %456 = vmatpush1.msra.mxu0 %v91
    %457 = vmatprep.subr.mxu0 0.0
    %458 = vmatpush1.msra.mxu0 %v92
    %459 = vmatprep.subr.mxu0 0.0
    %460 = vmatpush1.msra.mxu0 %v93
    %461 = vmatprep.subr.mxu0 0.0
    %462 = vmatpush1.msra.mxu0 %v94
    %463 = vmatprep.subr.mxu0 0.0
    %464 = vmatpush1.msra.mxu0 %v95
    %465 = vmatprep.subr.mxu0 0.0
    %466 = vmatpush1.msra.mxu0 %v96
    %467 = vmatprep.subr.mxu0 0.0
    %468 = vmatpush1.msra.mxu0 %v97
    %469 = vmatprep.subr.mxu0 0.0
    %470 = vmatpush1.msra.mxu0 %v98
    %471 = vmatprep.subr.mxu0 0.0
    %472 = vmatpush1.msra.mxu0 %v99
    %473 = vmatprep.subr.mxu0 0.0
    %474 = vmatpush1.msra.mxu0 %v100
    %475 = vmatprep.subr.mxu0 0.0
    %476 = vmatpush1.msra.mxu0 %v101
    %477 = vmatprep.subr.mxu0 0.0
    %478 = vmatpush1.msra.mxu0 %v102
    %479 = vmatprep.subr.mxu0 0.0
    %480 = vmatpush1.msra.mxu0 %v103
    %481 = vmatprep.subr.mxu0 0.0
    %482 = vmatpush1.msra.mxu0 %v104
    %483 = vmatprep.subr.mxu0 0.0
    %484 = vmatpush1.msra.mxu0 %v105
    %485 = vmatprep.subr.mxu0 0.0
    %486 = vmatpush1.msra.mxu0 %v106
    %487 = vmatprep.subr.mxu0 0.0
    %488 = vmatpush1.msra.mxu0 %v107
    %489 = vmatprep.subr.mxu0 0.0
    %490 = vmatpush1.msra.mxu0 %v108
    %491 = vmatprep.subr.mxu0 0.0
    %492 = vmatpush1.msra.mxu0 %v109
    %493 = vmatprep.subr.mxu0 0.0
    %494 = vmatpush1.msra.mxu0 %v110
    %495 = vmatprep.subr.mxu0 0.0
    %496 = vmatpush1.msra.mxu0 %v111
    %497 = vmatprep.subr.mxu0 0.0
    %498 = vmatpush1.msra.mxu0 %v112
    %499 = vmatprep.subr.mxu0 0.0
    %500 = vmatpush1.msra.mxu0 %v113
    %501 = vmatprep.subr.mxu0 0.0
    %502 = vmatpush1.msra.mxu0 %v114
    %503 = vmatprep.mubr.f32.mxu0 %v258
    %504 = vmatmul.mubr.f32.gmra.mrb[0].mxu0 %v250
    %v505 = vpop.f32.mrb[0].mxu0
    %v506 = vadd.f32 %v436, %v505
    %v507 = vpop.f32.mrb[0].mxu0
    %508 = vdwg.mxu0
    %509 = vmatprep.subr.mxu0 0.0
    %510 = vmatpush1.msra.mxu0 %v115
    %511 = vmatprep.subr.mxu0 0.0
    %512 = vmatpush1.msra.mxu0 %v116
    %513 = vmatprep.subr.mxu0 0.0
    %514 = vmatpush1.msra.mxu0 %v117
    %515 = vmatprep.subr.mxu0 0.0
    %516 = vmatpush1.msra.mxu0 %v118
    %517 = vmatprep.subr.mxu0 0.0
    %518 = vmatpush1.msra.mxu0 %v119
    %519 = vmatprep.subr.mxu0 0.0
    %520 = vmatpush1.msra.mxu0 %v120
    %521 = vmatprep.subr.mxu0 0.0
    %522 = vmatpush1.msra.mxu0 %v121
    %523 = vmatprep.subr.mxu0 0.0
    %524 = vmatpush1.msra.mxu0 %v122
    %525 = vmatprep.subr.mxu0 0.0
    %526 = vmatpush1.msra.mxu0 %v123
    %527 = vmatprep.subr.mxu0 0.0
    %528 = vmatpush1.msra.mxu0 %v124
    %529 = vmatprep.subr.mxu0 0.0
    %530 = vmatpush1.msra.mxu0 %v125
    %531 = vmatprep.subr.mxu0 0.0
    %532 = vmatpush1.msra.mxu0 %v126
    %533 = vmatprep.subr.mxu0 0.0
    %534 = vmatpush1.msra.mxu0 %v127
    %535 = vmatprep.subr.mxu0 0.0
    %536 = vmatpush1.msra.mxu0 %v128
    %537 = vmatprep.subr.mxu0 0.0
    %538 = vmatpush1.msra.mxu0 %v129
    %539 = vmatprep.subr.mxu0 0.0
    %540 = vmatpush1.msra.mxu0 %v130
    %541 = vmatprep.subr.mxu0 0.0
    %542 = vmatpush1.msra.mxu0 %v131
    %543 = vmatprep.subr.mxu0 0.0
    %544 = vmatpush1.msra.mxu0 %v132
    %545 = vmatprep.subr.mxu0 0.0
    %546 = vmatpush1.msra.mxu0 %v133
    %547 = vmatprep.subr.mxu0 0.0
    %548 = vmatpush1.msra.mxu0 %v134
    %549 = vmatprep.subr.mxu0 0.0
    %550 = vmatpush1.msra.mxu0 %v135
    %551 = vmatprep.subr.mxu0 0.0
    %552 = vmatpush1.msra.mxu0 %v136
    %553 = vmatprep.subr.mxu0 0.0
    %554 = vmatpush1.msra.mxu0 %v137
    %555 = vmatprep.subr.mxu0 0.0
    %556 = vmatpush1.msra.mxu0 %v138
    %557 = vmatprep.subr.mxu0 0.0
    %558 = vmatpush1.msra.mxu0 %v139
    %559 = vmatprep.subr.mxu0 0.0
    %560 = vmatpush1.msra.mxu0 %v140
    %561 = vmatprep.subr.mxu0 0.0
    %562 = vmatpush1.msra.mxu0 %v141
    %563 = vmatprep.subr.mxu0 0.0
    %564 = vmatpush1.msra.mxu0 %v142
    %565 = vmatprep.subr.mxu0 0.0
    %566 = vmatpush1.msra.mxu0 %v143
    %567 = vmatprep.subr.mxu0 0.0
    %568 = vmatpush1.msra.mxu0 %v144
    %569 = vmatprep.subr.mxu0 0.0
    %570 = vmatpush1.msra.mxu0 %v145
    %571 = vmatprep.subr.mxu0 0.0
    %572 = vmatpush1.msra.mxu0 %v146
    %573 = vmatprep.mubr.f32.mxu0 %v259
    %574 = vmatmul.mubr.f32.gmra.mrb[0].mxu0 %v257
    %v575 = vpop.f32.mrb[0].mxu0
    %v576 = vadd.f32 %v506, %v575
    %v577 = vpop.f32.mrb[0].mxu0
    %578 = vdwg.mxu0
    %579 = vmatprep.subr.mxu0 0.0
    %580 = vmatpush1.msra.mxu0 %v147
    %581 = vmatprep.subr.mxu0 0.0
    %582 = vmatpush1.msra.mxu0 %v148
    %583 = vmatprep.subr.mxu0 0.0
    %584 = vmatpush1.msra.mxu0 %v149
    %585 = vmatprep.subr.mxu0 0.0
    %586 = vmatpush1.msra.mxu0 %v150
    %587 = vmatprep.subr.mxu0 0.0
    %588 = vmatpush1.msra.mxu0 %v151
    %589 = vmatprep.subr.mxu0 0.0
    %590 = vmatpush1.msra.mxu0 %v152
    %591 = vmatprep.subr.mxu0 0.0
    %592 = vmatpush1.msra.mxu0 %v153
    %593 = vmatprep.subr.mxu0 0.0
    %594 = vmatpush1.msra.mxu0 %v154
    %595 = vmatprep.subr.mxu0 0.0
    %596 = vmatpush1.msra.mxu0 %v155
    %597 = vmatprep.subr.mxu0 0.0
    %598 = vmatpush1.msra.mxu0 %v156
    %599 = vmatprep.subr.mxu0 0.0
    %600 = vmatpush1.msra.mxu0 %v157
    %601 = vmatprep.subr.mxu0 0.0
    %602 = vmatpush1.msra.mxu0 %v158
    %603 = vmatprep.subr.mxu0 0.0
    %604 = vmatpush1.msra.mxu0 %v159
    %605 = vmatprep.subr.mxu0 0.0
    %606 = vmatpush1.msra.mxu0 %v160
    %607 = vmatprep.subr.mxu0 0.0
    %608 = vmatpush1.msra.mxu0 %v161
    %609 = vmatprep.subr.mxu0 0.0
    %610 = vmatpush1.msra.mxu0 %v162
    %611 = vmatprep.subr.mxu0 0.0
    %612 = vmatpush1.msra.mxu0 %v163
    %613 = vmatprep.subr.mxu0 0.0
    %614 = vmatpush1.msra.mxu0 %v164
    %615 = vmatprep.subr.mxu0 0.0
    %616 = vmatpush1.msra.mxu0 %v165
    %617 = vmatprep.subr.mxu0 0.0
    %618 = vmatpush1.msra.mxu0 %v166
    %619 = vmatprep.subr.mxu0 0.0
    %620 = vmatpush1.msra.mxu0 %v167
    %621 = vmatprep.subr.mxu0 0.0
    %622 = vmatpush1.msra.mxu0 %v168
    %623 = vmatprep.subr.mxu0 0.0
    %624 = vmatpush1.msra.mxu0 %v169
    %625 = vmatprep.subr.mxu0 0.0
    %626 = vmatpush1.msra.mxu0 %v170
    %627 = vmatprep.subr.mxu0 0.0
    %628 = vmatpush1.msra.mxu0 %v171
    %629 = vmatprep.subr.mxu0 0.0
    %630 = vmatpush1.msra.mxu0 %v172
    %631 = vmatprep.subr.mxu0 0.0
    %632 = vmatpush1.msra.mxu0 %v173
    %633 = vmatprep.subr.mxu0 0.0
    %634 = vmatpush1.msra.mxu0 %v174
    %635 = vmatprep.subr.mxu0 0.0
    %636 = vmatpush1.msra.mxu0 %v175
    %637 = vmatprep.subr.mxu0 0.0
    %638 = vmatpush1.msra.mxu0 %v176
    %639 = vmatprep.subr.mxu0 0.0
    %640 = vmatpush1.msra.mxu0 %v177
    %641 = vmatprep.subr.mxu0 0.0
    %642 = vmatpush1.msra.mxu0 %v178
    %643 = vmatprep.mubr.f32.mxu0 %v275
    %644 = vmatmul.mubr.f32.gmra.mrb[0].mxu0 %v267
    %v645 = vpop.f32.mrb[0].mxu0
    %v646 = vadd.f32 %v576, %v645
    %v647 = vpop.f32.mrb[0].mxu0
    %648 = vdwg.mxu0
    %649 = vmatprep.subr.mxu0 0.0
    %650 = vmatpush1.msra.mxu0 %v179
    %651 = vmatprep.subr.mxu0 0.0
    %652 = vmatpush1.msra.mxu0 %v180
    %653 = vmatprep.subr.mxu0 0.0
    %654 = vmatpush1.msra.mxu0 %v181
    %655 = vmatprep.subr.mxu0 0.0
    %656 = vmatpush1.msra.mxu0 %v182
    %657 = vmatprep.subr.mxu0 0.0
    %658 = vmatpush1.msra.mxu0 %v183
    %659 = vmatprep.subr.mxu0 0.0
    %660 = vmatpush1.msra.mxu0 %v184
    %661 = vmatprep.subr.mxu0 0.0
    %662 = vmatpush1.msra.mxu0 %v185
    %663 = vmatprep.subr.mxu0 0.0
    %664 = vmatpush1.msra.mxu0 %v186
    %665 = vmatprep.subr.mxu0 0.0
    %666 = vmatpush1.msra.mxu0 %v187
    %667 = vmatprep.subr.mxu0 0.0
    %668 = vmatpush1.msra.mxu0 %v188
    %669 = vmatprep.subr.mxu0 0.0
    %670 = vmatpush1.msra.mxu0 %v189
    %671 = vmatprep.subr.mxu0 0.0
    %672 = vmatpush1.msra.mxu0 %v190
    %673 = vmatprep.subr.mxu0 0.0
    %674 = vmatpush1.msra.mxu0 %v191
    %675 = vmatprep.subr.mxu0 0.0
    %676 = vmatpush1.msra.mxu0 %v192
    %677 = vmatprep.subr.mxu0 0.0
    %678 = vmatpush1.msra.mxu0 %v193
    %679 = vmatprep.subr.mxu0 0.0
    %680 = vmatpush1.msra.mxu0 %v194
    %681 = vmatprep.subr.mxu0 0.0
    %682 = vmatpush1.msra.mxu0 %v195
    %683 = vmatprep.subr.mxu0 0.0
    %684 = vmatpush1.msra.mxu0 %v196
    %685 = vmatprep.subr.mxu0 0.0
    %686 = vmatpush1.msra.mxu0 %v197
    %687 = vmatprep.subr.mxu0 0.0
    %688 = vmatpush1.msra.mxu0 %v198
    %689 = vmatprep.subr.mxu0 0.0
    %690 = vmatpush1.msra.mxu0 %v199
    %691 = vmatprep.subr.mxu0 0.0
    %692 = vmatpush1.msra.mxu0 %v200
    %693 = vmatprep.subr.mxu0 0.0
    %694 = vmatpush1.msra.mxu0 %v201
    %695 = vmatprep.subr.mxu0 0.0
    %696 = vmatpush1.msra.mxu0 %v202
    %697 = vmatprep.subr.mxu0 0.0
    %698 = vmatpush1.msra.mxu0 %v203
    %699 = vmatprep.subr.mxu0 0.0
    %700 = vmatpush1.msra.mxu0 %v204
    %701 = vmatprep.subr.mxu0 0.0
    %702 = vmatpush1.msra.mxu0 %v205
    %703 = vmatprep.subr.mxu0 0.0
    %704 = vmatpush1.msra.mxu0 %v206
    %705 = vmatprep.subr.mxu0 0.0
    %706 = vmatpush1.msra.mxu0 %v207
    %707 = vmatprep.subr.mxu0 0.0
    %708 = vmatpush1.msra.mxu0 %v208
    %709 = vmatprep.subr.mxu0 0.0
    %710 = vmatpush1.msra.mxu0 %v209
    %711 = vmatprep.subr.mxu0 0.0
    %712 = vmatpush1.msra.mxu0 %v210
    %713 = vmatprep.mubr.f32.mxu0 %v276
    %714 = vmatmul.mubr.f32.gmra.mrb[0].mxu0 %v274
    %v715 = vpop.f32.mrb[0].mxu0
    %v716 = vadd.f32 %v646, %v715
    %v717 = vpop.f32.mrb[0].mxu0
    %718 = vdwg.mxu0
    %719 = vmatprep.subr.mxu0 0.0
    %720 = vmatpush1.msra.mxu0 %v211
    %721 = vmatprep.subr.mxu0 0.0
    %722 = vmatpush1.msra.mxu0 %v212
    %723 = vmatprep.subr.mxu0 0.0
    %724 = vmatpush1.msra.mxu0 %v213
    %725 = vmatprep.subr.mxu0 0.0
    %726 = vmatpush1.msra.mxu0 %v214
    %727 = vmatprep.subr.mxu0 0.0
    %728 = vmatpush1.msra.mxu0 0.0
    %729 = vmatprep.subr.mxu0 0.0
    %730 = vmatpush1.msra.mxu0 0.0
    %731 = vmatprep.subr.mxu0 0.0
    %732 = vmatpush1.msra.mxu0 0.0
    %733 = vmatprep.subr.mxu0 0.0
    %734 = vmatpush1.msra.mxu0 0.0
    %735 = vmatprep.subr.mxu0 0.0
    %736 = vmatpush1.msra.mxu0 0.0
    %737 = vmatprep.subr.mxu0 0.0
    %738 = vmatpush1.msra.mxu0 0.0
    %739 = vmatprep.subr.mxu0 0.0
    %740 = vmatpush1.msra.mxu0 0.0
    %741 = vmatprep.subr.mxu0 0.0
    %742 = vmatpush1.msra.mxu0 0.0
    %743 = vmatprep.subr.mxu0 0.0
    %744 = vmatpush1.msra.mxu0 0.0
    %745 = vmatprep.subr.mxu0 0.0
    %746 = vmatpush1.msra.mxu0 0.0
    %747 = vmatprep.subr.mxu0 0.0
    %748 = vmatpush1.msra.mxu0 0.0
    %749 = vmatprep.subr.mxu0 0.0
    %750 = vmatpush1.msra.mxu0 0.0
    %751 = vmatprep.subr.mxu0 0.0
    %752 = vmatpush1.msra.mxu0 0.0
    %753 = vmatprep.subr.mxu0 0.0
    %754 = vmatpush1.msra.mxu0 0.0
    %755 = vmatprep.subr.mxu0 0.0
    %756 = vmatpush1.msra.mxu0 0.0
    %757 = vmatprep.subr.mxu0 0.0
    %758 = vmatpush1.msra.mxu0 0.0
    %759 = vmatprep.subr.mxu0 0.0
    %760 = vmatpush1.msra.mxu0 0.0
    %761 = vmatprep.subr.mxu0 0.0
    %762 = vmatpush1.msra.mxu0 0.0
    %763 = vmatprep.subr.mxu0 0.0
    %764 = vmatpush1.msra.mxu0 0.0
    %765 = vmatprep.subr.mxu0 0.0
    %766 = vmatpush1.msra.mxu0 0.0
    %767 = vmatprep.subr.mxu0 0.0
    %768 = vmatpush1.msra.mxu0 0.0
    %769 = vmatprep.subr.mxu0 0.0
    %770 = vmatpush1.msra.mxu0 0.0
    %771 = vmatprep.subr.mxu0 0.0
    %772 = vmatpush1.msra.mxu0 0.0
    %773 = vmatprep.subr.mxu0 0.0
    %774 = vmatpush1.msra.mxu0 0.0
    %775 = vmatprep.subr.mxu0 0.0
    %776 = vmatpush1.msra.mxu0 0.0
    %777 = vmatprep.subr.mxu0 0.0
    %778 = vmatpush1.msra.mxu0 0.0
    %779 = vmatprep.subr.mxu0 0.0
    %780 = vmatpush1.msra.mxu0 0.0
    %781 = vmatprep.subr.mxu0 0.0
    %782 = vmatpush1.msra.mxu0 0.0
    %783 = vmatprep.mubr.f32.mxu0 0.0
    %784 = vmatmul.mubr.f32.gmra.mrb[0].mxu0 %v297
    %v785 = vpop.f32.mrb[0].mxu0
    %v786 = vadd.f32 %v716, %v785
    %v787 = vpop.f32.mrb[0].mxu0
    %788 = vdwg.mxu0
    %vm789 = vcmask 74752
    %790 = vst.msk [vmem:[#allocation2] sm:$0x3] %vm789, %v786
    // Predicated region
    $region14: #{cnn_forward.5} parent=1 // pred_check
      _
    $region15: #{cnn_forward.5} parent=1 // pred_check_branch
      %792 = sbr.rel (0) target = $region17
    $region16: #{cnn_forward.5} parent=1 // pred_region
      %s794 = ssub.s32 32, 32
      %795 = vsyncadd [#allocation3], %s794
      %s797 = sshll.u32 [#allocation2], 4
      %s798 = int_to_ptr.vmem [resolvable:$true] %s797
      %800 = dma.vmem_to_hbm [thread:$0]  %s798, 32, %s3, [#allocation3]
    $region17: #{cnn_forward.5} parent=1 // pred_fallthru
      _
    // Predicated region
    $region18: #{cnn_forward.5} parent=1 // pred_check
      _
    $region19: #{cnn_forward.5} parent=1 // pred_check_branch
      %802 = sbr.rel (0) target = $region21
    $region20: #{cnn_forward.5} parent=1 // pred_region
      %803 = dma.done [#allocation3], 32
    $region21: #{cnn_forward.5} parent=1 // pred_fallthru
      _
    %804 = vsyncpa [#allocation3], 1

</llo_original>
